<compile_context>
chip_gen: v6e
topology: v6e:2x2x1
jax: 0.10.0
libtpu: 0.0.40
codegen_flags: <defaults>
</compile_context>

<pallas_src>
import functools

import jax
import jax.numpy as jnp
from jax.experimental import pallas as pl
from jax.experimental.pallas import tpu as pltpu

_TILE_M = 256                       # row tile for the 1x1-conv matmuls
_VMEM_LIMIT = 32 * 1024 * 1024      # explicit VMEM budget (safe on v5e/v6e/v7x)


# ----------------------------------------------------------------------------
# Pallas kernels
# ----------------------------------------------------------------------------
def _mm_bn_act_kernel(x_ref, w_ref, scale_ref, shift_ref, o_ref, *, act):
    # o = act((x @ w) * scale + shift)   -- scale/shift = folded eval-mode BatchNorm
    acc = jnp.dot(x_ref[...], w_ref[...], preferred_element_type=jnp.float32)
    acc = acc * scale_ref[...] + shift_ref[...]
    if act == "silu":
        acc = acc * jax.nn.sigmoid(acc)
    o_ref[...] = acc.astype(o_ref.dtype)


def _mm_bn_act_res_kernel(x_ref, w_ref, scale_ref, shift_ref, res_ref, o_ref, *, act):
    # Same as above, plus the inverted-residual skip connection fused in.
    acc = jnp.dot(x_ref[...], w_ref[...], preferred_element_type=jnp.float32)
    acc = acc * scale_ref[...] + shift_ref[...]
    if act == "silu":
        acc = acc * jax.nn.sigmoid(acc)
    acc = acc + res_ref[...].astype(jnp.float32)
    o_ref[...] = acc.astype(o_ref.dtype)


def _dwconv3x3_bn_silu_kernel(x_ref, w_ref, scale_ref, shift_ref, o_ref, *, H, W):
    # Depthwise 3x3 (stride 1 on a pre-padded halo tile) + BN + SiLU.
    xp = x_ref[0].astype(jnp.float32)            # (H+2, W+2, C), loaded & cast once
    C = xp.shape[-1]
    acc = jnp.zeros((H, W, C), jnp.float32)
    for k in range(9):                           # statically unrolled 9 taps in VMEM
        kh, kw = divmod(k, 3)
        tap = w_ref[pl.ds(k, 1), :][None]        # (1, 1, C) per-channel weight
        acc = acc + xp[kh:kh + H, kw:kw + W, :] * tap
    acc = acc * scale_ref[...][None] + shift_ref[...][None]
    o_ref[0] = (acc * jax.nn.sigmoid(acc)).astype(o_ref.dtype)   # SiLU


# ----------------------------------------------------------------------------
# Pallas wrappers
# ----------------------------------------------------------------------------
def conv1x1_bn(x2d, w, scale, shift, *, act="none", residual=None,
               out_dtype=jnp.float32, tile_m=_TILE_M):
    """1x1 conv as a row-tiled matmul with fused BN / activation / residual."""
    M, K = x2d.shape
    N = w.shape[1]
    tm = min(tile_m, M)
    grid = (pl.cdiv(M, tm),)

    row_spec = pl.BlockSpec((tm, K), lambda i: (i, 0))
    w_spec = pl.BlockSpec((K, N), lambda i: (0, 0))
    vec_spec = pl.BlockSpec((1, N), lambda i: (0, 0))
    out_spec = pl.BlockSpec((tm, N), lambda i: (i, 0))
    cp = pltpu.CompilerParams(dimension_semantics=("parallel",),
                              vmem_limit_bytes=_VMEM_LIMIT)

    args = [x2d.astype(jnp.bfloat16), w.astype(jnp.bfloat16),
            scale.astype(jnp.float32), shift.astype(jnp.float32)]
    in_specs = [row_spec, w_spec, vec_spec, vec_spec]
    if residual is None:
        kernel = functools.partial(_mm_bn_act_kernel, act=act)
    else:
        kernel = functools.partial(_mm_bn_act_res_kernel, act=act)
        args.append(residual.astype(jnp.float32))
        in_specs.append(pl.BlockSpec((tm, N), lambda i: (i, 0)))

    return pl.pallas_call(
        kernel,
        out_shape=jax.ShapeDtypeStruct((M, N), out_dtype),
        grid=grid,
        in_specs=in_specs,
        out_specs=out_spec,
        compiler_params=cp,
    )(*args)


def dwconv3x3_bn_silu(x_pad_nhwc, w_taps, scale, shift, *, out_dtype=jnp.bfloat16):
    """Depthwise 3x3 + BN + SiLU on a pre-padded NHWC tensor; grid over batch."""
    B, Hp, Wp, C = x_pad_nhwc.shape
    H, W = Hp - 2, Wp - 2
    cp = pltpu.CompilerParams(dimension_semantics=("parallel",),
                              vmem_limit_bytes=_VMEM_LIMIT)
    return pl.pallas_call(
        functools.partial(_dwconv3x3_bn_silu_kernel, H=H, W=W),
        out_shape=jax.ShapeDtypeStruct((B, H, W, C), out_dtype),
        grid=(B,),
        in_specs=[pl.BlockSpec((1, Hp, Wp, C), lambda b: (b, 0, 0, 0)),
                  pl.BlockSpec((9, C), lambda b: (0, 0)),
                  pl.BlockSpec((1, C), lambda b: (0, 0)),
                  pl.BlockSpec((1, C), lambda b: (0, 0))],
        out_specs=pl.BlockSpec((1, H, W, C), lambda b: (b, 0, 0, 0)),
        compiler_params=cp,
    )(x_pad_nhwc, w_taps.astype(jnp.float32),
      scale.astype(jnp.float32), shift.astype(jnp.float32))


# ----------------------------------------------------------------------------
# Deterministic parameter initialization (synthetic; no checkpoint load)
# ----------------------------------------------------------------------------
def _bn_fold(key, ch, eps=1e-5):
    # TODO(synk): BatchNorm reproduced in eval mode (running stats folded into
    # per-channel scale/shift); training-mode batch statistics are not emulated.
    k1, k2, k3, k4 = jax.random.split(key, 4)
    gamma = 1.0 + 0.1 * jax.random.normal(k1, (ch,), jnp.float32)
    beta = 0.1 * jax.random.normal(k2, (ch,), jnp.float32)
    mean = 0.1 * jax.random.normal(k3, (ch,), jnp.float32)
    var = 1.0 + 0.1 * jax.random.uniform(k4, (ch,), jnp.float32)
    scale = gamma / jnp.sqrt(var + eps)
    shift = beta - mean * scale
    return scale.reshape(1, ch), shift.reshape(1, ch)


def init_params(key, inp, oup, expansion=4):
    hidden = int(inp * expansion)
    ks = iter(jax.random.split(key, 16))

    def nrm(shape, s=0.1):
        return s * jax.random.normal(next(ks), shape, jnp.float32)

    p = {}
    if expansion != 1:
        # 1x1 expand conv (bias=False) + BN; weights pre-cast to bf16 (hoisted).
        p["w_exp"] = nrm((inp, hidden)).astype(jnp.bfloat16)
        p["exp_scale"], p["exp_shift"] = _bn_fold(next(ks), hidden)
    # depthwise 3x3 (groups=hidden, bias=False) + BN; taps pre-flattened to (9, C).
    p["w_dw"] = nrm((3, 3, hidden)).reshape(9, hidden)
    p["dw_scale"], p["dw_shift"] = _bn_fold(next(ks), hidden)
    # 1x1 project conv (bias=False) + BN (no activation).
    p["w_proj"] = nrm((hidden, oup)).astype(jnp.bfloat16)
    p["proj_scale"], p["proj_shift"] = _bn_fold(next(ks), oup)
    return p


# ----------------------------------------------------------------------------
# IVBlock forward (Pallas kernels + JAX glue for layout only)
# ----------------------------------------------------------------------------
def iv_block(x_nchw, params, *, stride=1, expansion=4):
    assert stride in (1, 2, 4)
    B, C, H, W = x_nchw.shape
    hidden = params["w_dw"].shape[1]
    oup = params["w_proj"].shape[1]
    use_res_connect = (stride == 1) and (C == oup)

    x_nhwc = jnp.transpose(x_nchw, (0, 2, 3, 1)).astype(jnp.float32)   # NHWC
    x_flat = x_nhwc.reshape(B * H * W, C)

    # ---- 1x1 expand + BN + SiLU (skipped when expansion == 1) ----
    if expansion != 1:
        h = conv1x1_bn(x_flat, params["w_exp"],
                       params["exp_scale"], params["exp_shift"],
                       act="silu", out_dtype=jnp.bfloat16)
        h_nhwc = h.reshape(B, H, W, hidden)
    else:
        h_nhwc = x_nhwc.astype(jnp.bfloat16)        # hidden == inp in this mode

    # ---- depthwise 3x3 (pad=1) + BN + SiLU ----
    h_pad = jnp.pad(h_nhwc, ((0, 0), (1, 1), (1, 1), (0, 0)))
    dw = dwconv3x3_bn_silu(h_pad, params["w_dw"],
                           params["dw_scale"], params["dw_shift"],
                           out_dtype=jnp.bfloat16)
    if stride > 1:
        # TODO(synk): stride>1 computed at stride 1 then subsampled (mathematically
        # identical output; extra VPU work on the dropped positions).
        dw = dw[:, ::stride, ::stride, :]
    Ho, Wo = dw.shape[1], dw.shape[2]
    dw_flat = dw.reshape(B * Ho * Wo, hidden)

    # ---- 1x1 project + BN (+ residual fused into the epilogue) ----
    residual = x_flat if use_res_connect else None
    out = conv1x1_bn(dw_flat, params["w_proj"],
                     params["proj_scale"], params["proj_shift"],
                     act="none", residual=residual, out_dtype=jnp.float32)

    return out.reshape(B, Ho, Wo, oup).transpose(0, 3, 1, 2)           # back to NCHW


if __name__ == "__main__":
    # IVBlock(inp=8, oup=8, stride=1, expansion=4)  ->  hidden_dim = 32
    B, C, H, W = 2, 8, 16, 16
    stride, expansion = 1, 4

    key = jax.random.PRNGKey(0)
    kp, kx = jax.random.split(key)
    params = init_params(kp, inp=C, oup=C, expansion=expansion)
    x = jax.random.normal(kx, (B, C, H, W), jnp.float32)

    fwd = jax.jit(functools.partial(iv_block, stride=stride, expansion=expansion))
    out = jax.block_until_ready(fwd(x, params))

    assert out.shape == (B, C, H, W)
    assert bool(jnp.all(jnp.isfinite(out)))
    print("KERNEL_OK")
</pallas_src>

<mosaic_0001>
module attributes {stable_mosaic.version = 11 : i64} {
  func.func @_mm_bn_act_kernel(%arg0: i32, %arg1: memref<256x8xbf16, #tpu.memory_space<vmem>>, %arg2: memref<8x32xbf16, #tpu.memory_space<vmem>>, %arg3: memref<1x32xf32, #tpu.memory_space<vmem>>, %arg4: memref<1x32xf32, #tpu.memory_space<vmem>>, %arg5: memref<256x32xbf16, #tpu.memory_space<vmem>>) attributes {dimension_semantics = [#tpu.dimension_semantics<parallel>], iteration_bounds = array<i64: 2>, scalar_prefetch = 0 : i64, scratch_operands = 0 : i64, tpu.core_type = #tpu.core_type<tc>, window_params = [{transform_indices = @transform_0, window_bounds = array<i64: 256, 8>}, {pipeline_mode = #tpu.pipeline_mode<synchronous>, transform_indices = @transform_1, window_bounds = array<i64: 8, 32>}, {pipeline_mode = #tpu.pipeline_mode<synchronous>, transform_indices = @transform_2, window_bounds = array<i64: 1, 32>}, {pipeline_mode = #tpu.pipeline_mode<synchronous>, transform_indices = @transform_3, window_bounds = array<i64: 1, 32>}, {transform_indices = @transform_4, window_bounds = array<i64: 256, 32>}]} {
    %c0 = arith.constant 0 : index
    %c0_0 = arith.constant 0 : index
    %0 = vector.load %arg1[%c0, %c0_0] : memref<256x8xbf16, #tpu.memory_space<vmem>>, vector<256x8xbf16>
    %c0_1 = arith.constant 0 : index
    %c0_2 = arith.constant 0 : index
    %1 = vector.load %arg2[%c0_1, %c0_2] : memref<8x32xbf16, #tpu.memory_space<vmem>>, vector<8x32xbf16>
    %cst = arith.constant dense<0.000000e+00> : vector<256x32xf32>
    %2 = tpu.matmul %0, %1, %cst {dimension_numbers = #tpu.dot_dimension_numbers<[1], [0], [0], [1], [0, 0, 1, 1], [], []>} : vector<256x8xbf16>, vector<8x32xbf16>, vector<256x32xf32> -> vector<256x32xf32>
    %c0_3 = arith.constant 0 : index
    %c0_4 = arith.constant 0 : index
    %3 = vector.load %arg3[%c0_3, %c0_4] : memref<1x32xf32, #tpu.memory_space<vmem>>, vector<1x32xf32>
    %4 = vector.broadcast %3 : vector<1x32xf32> to vector<256x32xf32>
    %5 = arith.mulf %2, %4 : vector<256x32xf32>
    %c0_5 = arith.constant 0 : index
    %c0_6 = arith.constant 0 : index
    %6 = vector.load %arg4[%c0_5, %c0_6] : memref<1x32xf32, #tpu.memory_space<vmem>>, vector<1x32xf32>
    %7 = vector.broadcast %6 : vector<1x32xf32> to vector<256x32xf32>
    %8 = arith.addf %5, %7 : vector<256x32xf32>
    %9 = arith.negf %8 : vector<256x32xf32>
    %10 = math.exp %9 : vector<256x32xf32>
    %cst_7 = arith.constant 1.000000e+00 : f32
    %11 = vector.broadcast %cst_7 : f32 to vector<256x32xf32>
    %12 = arith.addf %11, %10 : vector<256x32xf32>
    %13 = arith.divf %11, %12 : vector<256x32xf32>
    %14 = arith.mulf %8, %13 : vector<256x32xf32>
    %15 = arith.truncf %14 : vector<256x32xf32> to vector<256x32xbf16>
    %c0_8 = arith.constant 0 : index
    %c0_9 = arith.constant 0 : index
    %16 = vector.load %arg5[%c0_8, %c0_9] : memref<256x32xbf16, #tpu.memory_space<vmem>>, vector<256x32xbf16>
    tpu.vector_store %arg5[%c0_8, %c0_9], %15 {strides = array<i32>} : memref<256x32xbf16, #tpu.memory_space<vmem>>, vector<256x32xbf16>,
    return
  }
  func.func @transform_0(%arg0: i32) -> (i32, i32) {
    %c0_i32 = arith.constant 0 : i32
    %c0_i32_0 = arith.constant 0 : i32
    return %arg0, %c0_i32 : i32, i32
  }
  func.func @transform_1(%arg0: i32) -> (i32, i32) {
    %c0_i32 = arith.constant 0 : i32
    %c0_i32_0 = arith.constant 0 : i32
    %c0_i32_1 = arith.constant 0 : i32
    return %c0_i32, %c0_i32_0 : i32, i32
  }
  func.func @transform_2(%arg0: i32) -> (i32, i32) {
    %c0_i32 = arith.constant 0 : i32
    %c0_i32_0 = arith.constant 0 : i32
    %c0_i32_1 = arith.constant 0 : i32
    return %c0_i32, %c0_i32_0 : i32, i32
  }
  func.func @transform_3(%arg0: i32) -> (i32, i32) {
    %c0_i32 = arith.constant 0 : i32
    %c0_i32_0 = arith.constant 0 : i32
    %c0_i32_1 = arith.constant 0 : i32
    return %c0_i32, %c0_i32_0 : i32, i32
  }
  func.func @transform_4(%arg0: i32) -> (i32, i32) {
    %c0_i32 = arith.constant 0 : i32
    %c0_i32_0 = arith.constant 0 : i32
    return %arg0, %c0_i32 : i32, i32
  }
}

module attributes {stable_mosaic.version = 11 : i64} {
  func.func @_dwconv3x3_bn_silu_kernel(%arg0: i32, %arg1: memref<1x18x18x32xbf16, #tpu.memory_space<vmem>>, %arg2: memref<9x32xf32, #tpu.memory_space<vmem>>, %arg3: memref<1x32xf32, #tpu.memory_space<vmem>>, %arg4: memref<1x32xf32, #tpu.memory_space<vmem>>, %arg5: memref<1x16x16x32xbf16, #tpu.memory_space<vmem>>) attributes {dimension_semantics = [#tpu.dimension_semantics<parallel>], iteration_bounds = array<i64: 2>, scalar_prefetch = 0 : i64, scratch_operands = 0 : i64, tpu.core_type = #tpu.core_type<tc>, window_params = [{transform_indices = @transform_0, window_bounds = array<i64: 1, 18, 18, 32>}, {pipeline_mode = #tpu.pipeline_mode<synchronous>, transform_indices = @transform_1, window_bounds = array<i64: 9, 32>}, {pipeline_mode = #tpu.pipeline_mode<synchronous>, transform_indices = @transform_2, window_bounds = array<i64: 1, 32>}, {pipeline_mode = #tpu.pipeline_mode<synchronous>, transform_indices = @transform_3, window_bounds = array<i64: 1, 32>}, {transform_indices = @transform_4, window_bounds = array<i64: 1, 16, 16, 32>}]} {
    %c0 = arith.constant 0 : index
    %c0_0 = arith.constant 0 : index
    %c0_1 = arith.constant 0 : index
    %c0_2 = arith.constant 0 : index
    %0 = vector.load %arg1[%c0, %c0_0, %c0_1, %c0_2] : memref<1x18x18x32xbf16, #tpu.memory_space<vmem>>, vector<1x18x18x32xbf16>
    %1 = vector.shape_cast %0 : vector<1x18x18x32xbf16> to vector<18x18x32xbf16>
    %2 = arith.extf %1 : vector<18x18x32xbf16> to vector<18x18x32xf32>
    %cst = arith.constant 0.000000e+00 : f32
    %3 = vector.broadcast %cst : f32 to vector<16x16x32xf32>
    %c0_3 = arith.constant 0 : index
    %c0_4 = arith.constant 0 : index
    %4 = vector.load %arg2[%c0_3, %c0_4] : memref<9x32xf32, #tpu.memory_space<vmem>>, vector<1x32xf32>
    %5 = vector.shape_cast %4 : vector<1x32xf32> to vector<1x1x32xf32>
    %6 = vector.extract_strided_slice %2 {offsets = [0, 0, 0], sizes = [16, 16, 32], strides = [1, 1, 1]} : vector<18x18x32xf32> to vector<16x16x32xf32>
    %7 = vector.broadcast %5 : vector<1x1x32xf32> to vector<16x16x32xf32>
    %8 = arith.mulf %6, %7 : vector<16x16x32xf32>
    %9 = arith.addf %3, %8 : vector<16x16x32xf32>
    %c1 = arith.constant 1 : index
    %c0_5 = arith.constant 0 : index
    %10 = vector.load %arg2[%c1, %c0_5] : memref<9x32xf32, #tpu.memory_space<vmem>>, vector<1x32xf32>
    %11 = vector.shape_cast %10 : vector<1x32xf32> to vector<1x1x32xf32>
    %12 = vector.extract_strided_slice %2 {offsets = [0, 1, 0], sizes = [16, 16, 32], strides = [1, 1, 1]} : vector<18x18x32xf32> to vector<16x16x32xf32>
    %13 = vector.broadcast %11 : vector<1x1x32xf32> to vector<16x16x32xf32>
    %14 = arith.mulf %12, %13 : vector<16x16x32xf32>
    %15 = arith.addf %9, %14 : vector<16x16x32xf32>
    %c2 = arith.constant 2 : index
    %c0_6 = arith.constant 0 : index
    %16 = vector.load %arg2[%c2, %c0_6] : memref<9x32xf32, #tpu.memory_space<vmem>>, vector<1x32xf32>
    %17 = vector.shape_cast %16 : vector<1x32xf32> to vector<1x1x32xf32>
    %18 = vector.extract_strided_slice %2 {offsets = [0, 2, 0], sizes = [16, 16, 32], strides = [1, 1, 1]} : vector<18x18x32xf32> to vector<16x16x32xf32>
    %19 = vector.broadcast %17 : vector<1x1x32xf32> to vector<16x16x32xf32>
    %20 = arith.mulf %18, %19 : vector<16x16x32xf32>
    %21 = arith.addf %15, %20 : vector<16x16x32xf32>
    %c3 = arith.constant 3 : index
    %c0_7 = arith.constant 0 : index
    %22 = vector.load %arg2[%c3, %c0_7] : memref<9x32xf32, #tpu.memory_space<vmem>>, vector<1x32xf32>
    %23 = vector.shape_cast %22 : vector<1x32xf32> to vector<1x1x32xf32>
    %24 = vector.extract_strided_slice %2 {offsets = [1, 0, 0], sizes = [16, 16, 32], strides = [1, 1, 1]} : vector<18x18x32xf32> to vector<16x16x32xf32>
    %25 = vector.broadcast %23 : vector<1x1x32xf32> to vector<16x16x32xf32>
    %26 = arith.mulf %24, %25 : vector<16x16x32xf32>
    %27 = arith.addf %21, %26 : vector<16x16x32xf32>
    %c4 = arith.constant 4 : index
    %c0_8 = arith.constant 0 : index
    %28 = vector.load %arg2[%c4, %c0_8] : memref<9x32xf32, #tpu.memory_space<vmem>>, vector<1x32xf32>
    %29 = vector.shape_cast %28 : vector<1x32xf32> to vector<1x1x32xf32>
    %30 = vector.extract_strided_slice %2 {offsets = [1, 1, 0], sizes = [16, 16, 32], strides = [1, 1, 1]} : vector<18x18x32xf32> to vector<16x16x32xf32>
    %31 = vector.broadcast %29 : vector<1x1x32xf32> to vector<16x16x32xf32>
    %32 = arith.mulf %30, %31 : vector<16x16x32xf32>
    %33 = arith.addf %27, %32 : vector<16x16x32xf32>
    %c5 = arith.constant 5 : index
    %c0_9 = arith.constant 0 : index
    %34 = vector.load %arg2[%c5, %c0_9] : memref<9x32xf32, #tpu.memory_space<vmem>>, vector<1x32xf32>
    %35 = vector.shape_cast %34 : vector<1x32xf32> to vector<1x1x32xf32>
    %36 = vector.extract_strided_slice %2 {offsets = [1, 2, 0], sizes = [16, 16, 32], strides = [1, 1, 1]} : vector<18x18x32xf32> to vector<16x16x32xf32>
    %37 = vector.broadcast %35 : vector<1x1x32xf32> to vector<16x16x32xf32>
    %38 = arith.mulf %36, %37 : vector<16x16x32xf32>
    %39 = arith.addf %33, %38 : vector<16x16x32xf32>
    %c6 = arith.constant 6 : index
    %c0_10 = arith.constant 0 : index
    %40 = vector.load %arg2[%c6, %c0_10] : memref<9x32xf32, #tpu.memory_space<vmem>>, vector<1x32xf32>
    %41 = vector.shape_cast %40 : vector<1x32xf32> to vector<1x1x32xf32>
    %42 = vector.extract_strided_slice %2 {offsets = [2, 0, 0], sizes = [16, 16, 32], strides = [1, 1, 1]} : vector<18x18x32xf32> to vector<16x16x32xf32>
    %43 = vector.broadcast %41 : vector<1x1x32xf32> to vector<16x16x32xf32>
    %44 = arith.mulf %42, %43 : vector<16x16x32xf32>
    %45 = arith.addf %39, %44 : vector<16x16x32xf32>
    %c7 = arith.constant 7 : index
    %c0_11 = arith.constant 0 : index
    %46 = vector.load %arg2[%c7, %c0_11] : memref<9x32xf32, #tpu.memory_space<vmem>>, vector<1x32xf32>
    %47 = vector.shape_cast %46 : vector<1x32xf32> to vector<1x1x32xf32>
    %48 = vector.extract_strided_slice %2 {offsets = [2, 1, 0], sizes = [16, 16, 32], strides = [1, 1, 1]} : vector<18x18x32xf32> to vector<16x16x32xf32>
    %49 = vector.broadcast %47 : vector<1x1x32xf32> to vector<16x16x32xf32>
    %50 = arith.mulf %48, %49 : vector<16x16x32xf32>
    %51 = arith.addf %45, %50 : vector<16x16x32xf32>
    %c8 = arith.constant 8 : index
    %c0_12 = arith.constant 0 : index
    %52 = vector.load %arg2[%c8, %c0_12] : memref<9x32xf32, #tpu.memory_space<vmem>>, vector<1x32xf32>
    %53 = vector.shape_cast %52 : vector<1x32xf32> to vector<1x1x32xf32>
    %54 = vector.extract_strided_slice %2 {offsets = [2, 2, 0], sizes = [16, 16, 32], strides = [1, 1, 1]} : vector<18x18x32xf32> to vector<16x16x32xf32>
    %55 = vector.broadcast %53 : vector<1x1x32xf32> to vector<16x16x32xf32>
    %56 = arith.mulf %54, %55 : vector<16x16x32xf32>
    %57 = arith.addf %51, %56 : vector<16x16x32xf32>
    %c0_13 = arith.constant 0 : index
    %c0_14 = arith.constant 0 : index
    %58 = vector.load %arg3[%c0_13, %c0_14] : memref<1x32xf32, #tpu.memory_space<vmem>>, vector<1x32xf32>
    %59 = vector.shape_cast %58 : vector<1x32xf32> to vector<1x1x32xf32>
    %60 = vector.broadcast %59 : vector<1x1x32xf32> to vector<16x16x32xf32>
    %61 = arith.mulf %57, %60 : vector<16x16x32xf32>
    %c0_15 = arith.constant 0 : index
    %c0_16 = arith.constant 0 : index
    %62 = vector.load %arg4[%c0_15, %c0_16] : memref<1x32xf32, #tpu.memory_space<vmem>>, vector<1x32xf32>
    %63 = vector.shape_cast %62 : vector<1x32xf32> to vector<1x1x32xf32>
    %64 = vector.broadcast %63 : vector<1x1x32xf32> to vector<16x16x32xf32>
    %65 = arith.addf %61, %64 : vector<16x16x32xf32>
    %66 = arith.negf %65 : vector<16x16x32xf32>
    %67 = math.exp %66 : vector<16x16x32xf32>
    %cst_17 = arith.constant 1.000000e+00 : f32
    %68 = vector.broadcast %cst_17 : f32 to vector<16x16x32xf32>
    %69 = arith.addf %68, %67 : vector<16x16x32xf32>
    %70 = arith.divf %68, %69 : vector<16x16x32xf32>
    %71 = arith.mulf %65, %70 : vector<16x16x32xf32>
    %72 = arith.truncf %71 : vector<16x16x32xf32> to vector<16x16x32xbf16>
    %c0_18 = arith.constant 0 : index
    %c0_19 = arith.constant 0 : index
    %c0_20 = arith.constant 0 : index
    %c0_21 = arith.constant 0 : index
    %73 = vector.load %arg5[%c0_18, %c0_19, %c0_20, %c0_21] : memref<1x16x16x32xbf16, #tpu.memory_space<vmem>>, vector<1x16x16x32xbf16>
    %74 = vector.shape_cast %73 : vector<1x16x16x32xbf16> to vector<16x16x32xbf16>
    %75 = vector.shape_cast %72 : vector<16x16x32xbf16> to vector<1x16x16x32xbf16>
    tpu.vector_store %arg5[%c0_18, %c0_19, %c0_20, %c0_21], %75 {strides = array<i32>} : memref<1x16x16x32xbf16, #tpu.memory_space<vmem>>, vector<1x16x16x32xbf16>,
    return
  }
  func.func @transform_0(%arg0: i32) -> (i32, i32, i32, i32) {
    %c0_i32 = arith.constant 0 : i32
    %c0_i32_0 = arith.constant 0 : i32
    %c0_i32_1 = arith.constant 0 : i32
    %c0_i32_2 = arith.constant 0 : i32
    return %arg0, %c0_i32, %c0_i32_0, %c0_i32_1 : i32, i32, i32, i32
  }
  func.func @transform_1(%arg0: i32) -> (i32, i32) {
    %c0_i32 = arith.constant 0 : i32
    %c0_i32_0 = arith.constant 0 : i32
    %c0_i32_1 = arith.constant 0 : i32
    return %c0_i32, %c0_i32_0 : i32, i32
  }
  func.func @transform_2(%arg0: i32) -> (i32, i32) {
    %c0_i32 = arith.constant 0 : i32
    %c0_i32_0 = arith.constant 0 : i32
    %c0_i32_1 = arith.constant 0 : i32
    return %c0_i32, %c0_i32_0 : i32, i32
  }
  func.func @transform_3(%arg0: i32) -> (i32, i32) {
    %c0_i32 = arith.constant 0 : i32
    %c0_i32_0 = arith.constant 0 : i32
    %c0_i32_1 = arith.constant 0 : i32
    return %c0_i32, %c0_i32_0 : i32, i32
  }
  func.func @transform_4(%arg0: i32) -> (i32, i32, i32, i32) {
    %c0_i32 = arith.constant 0 : i32
    %c0_i32_0 = arith.constant 0 : i32
    %c0_i32_1 = arith.constant 0 : i32
    %c0_i32_2 = arith.constant 0 : i32
    return %arg0, %c0_i32, %c0_i32_0, %c0_i32_1 : i32, i32, i32, i32
  }
}

module attributes {stable_mosaic.version = 11 : i64} {
  func.func @_mm_bn_act_res_kernel(%arg0: i32, %arg1: memref<256x32xbf16, #tpu.memory_space<vmem>>, %arg2: memref<32x8xbf16, #tpu.memory_space<vmem>>, %arg3: memref<1x8xf32, #tpu.memory_space<vmem>>, %arg4: memref<1x8xf32, #tpu.memory_space<vmem>>, %arg5: memref<256x8xf32, #tpu.memory_space<vmem>>, %arg6: memref<256x8xf32, #tpu.memory_space<vmem>>) attributes {dimension_semantics = [#tpu.dimension_semantics<parallel>], iteration_bounds = array<i64: 2>, scalar_prefetch = 0 : i64, scratch_operands = 0 : i64, tpu.core_type = #tpu.core_type<tc>, window_params = [{transform_indices = @transform_0, window_bounds = array<i64: 256, 32>}, {pipeline_mode = #tpu.pipeline_mode<synchronous>, transform_indices = @transform_1, window_bounds = array<i64: 32, 8>}, {pipeline_mode = #tpu.pipeline_mode<synchronous>, transform_indices = @transform_2, window_bounds = array<i64: 1, 8>}, {pipeline_mode = #tpu.pipeline_mode<synchronous>, transform_indices = @transform_3, window_bounds = array<i64: 1, 8>}, {transform_indices = @transform_4, window_bounds = array<i64: 256, 8>}, {transform_indices = @transform_5, window_bounds = array<i64: 256, 8>}]} {
    %c0 = arith.constant 0 : index
    %c0_0 = arith.constant 0 : index
    %0 = vector.load %arg1[%c0, %c0_0] : memref<256x32xbf16, #tpu.memory_space<vmem>>, vector<256x32xbf16>
    %c0_1 = arith.constant 0 : index
    %c0_2 = arith.constant 0 : index
    %1 = vector.load %arg2[%c0_1, %c0_2] : memref<32x8xbf16, #tpu.memory_space<vmem>>, vector<32x8xbf16>
    %cst = arith.constant dense<0.000000e+00> : vector<256x8xf32>
    %2 = tpu.matmul %0, %1, %cst {dimension_numbers = #tpu.dot_dimension_numbers<[1], [0], [0], [1], [0, 0, 1, 1], [], []>} : vector<256x32xbf16>, vector<32x8xbf16>, vector<256x8xf32> -> vector<256x8xf32>
    %c0_3 = arith.constant 0 : index
    %c0_4 = arith.constant 0 : index
    %3 = vector.load %arg3[%c0_3, %c0_4] : memref<1x8xf32, #tpu.memory_space<vmem>>, vector<1x8xf32>
    %4 = vector.broadcast %3 : vector<1x8xf32> to vector<256x8xf32>
    %5 = arith.mulf %2, %4 : vector<256x8xf32>
    %c0_5 = arith.constant 0 : index
    %c0_6 = arith.constant 0 : index
    %6 = vector.load %arg4[%c0_5, %c0_6] : memref<1x8xf32, #tpu.memory_space<vmem>>, vector<1x8xf32>
    %7 = vector.broadcast %6 : vector<1x8xf32> to vector<256x8xf32>
    %8 = arith.addf %5, %7 : vector<256x8xf32>
    %c0_7 = arith.constant 0 : index
    %c0_8 = arith.constant 0 : index
    %9 = vector.load %arg5[%c0_7, %c0_8] : memref<256x8xf32, #tpu.memory_space<vmem>>, vector<256x8xf32>
    %10 = arith.addf %8, %9 : vector<256x8xf32>
    %c0_9 = arith.constant 0 : index
    %c0_10 = arith.constant 0 : index
    %11 = vector.load %arg6[%c0_9, %c0_10] : memref<256x8xf32, #tpu.memory_space<vmem>>, vector<256x8xf32>
    tpu.vector_store %arg6[%c0_9, %c0_10], %10 {strides = array<i32>} : memref<256x8xf32, #tpu.memory_space<vmem>>, vector<256x8xf32>,
    return
  }
  func.func @transform_0(%arg0: i32) -> (i32, i32) {
    %c0_i32 = arith.constant 0 : i32
    %c0_i32_0 = arith.constant 0 : i32
    return %arg0, %c0_i32 : i32, i32
  }
  func.func @transform_1(%arg0: i32) -> (i32, i32) {
    %c0_i32 = arith.constant 0 : i32
    %c0_i32_0 = arith.constant 0 : i32
    %c0_i32_1 = arith.constant 0 : i32
    return %c0_i32, %c0_i32_0 : i32, i32
  }
  func.func @transform_2(%arg0: i32) -> (i32, i32) {
    %c0_i32 = arith.constant 0 : i32
    %c0_i32_0 = arith.constant 0 : i32
    %c0_i32_1 = arith.constant 0 : i32
    return %c0_i32, %c0_i32_0 : i32, i32
  }
  func.func @transform_3(%arg0: i32) -> (i32, i32) {
    %c0_i32 = arith.constant 0 : i32
    %c0_i32_0 = arith.constant 0 : i32
    %c0_i32_1 = arith.constant 0 : i32
    return %c0_i32, %c0_i32_0 : i32, i32
  }
  func.func @transform_4(%arg0: i32) -> (i32, i32) {
    %c0_i32 = arith.constant 0 : i32
    %c0_i32_0 = arith.constant 0 : i32
    return %arg0, %c0_i32 : i32, i32
  }
  func.func @transform_5(%arg0: i32) -> (i32, i32) {
    %c0_i32 = arith.constant 0 : i32
    %c0_i32_0 = arith.constant 0 : i32
    return %arg0, %c0_i32 : i32, i32
  }
}

</mosaic_0001>

<llo_original>
// kernel: iv_block.3
$region0: #{iv_block.3}
  #allocation0 [shape = 'u32[]', space=smem, size = 0x4, offset = 0x4, fixed_abs, tag = 'smem constant byte address 0x4 - core index']
  #allocation1 [shape = 'u32[144,128]{1,0:T(1,128)}', space=vmem, size = 0x12000, scoped, tag = 'internal scratch']
  %s0 = inlined_call_operand.vmem [shape: bf16[512,8], index: 0, kind: input, shape index: {}]
  %s1 = inlined_call_operand.vmem [shape: bf16[8,32], index: 1, kind: input, shape index: {}]
  %s2 = inlined_call_operand.vmem [shape: f32[1,32], index: 2, kind: input, shape index: {}]
  %s3 = inlined_call_operand.vmem [shape: f32[1,32], index: 3, kind: input, shape index: {}]
  %s4 = inlined_call_operand.vmem [shape: bf16[512,32], index: 4, kind: output, shape index: {}]
  %s5 = sld [smem:[#allocation0]]
  $region49: #{iv_block.3} parent=0
    _
  %s7 = ssub.s32 1, %s5
  %s8 = scalar_select 0, %s7, %s5
  loop: start=0, step=1, limit=4
  $region2: #{iv_block.3} parent=0 // loop_pre_header
    _
  $region3: #{iv_block.3} parent=0 // loop_header
    %s10 = sphi 0, %s14
    %p11 = scmp.ge.s32.totalorder %s10, 4
    %s20 = sphi 0, %s22
    %s23 = sphi 0, %s20
    %s24 = sphi 0, %s23
    %s40 = sphi 0, %s24
    %s44 = sphi 0, %s44
    %s46 = sphi 0, %s44
    %s47 = sphi 0, %s46
    %s61 = sphi 0, %s47
    %s65 = sphi 0, %s65
    %s67 = sphi 0, %s65
    %s68 = sphi 0, %s67
    %s82 = sphi 0, %s68
    %s86 = sphi 0, %s86
    %s88 = sphi 0, %s86
    %s89 = sphi 0, %s88
    %s103 = sphi 0, %s89
    %s109 = sphi 0, %s111
    %s112 = sphi 0, %s109
    %s113 = sphi 0, %s112
    %s129 = sphi 0, %s113
  $region4: #{iv_block.3} parent=0 // loop_header_branch
    %13 = sbr.rel (%p11) target = $region8
  $region5: #{iv_block.3} parent=0 // loop_body
    %s15 = ssub.s32 %s10, 1
    %s16 = ssub.s32 %s10, 2
    %s17 = sadd.s32 %s10, 1
    %s18 = ssub.s32 %s10, %s17
    %p19 = scmp.eq.s32.totalorder %s18, 0
    %s21 = sadd.s32 %s20, 1
    %s22 = scalar_select %p19, %s20, %s21
    %p25 = pneg %p19
    %p26 = scmp.eq.s32.totalorder %s10, 1
    %p27 = por %p25, %p26
    %p28 = scmp.ne.s32.totalorder %s20, %s23
    %p29 = scmp.eq.s32.totalorder %s10, 0
    %p30 = por %p28, %p29
    %p31 = scmp.ne.s32.totalorder %s20, %s23
    %p32 = scmp.eq.s32.totalorder %s15, 1
    %p33 = por %p31, %p32
    %p34 = scmp.ne.s32.totalorder %s23, %s24
    %p35 = scmp.eq.s32.totalorder %s15, 0
    %p36 = por %p34, %p35
    %p37 = scmp.ne.s32.totalorder %s23, %s24
    %p38 = scmp.eq.s32.totalorder %s16, 1
    %p39 = por %p37, %p38
    %p41 = scmp.ne.s32.totalorder %s24, %s40
    %p42 = scmp.eq.s32.totalorder %s16, 0
    %p43 = por %p41, %p42
    %s45 = sadd.s32 %s44, 1
    %p48 = scmp.eq.s32.totalorder %s10, 1
    %p49 = scmp.ne.s32.totalorder %s44, %s46
    %p50 = scmp.eq.s32.totalorder %s10, 0
    %p51 = por %p49, %p50
    %p52 = scmp.ne.s32.totalorder %s44, %s46
    %p53 = scmp.eq.s32.totalorder %s15, 1
    %p54 = por %p52, %p53
    %p55 = scmp.ne.s32.totalorder %s46, %s47
    %p56 = scmp.eq.s32.totalorder %s15, 0
    %p57 = por %p55, %p56
    %p58 = scmp.ne.s32.totalorder %s46, %s47
    %p59 = scmp.eq.s32.totalorder %s16, 1
    %p60 = por %p58, %p59
    %p62 = scmp.ne.s32.totalorder %s47, %s61
    %p63 = scmp.eq.s32.totalorder %s16, 0
    %p64 = por %p62, %p63
    %s66 = sadd.s32 %s65, 1
    %p69 = scmp.eq.s32.totalorder %s10, 1
    %p70 = scmp.ne.s32.totalorder %s65, %s67
    %p71 = scmp.eq.s32.totalorder %s10, 0
    %p72 = por %p70, %p71
    %p73 = scmp.ne.s32.totalorder %s65, %s67
    %p74 = scmp.eq.s32.totalorder %s15, 1
    %p75 = por %p73, %p74
    %p76 = scmp.ne.s32.totalorder %s67, %s68
    %p77 = scmp.eq.s32.totalorder %s15, 0
    %p78 = por %p76, %p77
    %p79 = scmp.ne.s32.totalorder %s67, %s68
    %p80 = scmp.eq.s32.totalorder %s16, 1
    %p81 = por %p79, %p80
    %p83 = scmp.ne.s32.totalorder %s68, %s82
    %p84 = scmp.eq.s32.totalorder %s16, 0
    %p85 = por %p83, %p84
    %s87 = sadd.s32 %s86, 1
    %p90 = scmp.eq.s32.totalorder %s10, 1
    %p91 = scmp.ne.s32.totalorder %s86, %s88
    %p92 = scmp.eq.s32.totalorder %s10, 0
    %p93 = por %p91, %p92
    %p94 = scmp.ne.s32.totalorder %s86, %s88
    %p95 = scmp.eq.s32.totalorder %s15, 1
    %p96 = por %p94, %p95
    %p97 = scmp.ne.s32.totalorder %s88, %s89
    %p98 = scmp.eq.s32.totalorder %s15, 0
    %p99 = por %p97, %p98
    %p100 = scmp.ne.s32.totalorder %s88, %s89
    %p101 = scmp.eq.s32.totalorder %s16, 1
    %p102 = por %p100, %p101
    %p104 = scmp.ne.s32.totalorder %s89, %s103
    %p105 = scmp.eq.s32.totalorder %s16, 0
    %p106 = por %p104, %p105
    %s107 = ssub.s32 %s10, %s17
    %p108 = scmp.eq.s32.totalorder %s107, 0
    %s110 = sadd.s32 %s109, 1
    %s111 = scalar_select %p108, %s109, %s110
    %p114 = pneg %p108
    %p115 = scmp.eq.s32.totalorder %s10, 1
    %p116 = por %p114, %p115
    %p117 = scmp.ne.s32.totalorder %s109, %s112
    %p118 = scmp.eq.s32.totalorder %s10, 0
    %p119 = por %p117, %p118
    %p120 = scmp.ne.s32.totalorder %s109, %s112
    %p121 = scmp.eq.s32.totalorder %s15, 1
    %p122 = por %p120, %p121
    %p123 = scmp.ne.s32.totalorder %s112, %s113
    %p124 = scmp.eq.s32.totalorder %s15, 0
    %p125 = por %p123, %p124
    %p126 = scmp.ne.s32.totalorder %s112, %s113
    %p127 = scmp.eq.s32.totalorder %s16, 1
    %p128 = por %p126, %p127
    %p130 = scmp.ne.s32.totalorder %s113, %s129
    %p131 = scmp.eq.s32.totalorder %s16, 0
    %p132 = por %p130, %p131
    %p133 = scmp.le.s32.totalorder 1, %s10
    %p134 = scmp.lt.s32.totalorder %s10, 3
    %p135 = pnand %p133, %p134
    %p136 = pneg %p135
    // Predicated region
    $region9: #{iv_block.3} parent=5 // pred_check
      _
    $region10: #{iv_block.3} parent=5 // pred_check_branch
      %138 = sbr.rel (%p135) target = $region12
    $region11: #{iv_block.3} parent=5 // pred_region
      %s139 = ssub.s32 %s10, 1
      // Predicated region
      $region13: #{iv_block.3} parent=11 // pred_check
        %p140 = pneg %p57
      $region14: #{iv_block.3} parent=11 // pred_check_branch
        %142 = sbr.rel (%p140) target = $region16
      $region15: #{iv_block.3} parent=11 // pred_region
        _
      $region16: #{iv_block.3} parent=11 // pred_fallthru
        _
      // Predicated region
      $region17: #{iv_block.3} parent=11 // pred_check
        %p143 = pneg %p78
      $region18: #{iv_block.3} parent=11 // pred_check_branch
        %145 = sbr.rel (%p143) target = $region20
      $region19: #{iv_block.3} parent=11 // pred_region
        _
      $region20: #{iv_block.3} parent=11 // pred_fallthru
        _
      // Predicated region
      $region21: #{iv_block.3} parent=11 // pred_check
        %p146 = pneg %p99
      $region22: #{iv_block.3} parent=11 // pred_check_branch
        %148 = sbr.rel (%p146) target = $region24
      $region23: #{iv_block.3} parent=11 // pred_region
        _
      $region24: #{iv_block.3} parent=11 // pred_fallthru
        _
    $region12: #{iv_block.3} parent=5 // pred_fallthru
      _
    %p149 = scmp.lt.s32.totalorder %s10, 2
    // Predicated region
    $region25: #{iv_block.3} parent=5 // pred_check
      %p150 = pneg %p149
    $region26: #{iv_block.3} parent=5 // pred_check_branch
      %152 = sbr.rel (%p150) target = $region28
    $region27: #{iv_block.3} parent=5 // pred_region
      // Predicated region
      $region29: #{iv_block.3} parent=27 // pred_check
        %p153 = pneg %p30
      $region30: #{iv_block.3} parent=27 // pred_check_branch
        %155 = sbr.rel (%p153) target = $region32
      $region31: #{iv_block.3} parent=27 // pred_region
        %s156 = smul.u32 32, %s10
        %p157 = scmp.lt.s32.totalorder %s156, 63
        %s158 = scalar_select %p157, %s156, 63
        %s159 = smul.addr %s158, 4
        %s160 = scalar_lea.vmem %s0, %s159
        %s161 = smul.u32 32, %s10
      $region32: #{iv_block.3} parent=27 // pred_fallthru
        _
    $region28: #{iv_block.3} parent=5 // pred_fallthru
      _
    %p162 = scmp.le.s32.totalorder 1, %s10
    %p163 = scmp.lt.s32.totalorder %s10, 3
    %p164 = pnand %p162, %p163
    %p165 = pneg %p164
    // Predicated region
    $region33: #{iv_block.3} parent=5 // pred_check
      _
    $region34: #{iv_block.3} parent=5 // pred_check_branch
      %167 = sbr.rel (%p164) target = $region36
    $region35: #{iv_block.3} parent=5 // pred_region
      %s168 = ssub.s32 %s10, 1
      %s169 = smul.u32 32, %s15
      %p170 = scmp.lt.s32.totalorder %s169, 63
      %s171 = scalar_select %p170, %s169, 63
      %s172 = smul.addr %s171, 4
      %s173 = scalar_lea.vmem %s0, %s172
      %p174 = pneg %p36
      %p175 = pneg %p33
      %p176 = pneg %p57
      %p177 = pneg %p54
      %p178 = pneg %p78
      %p179 = pneg %p75
      %p180 = pneg %p99
      %p181 = pneg %p96
      %p182 = pneg %p125
      %p183 = pneg %p122
      %s184 = smul.u32 32, %s15
      %p185 = scmp.lt.s32.totalorder %s184, 63
      %s186 = scalar_select %p185, %s184, 63
      %s187 = smul.addr %s186, 4
      %s188 = scalar_lea.vmem %s4, %s187
      %s189 = smul.u32 32, %s15
      %p190 = scmp.lt.s32.totalorder %s189, 63
      %s191 = scalar_select %p190, %s189, 63
      %s192 = smul.addr %s191, 4
      %s193 = scalar_lea.vmem %s0, %s192
      %s194 = smul.u32 32, %s15
      %s195 = smul.u32 32, %s15
      %p196 = scmp.lt.s32.totalorder %s195, 63
      %s197 = scalar_select %p196, %s195, 63
      %s198 = smul.addr %s197, 4
      %s199 = scalar_lea.vmem %s4, %s198
      %s200 = smul.u32 32, %s15
      %v202 = vld [vmem:[%s193] sm:$0xf]
      %v203 = vld [vmem:[%s193 + $0x4] sm:$0xf]
      %v204 = vld [vmem:[%s193 + $0x8] sm:$0xf]
      %v205 = vld [vmem:[%s193 + $0xc] sm:$0xf]
      %v206 = vld [vmem:[%s193 + $0x10] sm:$0xf]
      %v207 = vld [vmem:[%s193 + $0x14] sm:$0xf]
      %v208 = vld [vmem:[%s193 + $0x18] sm:$0xf]
      %v209 = vld [vmem:[%s193 + $0x1c] sm:$0xf]
      %v210 = vld [vmem:[%s193 + $0x20] sm:$0xf]
      %v211 = vld [vmem:[%s193 + $0x24] sm:$0xf]
      %v212 = vld [vmem:[%s193 + $0x28] sm:$0xf]
      %v213 = vld [vmem:[%s193 + $0x2c] sm:$0xf]
      %v214 = vld [vmem:[%s193 + $0x30] sm:$0xf]
      %v215 = vld [vmem:[%s193 + $0x34] sm:$0xf]
      %v216 = vld [vmem:[%s193 + $0x38] sm:$0xf]
      %v217 = vld [vmem:[%s193 + $0x3c] sm:$0xf]
      %v218 = vld [vmem:[%s193 + $0x40] sm:$0xf]
      %v219 = vld [vmem:[%s193 + $0x44] sm:$0xf]
      %v220 = vld [vmem:[%s193 + $0x48] sm:$0xf]
      %v221 = vld [vmem:[%s193 + $0x4c] sm:$0xf]
      %v222 = vld [vmem:[%s193 + $0x50] sm:$0xf]
      %v223 = vld [vmem:[%s193 + $0x54] sm:$0xf]
      %v224 = vld [vmem:[%s193 + $0x58] sm:$0xf]
      %v225 = vld [vmem:[%s193 + $0x5c] sm:$0xf]
      %v226 = vld [vmem:[%s193 + $0x60] sm:$0xf]
      %v227 = vld [vmem:[%s193 + $0x64] sm:$0xf]
      %v228 = vld [vmem:[%s193 + $0x68] sm:$0xf]
      %v229 = vld [vmem:[%s193 + $0x6c] sm:$0xf]
      %v230 = vld [vmem:[%s193 + $0x70] sm:$0xf]
      %v231 = vld [vmem:[%s193 + $0x74] sm:$0xf]
      %v232 = vld [vmem:[%s193 + $0x78] sm:$0xf]
      %v233 = vld [vmem:[%s193 + $0x7c] sm:$0xf]
      %v234 = vld [vmem:[%s1] sm:$0xf]
      %v267 = vunpack.c.l.b16 %v202
      %v268 = vunpack.c.l.b16 %v203
      %v269 = vunpack.c.l.b16 %v204
      %v270 = vunpack.c.l.b16 %v205
      %v271 = vunpack.c.l.b16 %v206
      %v272 = vunpack.c.l.b16 %v207
      %v273 = vunpack.c.l.b16 %v208
      %v274 = vunpack.c.l.b16 %v209
      %v275 = vunpack.c.l.b16 %v210
      %v276 = vunpack.c.l.b16 %v211
      %v277 = vunpack.c.l.b16 %v212
      %v278 = vunpack.c.l.b16 %v213
      %v279 = vunpack.c.l.b16 %v214
      %v280 = vunpack.c.l.b16 %v215
      %v281 = vunpack.c.l.b16 %v216
      %v282 = vunpack.c.l.b16 %v217
      %v283 = vunpack.c.l.b16 %v218
      %v284 = vunpack.c.l.b16 %v219
      %v285 = vunpack.c.l.b16 %v220
      %v286 = vunpack.c.l.b16 %v221
      %v287 = vunpack.c.l.b16 %v222
      %v288 = vunpack.c.l.b16 %v223
      %v289 = vunpack.c.l.b16 %v224
      %v290 = vunpack.c.l.b16 %v225
      %v291 = vunpack.c.l.b16 %v226
      %v292 = vunpack.c.l.b16 %v227
      %v293 = vunpack.c.l.b16 %v228
      %v294 = vunpack.c.l.b16 %v229
      %v295 = vunpack.c.l.b16 %v230
      %v296 = vunpack.c.l.b16 %v231
      %v297 = vunpack.c.l.b16 %v232
      %v298 = vunpack.c.l.b16 %v233
      %v299 = vpack.c.b16 %v268, %v267
      %v300 = vpack.c.b16 %v270, %v269
      %v301 = vpack.c.b16 %v272, %v271
      %v302 = vpack.c.b16 %v274, %v273
      %v303 = vpack.c.b16 %v276, %v275
      %v304 = vpack.c.b16 %v278, %v277
      %v305 = vpack.c.b16 %v280, %v279
      %v306 = vpack.c.b16 %v282, %v281
      %v307 = vpack.c.b16 %v284, %v283
      %v308 = vpack.c.b16 %v286, %v285
      %v309 = vpack.c.b16 %v288, %v287
      %v310 = vpack.c.b16 %v290, %v289
      %v311 = vpack.c.b16 %v292, %v291
      %v312 = vpack.c.b16 %v294, %v293
      %v313 = vpack.c.b16 %v296, %v295
      %v314 = vpack.c.b16 %v298, %v297
      %vm315 = vcmask 64512
      %v317 = vsel %vm315, %v299, 0
      %v320 = vsel %vm315, %v300, 0
      %v323 = vsel %vm315, %v301, 0
      %v326 = vsel %vm315, %v302, 0
      %v329 = vsel %vm315, %v303, 0
      %v332 = vsel %vm315, %v304, 0
      %v335 = vsel %vm315, %v305, 0
      %v338 = vsel %vm315, %v306, 0
      %v341 = vsel %vm315, %v307, 0
      %v344 = vsel %vm315, %v308, 0
      %v347 = vsel %vm315, %v309, 0
      %v350 = vsel %vm315, %v310, 0
      %v353 = vsel %vm315, %v311, 0
      %v356 = vsel %vm315, %v312, 0
      %v359 = vsel %vm315, %v313, 0
      %v362 = vsel %vm315, %v314, 0
      %vm364 = vcmask 1043456
      %v366 = vsel %vm364, %v234, 0
      %368 = vmatprep.subr.bf16.mxu0 0
      %369 = vmatpush1.bf16.msra.mxu0 0
      %370 = vmatprep.subr.bf16.mxu0 0
      %371 = vmatpush1.bf16.msra.mxu0 0
      %372 = vmatprep.subr.bf16.mxu0 0
      %373 = vmatpush1.bf16.msra.mxu0 0
      %374 = vmatprep.subr.bf16.mxu0 0
      %375 = vmatpush1.bf16.msra.mxu0 0
      %376 = vmatprep.subr.bf16.mxu0 0
      %377 = vmatpush1.bf16.msra.mxu0 0
      %378 = vmatprep.subr.bf16.mxu0 0
      %379 = vmatpush1.bf16.msra.mxu0 0
      %380 = vmatprep.subr.bf16.mxu0 0
      %381 = vmatpush1.bf16.msra.mxu0 0
      %382 = vmatprep.subr.bf16.mxu0 0
      %383 = vmatpush1.bf16.msra.mxu0 %v366
      %384 = vmatprep.subr.bf16.mxu0 0
      %385 = vmatpush2.bf16.msra.mxu0 0
      %386 = vmatprep.subr.bf16.mxu0 0
      %387 = vmatpush2.bf16.msra.mxu0 0
      %388 = vmatprep.subr.bf16.mxu0 0
      %389 = vmatpush2.bf16.msra.mxu0 0
      %390 = vmatprep.subr.bf16.mxu0 0
      %391 = vmatpush2.bf16.msra.mxu0 0
      %392 = vmatprep.subr.bf16.mxu0 0
      %393 = vmatpush2.bf16.msra.mxu0 0
      %394 = vmatprep.subr.bf16.mxu0 0
      %395 = vmatpush2.bf16.msra.mxu0 0
      %396 = vmatprep.subr.bf16.mxu0 0
      %397 = vmatpush2.bf16.msra.mxu0 0
      %398 = vmatprep.subr.bf16.mxu0 0
      %399 = vmatpush2.bf16.msra.mxu0 0
      %400 = vmatprep.mubr.bf16.mxu0 0
      %401 = vmatmul.mubr.bf16.gmra.mxu0 %v317
      %v402 = vpop.f32.mrf.mxu0
      %v403 = vadd.f32 0.0, %v402
      %v404 = vpop.f32.mrf.mxu0
      %v405 = vpop.f32.mrf.mxu0
      %v406 = vadd.f32 0.0, %v405
      %v407 = vpop.f32.mrf.mxu0
      %408 = vmatprep.mubr.bf16.mxu0 0
      %409 = vmatmul.mubr.bf16.gmra.mxu0 %v320
      %v410 = vpop.f32.mrf.mxu0
      %v411 = vadd.f32 0.0, %v410
      %v412 = vpop.f32.mrf.mxu0
      %v413 = vpop.f32.mrf.mxu0
      %v414 = vadd.f32 0.0, %v413
      %v415 = vpop.f32.mrf.mxu0
      %416 = vmatprep.mubr.bf16.mxu0 0
      %417 = vmatmul.mubr.bf16.gmra.mxu0 %v323
      %v418 = vpop.f32.mrf.mxu0
      %v419 = vadd.f32 0.0, %v418
      %v420 = vpop.f32.mrf.mxu0
      %v421 = vpop.f32.mrf.mxu0
      %v422 = vadd.f32 0.0, %v421
      %v423 = vpop.f32.mrf.mxu0
      %424 = vmatprep.mubr.bf16.mxu0 0
      %425 = vmatmul.mubr.bf16.gmra.mxu0 %v326
      %v426 = vpop.f32.mrf.mxu0
      %v427 = vadd.f32 0.0, %v426
      %v428 = vpop.f32.mrf.mxu0
      %v429 = vpop.f32.mrf.mxu0
      %v430 = vadd.f32 0.0, %v429
      %v431 = vpop.f32.mrf.mxu0
      %432 = vmatprep.mubr.bf16.mxu0 0
      %433 = vmatmul.mubr.bf16.gmra.mxu0 %v329
      %v434 = vpop.f32.mrf.mxu0
      %v435 = vadd.f32 0.0, %v434
      %v436 = vpop.f32.mrf.mxu0
      %v437 = vpop.f32.mrf.mxu0
      %v438 = vadd.f32 0.0, %v437
      %v439 = vpop.f32.mrf.mxu0
      %440 = vmatprep.mubr.bf16.mxu0 0
      %441 = vmatmul.mubr.bf16.gmra.mxu0 %v332
      %v442 = vpop.f32.mrf.mxu0
      %v443 = vadd.f32 0.0, %v442
      %v444 = vpop.f32.mrf.mxu0
      %v445 = vpop.f32.mrf.mxu0
      %v446 = vadd.f32 0.0, %v445
      %v447 = vpop.f32.mrf.mxu0
      %448 = vmatprep.mubr.bf16.mxu0 0
      %449 = vmatmul.mubr.bf16.gmra.mxu0 %v335
      %v450 = vpop.f32.mrf.mxu0
      %v451 = vadd.f32 0.0, %v450
      %v452 = vpop.f32.mrf.mxu0
      %v453 = vpop.f32.mrf.mxu0
      %v454 = vadd.f32 0.0, %v453
      %v455 = vpop.f32.mrf.mxu0
      %456 = vmatprep.mubr.bf16.mxu0 0
      %457 = vmatmul.mubr.bf16.gmra.mxu0 %v338
      %v458 = vpop.f32.mrf.mxu0
      %v459 = vadd.f32 0.0, %v458
      %v460 = vpop.f32.mrf.mxu0
      %v461 = vpop.f32.mrf.mxu0
      %v462 = vadd.f32 0.0, %v461
      %v463 = vpop.f32.mrf.mxu0
      %464 = vmatprep.mubr.bf16.mxu0 0
      %465 = vmatmul.mubr.bf16.gmra.mxu0 %v341
      %v466 = vpop.f32.mrf.mxu0
      %v467 = vadd.f32 0.0, %v466
      %v468 = vpop.f32.mrf.mxu0
      %v469 = vpop.f32.mrf.mxu0
      %v470 = vadd.f32 0.0, %v469
      %v471 = vpop.f32.mrf.mxu0
      %472 = vmatprep.mubr.bf16.mxu0 0
      %473 = vmatmul.mubr.bf16.gmra.mxu0 %v344
      %v474 = vpop.f32.mrf.mxu0
      %v475 = vadd.f32 0.0, %v474
      %v476 = vpop.f32.mrf.mxu0
      %v477 = vpop.f32.mrf.mxu0
      %v478 = vadd.f32 0.0, %v477
      %v479 = vpop.f32.mrf.mxu0
      %480 = vmatprep.mubr.bf16.mxu0 0
      %481 = vmatmul.mubr.bf16.gmra.mxu0 %v347
      %v482 = vpop.f32.mrf.mxu0
      %v483 = vadd.f32 0.0, %v482
      %v484 = vpop.f32.mrf.mxu0
      %v485 = vpop.f32.mrf.mxu0
      %v486 = vadd.f32 0.0, %v485
      %v487 = vpop.f32.mrf.mxu0
      %488 = vmatprep.mubr.bf16.mxu0 0
      %489 = vmatmul.mubr.bf16.gmra.mxu0 %v350
      %v490 = vpop.f32.mrf.mxu0
      %v491 = vadd.f32 0.0, %v490
      %v492 = vpop.f32.mrf.mxu0
      %v493 = vpop.f32.mrf.mxu0
      %v494 = vadd.f32 0.0, %v493
      %v495 = vpop.f32.mrf.mxu0
      %496 = vmatprep.mubr.bf16.mxu0 0
      %497 = vmatmul.mubr.bf16.gmra.mxu0 %v353
      %v498 = vpop.f32.mrf.mxu0
      %v499 = vadd.f32 0.0, %v498
      %v500 = vpop.f32.mrf.mxu0
      %v501 = vpop.f32.mrf.mxu0
      %v502 = vadd.f32 0.0, %v501
      %v503 = vpop.f32.mrf.mxu0
      %504 = vmatprep.mubr.bf16.mxu0 0
      %505 = vmatmul.mubr.bf16.gmra.mxu0 %v356
      %v506 = vpop.f32.mrf.mxu0
      %v507 = vadd.f32 0.0, %v506
      %v508 = vpop.f32.mrf.mxu0
      %v509 = vpop.f32.mrf.mxu0
      %v510 = vadd.f32 0.0, %v509
      %v511 = vpop.f32.mrf.mxu0
      %512 = vmatprep.mubr.bf16.mxu0 0
      %513 = vmatmul.mubr.bf16.gmra.mxu0 %v359
      %v514 = vpop.f32.mrf.mxu0
      %v515 = vadd.f32 0.0, %v514
      %v516 = vpop.f32.mrf.mxu0
      %v517 = vpop.f32.mrf.mxu0
      %v518 = vadd.f32 0.0, %v517
      %v519 = vpop.f32.mrf.mxu0
      %520 = vmatprep.mubr.bf16.mxu0 0
      %521 = vmatmul.mubr.bf16.gmra.mxu0 %v362
      %v522 = vpop.f32.mrf.mxu0
      %v523 = vadd.f32 0.0, %v522
      %v524 = vpop.f32.mrf.mxu0
      %v525 = vpop.f32.mrf.mxu0
      %v526 = vadd.f32 0.0, %v525
      %v527 = vpop.f32.mrf.mxu0
      %528 = vdwg.mxu0
      %v529 = vld [vmem:[%s2] sm:$0x1]
      %v531 = vlaneseq
      %v532 = vshrl.u32 %v531, 7
      %v533 = vsub.s32 0, %v532
      %v534 = vrot.slane %v529, %v533
      %v536 = vmul.f32 %v403, %v534
      %v537 = vmul.f32 %v406, %v534
      %v538 = vmul.f32 %v411, %v534
      %v539 = vmul.f32 %v414, %v534
      %v540 = vmul.f32 %v419, %v534
      %v541 = vmul.f32 %v422, %v534
      %v542 = vmul.f32 %v427, %v534
      %v543 = vmul.f32 %v430, %v534
      %v544 = vmul.f32 %v435, %v534
      %v545 = vmul.f32 %v438, %v534
      %v546 = vmul.f32 %v443, %v534
      %v547 = vmul.f32 %v446, %v534
      %v548 = vmul.f32 %v451, %v534
      %v549 = vmul.f32 %v454, %v534
      %v550 = vmul.f32 %v459, %v534
      %v551 = vmul.f32 %v462, %v534
      %v552 = vmul.f32 %v467, %v534
      %v553 = vmul.f32 %v470, %v534
      %v554 = vmul.f32 %v475, %v534
      %v555 = vmul.f32 %v478, %v534
      %v556 = vmul.f32 %v483, %v534
      %v557 = vmul.f32 %v486, %v534
      %v558 = vmul.f32 %v491, %v534
      %v559 = vmul.f32 %v494, %v534
      %v560 = vmul.f32 %v499, %v534
      %v561 = vmul.f32 %v502, %v534
      %v562 = vmul.f32 %v507, %v534
      %v563 = vmul.f32 %v510, %v534
      %v564 = vmul.f32 %v515, %v534
      %v565 = vmul.f32 %v518, %v534
      %v566 = vmul.f32 %v523, %v534
      %v567 = vmul.f32 %v526, %v534
      %v568 = vld [vmem:[%s3] sm:$0x1]
      %v570 = vlaneseq
      %v571 = vshrl.u32 %v570, 7
      %v572 = vsub.s32 0, %v571
      %v573 = vrot.slane %v568, %v572
      %v575 = vadd.f32 %v536, %v573
      %v576 = vadd.f32 %v537, %v573
      %v577 = vadd.f32 %v538, %v573
      %v578 = vadd.f32 %v539, %v573
      %v579 = vadd.f32 %v540, %v573
      %v580 = vadd.f32 %v541, %v573
      %v581 = vadd.f32 %v542, %v573
      %v582 = vadd.f32 %v543, %v573
      %v583 = vadd.f32 %v544, %v573
      %v584 = vadd.f32 %v545, %v573
      %v585 = vadd.f32 %v546, %v573
      %v586 = vadd.f32 %v547, %v573
      %v587 = vadd.f32 %v548, %v573
      %v588 = vadd.f32 %v549, %v573
      %v589 = vadd.f32 %v550, %v573
      %v590 = vadd.f32 %v551, %v573
      %v591 = vadd.f32 %v552, %v573
      %v592 = vadd.f32 %v553, %v573
      %v593 = vadd.f32 %v554, %v573
      %v594 = vadd.f32 %v555, %v573
      %v595 = vadd.f32 %v556, %v573
      %v596 = vadd.f32 %v557, %v573
      %v597 = vadd.f32 %v558, %v573
      %v598 = vadd.f32 %v559, %v573
      %v599 = vadd.f32 %v560, %v573
      %v600 = vadd.f32 %v561, %v573
      %v601 = vadd.f32 %v562, %v573
      %v602 = vadd.f32 %v563, %v573
      %v603 = vadd.f32 %v564, %v573
      %v604 = vadd.f32 %v565, %v573
      %v605 = vadd.f32 %v566, %v573
      %v606 = vadd.f32 %v567, %v573
      %v607 = vxor.u32 %v575, 2147483648
      %v608 = vxor.u32 %v576, 2147483648
      %v609 = vxor.u32 %v577, 2147483648
      %v610 = vxor.u32 %v578, 2147483648
      %v611 = vxor.u32 %v579, 2147483648
      %v612 = vxor.u32 %v580, 2147483648
      %v613 = vxor.u32 %v581, 2147483648
      %v614 = vxor.u32 %v582, 2147483648
      %v615 = vxor.u32 %v583, 2147483648
      %v616 = vxor.u32 %v584, 2147483648
      %v617 = vxor.u32 %v585, 2147483648
      %v618 = vxor.u32 %v586, 2147483648
      %v619 = vxor.u32 %v587, 2147483648
      %v620 = vxor.u32 %v588, 2147483648
      %v621 = vxor.u32 %v589, 2147483648
      %v622 = vxor.u32 %v590, 2147483648
      %v623 = vxor.u32 %v591, 2147483648
      %v624 = vxor.u32 %v592, 2147483648
      %v625 = vxor.u32 %v593, 2147483648
      %v626 = vxor.u32 %v594, 2147483648
      %v627 = vxor.u32 %v595, 2147483648
      %v628 = vxor.u32 %v596, 2147483648
      %v629 = vxor.u32 %v597, 2147483648
      %v630 = vxor.u32 %v598, 2147483648
      %v631 = vxor.u32 %v599, 2147483648
      %v632 = vxor.u32 %v600, 2147483648
      %v633 = vxor.u32 %v601, 2147483648
      %v634 = vxor.u32 %v602, 2147483648
      %v635 = vxor.u32 %v603, 2147483648
      %v636 = vxor.u32 %v604, 2147483648
      %v637 = vxor.u32 %v605, 2147483648
      %v638 = vxor.u32 %v606, 2147483648
      %v639 = vmul.f32 %v607, 1.442695
      %v640 = vpow.pop %v639
      %v641 = vmul.f32 %v608, 1.442695
      %v642 = vpow.pop %v641
      %v643 = vmul.f32 %v609, 1.442695
      %v644 = vpow.pop %v643
      %v645 = vmul.f32 %v610, 1.442695
      %v646 = vpow.pop %v645
      %v647 = vmul.f32 %v611, 1.442695
      %v648 = vpow.pop %v647
      %v649 = vmul.f32 %v612, 1.442695
      %v650 = vpow.pop %v649
      %v651 = vmul.f32 %v613, 1.442695
      %v652 = vpow.pop %v651
      %v653 = vmul.f32 %v614, 1.442695
      %v654 = vpow.pop %v653
      %v655 = vmul.f32 %v615, 1.442695
      %v656 = vpow.pop %v655
      %v657 = vmul.f32 %v616, 1.442695
      %v658 = vpow.pop %v657
      %v659 = vmul.f32 %v617, 1.442695
      %v660 = vpow.pop %v659
      %v661 = vmul.f32 %v618, 1.442695
      %v662 = vpow.pop %v661
      %v663 = vmul.f32 %v619, 1.442695
      %v664 = vpow.pop %v663
      %v665 = vmul.f32 %v620, 1.442695
      %v666 = vpow.pop %v665
      %v667 = vmul.f32 %v621, 1.442695
      %v668 = vpow.pop %v667
      %v669 = vmul.f32 %v622, 1.442695
      %v670 = vpow.pop %v669
      %v671 = vmul.f32 %v623, 1.442695
      %v672 = vpow.pop %v671
      %v673 = vmul.f32 %v624, 1.442695
      %v674 = vpow.pop %v673
      %v675 = vmul.f32 %v625, 1.442695
      %v676 = vpow.pop %v675
      %v677 = vmul.f32 %v626, 1.442695
      %v678 = vpow.pop %v677
      %v679 = vmul.f32 %v627, 1.442695
      %v680 = vpow.pop %v679
      %v681 = vmul.f32 %v628, 1.442695
      %v682 = vpow.pop %v681
      %v683 = vmul.f32 %v629, 1.442695
      %v684 = vpow.pop %v683
      %v685 = vmul.f32 %v630, 1.442695
      %v686 = vpow.pop %v685
      %v687 = vmul.f32 %v631, 1.442695
      %v688 = vpow.pop %v687
      %v689 = vmul.f32 %v632, 1.442695
      %v690 = vpow.pop %v689
      %v691 = vmul.f32 %v633, 1.442695
      %v692 = vpow.pop %v691
      %v693 = vmul.f32 %v634, 1.442695
      %v694 = vpow.pop %v693
      %v695 = vmul.f32 %v635, 1.442695
      %v696 = vpow.pop %v695
      %v697 = vmul.f32 %v636, 1.442695
      %v698 = vpow.pop %v697
      %v699 = vmul.f32 %v637, 1.442695
      %v700 = vpow.pop %v699
      %v701 = vmul.f32 %v638, 1.442695
      %v702 = vpow.pop %v701
      %v703 = vadd.f32 %v640, 1.0
      %v704 = vadd.f32 %v642, 1.0
      %v705 = vadd.f32 %v644, 1.0
      %v706 = vadd.f32 %v646, 1.0
      %v707 = vadd.f32 %v648, 1.0
      %v708 = vadd.f32 %v650, 1.0
      %v709 = vadd.f32 %v652, 1.0
      %v710 = vadd.f32 %v654, 1.0
      %v711 = vadd.f32 %v656, 1.0
      %v712 = vadd.f32 %v658, 1.0
      %v713 = vadd.f32 %v660, 1.0
      %v714 = vadd.f32 %v662, 1.0
      %v715 = vadd.f32 %v664, 1.0
      %v716 = vadd.f32 %v666, 1.0
      %v717 = vadd.f32 %v668, 1.0
      %v718 = vadd.f32 %v670, 1.0
      %v719 = vadd.f32 %v672, 1.0
      %v720 = vadd.f32 %v674, 1.0
      %v721 = vadd.f32 %v676, 1.0
      %v722 = vadd.f32 %v678, 1.0
      %v723 = vadd.f32 %v680, 1.0
      %v724 = vadd.f32 %v682, 1.0
      %v725 = vadd.f32 %v684, 1.0
      %v726 = vadd.f32 %v686, 1.0
      %v727 = vadd.f32 %v688, 1.0
      %v728 = vadd.f32 %v690, 1.0
      %v729 = vadd.f32 %v692, 1.0
      %v730 = vadd.f32 %v694, 1.0
      %v731 = vadd.f32 %v696, 1.0
      %v732 = vadd.f32 %v698, 1.0
      %v733 = vadd.f32 %v700, 1.0
      %v734 = vadd.f32 %v702, 1.0
      %v735 = vrcp.pop %v703
      %v736 = vmul.f32 1.0, %v735
      %v737 = vrcp.pop %v704
      %v738 = vmul.f32 1.0, %v737
      %v739 = vrcp.pop %v705
      %v740 = vmul.f32 1.0, %v739
      %v741 = vrcp.pop %v706
      %v742 = vmul.f32 1.0, %v741
      %v743 = vrcp.pop %v707
      %v744 = vmul.f32 1.0, %v743
      %v745 = vrcp.pop %v708
      %v746 = vmul.f32 1.0, %v745
      %v747 = vrcp.pop %v709
      %v748 = vmul.f32 1.0, %v747
      %v749 = vrcp.pop %v710
      %v750 = vmul.f32 1.0, %v749
      %v751 = vrcp.pop %v711
      %v752 = vmul.f32 1.0, %v751
      %v753 = vrcp.pop %v712
      %v754 = vmul.f32 1.0, %v753
      %v755 = vrcp.pop %v713
      %v756 = vmul.f32 1.0, %v755
      %v757 = vrcp.pop %v714
      %v758 = vmul.f32 1.0, %v757
      %v759 = vrcp.pop %v715
      %v760 = vmul.f32 1.0, %v759
      %v761 = vrcp.pop %v716
      %v762 = vmul.f32 1.0, %v761
      %v763 = vrcp.pop %v717
      %v764 = vmul.f32 1.0, %v763
      %v765 = vrcp.pop %v718
      %v766 = vmul.f32 1.0, %v765
      %v767 = vrcp.pop %v719
      %v768 = vmul.f32 1.0, %v767
      %v769 = vrcp.pop %v720
      %v770 = vmul.f32 1.0, %v769
      %v771 = vrcp.pop %v721
      %v772 = vmul.f32 1.0, %v771
      %v773 = vrcp.pop %v722
      %v774 = vmul.f32 1.0, %v773
      %v775 = vrcp.pop %v723
      %v776 = vmul.f32 1.0, %v775
      %v777 = vrcp.pop %v724
      %v778 = vmul.f32 1.0, %v777
      %v779 = vrcp.pop %v725
      %v780 = vmul.f32 1.0, %v779
      %v781 = vrcp.pop %v726
      %v782 = vmul.f32 1.0, %v781
      %v783 = vrcp.pop %v727
      %v784 = vmul.f32 1.0, %v783
      %v785 = vrcp.pop %v728
      %v786 = vmul.f32 1.0, %v785
      %v787 = vrcp.pop %v729
      %v788 = vmul.f32 1.0, %v787
      %v789 = vrcp.pop %v730
      %v790 = vmul.f32 1.0, %v789
      %v791 = vrcp.pop %v731
      %v792 = vmul.f32 1.0, %v791
      %v793 = vrcp.pop %v732
      %v794 = vmul.f32 1.0, %v793
      %v795 = vrcp.pop %v733
      %v796 = vmul.f32 1.0, %v795
      %v797 = vrcp.pop %v734
      %v798 = vmul.f32 1.0, %v797
      %v799 = vmul.f32 %v575, %v736
      %v800 = vmul.f32 %v576, %v738
      %v801 = vmul.f32 %v577, %v740
      %v802 = vmul.f32 %v578, %v742
      %v803 = vmul.f32 %v579, %v744
      %v804 = vmul.f32 %v580, %v746
      %v805 = vmul.f32 %v581, %v748
      %v806 = vmul.f32 %v582, %v750
      %v807 = vmul.f32 %v583, %v752
      %v808 = vmul.f32 %v584, %v754
      %v809 = vmul.f32 %v585, %v756
      %v810 = vmul.f32 %v586, %v758
      %v811 = vmul.f32 %v587, %v760
      %v812 = vmul.f32 %v588, %v762
      %v813 = vmul.f32 %v589, %v764
      %v814 = vmul.f32 %v590, %v766
      %v815 = vmul.f32 %v591, %v768
      %v816 = vmul.f32 %v592, %v770
      %v817 = vmul.f32 %v593, %v772
      %v818 = vmul.f32 %v594, %v774
      %v819 = vmul.f32 %v595, %v776
      %v820 = vmul.f32 %v596, %v778
      %v821 = vmul.f32 %v597, %v780
      %v822 = vmul.f32 %v598, %v782
      %v823 = vmul.f32 %v599, %v784
      %v824 = vmul.f32 %v600, %v786
      %v825 = vmul.f32 %v601, %v788
      %v826 = vmul.f32 %v602, %v790
      %v827 = vmul.f32 %v603, %v792
      %v828 = vmul.f32 %v604, %v794
      %v829 = vmul.f32 %v605, %v796
      %v830 = vmul.f32 %v606, %v798
      %v831 = vpack.c.bf16 %v800, %v799
      %v832 = vpack.c.bf16 %v802, %v801
      %v833 = vpack.c.bf16 %v804, %v803
      %v834 = vpack.c.bf16 %v806, %v805
      %v835 = vpack.c.bf16 %v808, %v807
      %v836 = vpack.c.bf16 %v810, %v809
      %v837 = vpack.c.bf16 %v812, %v811
      %v838 = vpack.c.bf16 %v814, %v813
      %v839 = vpack.c.bf16 %v816, %v815
      %v840 = vpack.c.bf16 %v818, %v817
      %v841 = vpack.c.bf16 %v820, %v819
      %v842 = vpack.c.bf16 %v822, %v821
      %v843 = vpack.c.bf16 %v824, %v823
      %v844 = vpack.c.bf16 %v826, %v825
      %v845 = vpack.c.bf16 %v828, %v827
      %v846 = vpack.c.bf16 %v830, %v829
      %v863 = vunpack.c.l.b16 %v831
      %v864 = vunpack.c.h.b16 %v831
      %v865 = vunpack.c.l.b16 %v832
      %v866 = vunpack.c.h.b16 %v832
      %v867 = vunpack.c.l.b16 %v833
      %v868 = vunpack.c.h.b16 %v833
      %v869 = vunpack.c.l.b16 %v834
      %v870 = vunpack.c.h.b16 %v834
      %v871 = vunpack.c.l.b16 %v835
      %v872 = vunpack.c.h.b16 %v835
      %v873 = vunpack.c.l.b16 %v836
      %v874 = vunpack.c.h.b16 %v836
      %v875 = vunpack.c.l.b16 %v837
      %v876 = vunpack.c.h.b16 %v837
      %v877 = vunpack.c.l.b16 %v838
      %v878 = vunpack.c.h.b16 %v838
      %v879 = vunpack.c.l.b16 %v839
      %v880 = vunpack.c.h.b16 %v839
      %v881 = vunpack.c.l.b16 %v840
      %v882 = vunpack.c.h.b16 %v840
      %v883 = vunpack.c.l.b16 %v841
      %v884 = vunpack.c.h.b16 %v841
      %v885 = vunpack.c.l.b16 %v842
      %v886 = vunpack.c.h.b16 %v842
      %v887 = vunpack.c.l.b16 %v843
      %v888 = vunpack.c.h.b16 %v843
      %v889 = vunpack.c.l.b16 %v844
      %v890 = vunpack.c.h.b16 %v844
      %v891 = vunpack.c.l.b16 %v845
      %v892 = vunpack.c.h.b16 %v845
      %v893 = vunpack.c.l.b16 %v846
      %v894 = vunpack.c.h.b16 %v846
      %v895 = vpack.c.b16 %v863, %v863
      %v896 = vpack.c.b16 %v864, %v864
      %v897 = vpack.c.b16 %v865, %v865
      %v898 = vpack.c.b16 %v866, %v866
      %v899 = vpack.c.b16 %v867, %v867
      %v900 = vpack.c.b16 %v868, %v868
      %v901 = vpack.c.b16 %v869, %v869
      %v902 = vpack.c.b16 %v870, %v870
      %v903 = vpack.c.b16 %v871, %v871
      %v904 = vpack.c.b16 %v872, %v872
      %v905 = vpack.c.b16 %v873, %v873
      %v906 = vpack.c.b16 %v874, %v874
      %v907 = vpack.c.b16 %v875, %v875
      %v908 = vpack.c.b16 %v876, %v876
      %v909 = vpack.c.b16 %v877, %v877
      %v910 = vpack.c.b16 %v878, %v878
      %v911 = vpack.c.b16 %v879, %v879
      %v912 = vpack.c.b16 %v880, %v880
      %v913 = vpack.c.b16 %v881, %v881
      %v914 = vpack.c.b16 %v882, %v882
      %v915 = vpack.c.b16 %v883, %v883
      %v916 = vpack.c.b16 %v884, %v884
      %v917 = vpack.c.b16 %v885, %v885
      %v918 = vpack.c.b16 %v886, %v886
      %v919 = vpack.c.b16 %v887, %v887
      %v920 = vpack.c.b16 %v888, %v888
      %v921 = vpack.c.b16 %v889, %v889
      %v922 = vpack.c.b16 %v890, %v890
      %v923 = vpack.c.b16 %v891, %v891
      %v924 = vpack.c.b16 %v892, %v892
      %v925 = vpack.c.b16 %v893, %v893
      %v926 = vpack.c.b16 %v894, %v894
      %vm959 = vcmask 257024
      %960 = vst.msk [vmem:[%s199] sm:$0xf] %vm959, %v895
      %961 = vst.msk [vmem:[%s199 + $0x4] sm:$0xf] %vm959, %v896
      %962 = vst.msk [vmem:[%s199 + $0x8] sm:$0xf] %vm959, %v897
      %963 = vst.msk [vmem:[%s199 + $0xc] sm:$0xf] %vm959, %v898
      %964 = vst.msk [vmem:[%s199 + $0x10] sm:$0xf] %vm959, %v899
      %965 = vst.msk [vmem:[%s199 + $0x14] sm:$0xf] %vm959, %v900
      %966 = vst.msk [vmem:[%s199 + $0x18] sm:$0xf] %vm959, %v901
      %967 = vst.msk [vmem:[%s199 + $0x1c] sm:$0xf] %vm959, %v902
      %968 = vst.msk [vmem:[%s199 + $0x20] sm:$0xf] %vm959, %v903
      %969 = vst.msk [vmem:[%s199 + $0x24] sm:$0xf] %vm959, %v904
      %970 = vst.msk [vmem:[%s199 + $0x28] sm:$0xf] %vm959, %v905
      %971 = vst.msk [vmem:[%s199 + $0x2c] sm:$0xf] %vm959, %v906
      %972 = vst.msk [vmem:[%s199 + $0x30] sm:$0xf] %vm959, %v907
      %973 = vst.msk [vmem:[%s199 + $0x34] sm:$0xf] %vm959, %v908
      %974 = vst.msk [vmem:[%s199 + $0x38] sm:$0xf] %vm959, %v909
      %975 = vst.msk [vmem:[%s199 + $0x3c] sm:$0xf] %vm959, %v910
      %976 = vst.msk [vmem:[%s199 + $0x40] sm:$0xf] %vm959, %v911
      %977 = vst.msk [vmem:[%s199 + $0x44] sm:$0xf] %vm959, %v912
      %978 = vst.msk [vmem:[%s199 + $0x48] sm:$0xf] %vm959, %v913
      %979 = vst.msk [vmem:[%s199 + $0x4c] sm:$0xf] %vm959, %v914
      %980 = vst.msk [vmem:[%s199 + $0x50] sm:$0xf] %vm959, %v915
      %981 = vst.msk [vmem:[%s199 + $0x54] sm:$0xf] %vm959, %v916
      %982 = vst.msk [vmem:[%s199 + $0x58] sm:$0xf] %vm959, %v917
      %983 = vst.msk [vmem:[%s199 + $0x5c] sm:$0xf] %vm959, %v918
      %984 = vst.msk [vmem:[%s199 + $0x60] sm:$0xf] %vm959, %v919
      %985 = vst.msk [vmem:[%s199 + $0x64] sm:$0xf] %vm959, %v920
      %986 = vst.msk [vmem:[%s199 + $0x68] sm:$0xf] %vm959, %v921
      %987 = vst.msk [vmem:[%s199 + $0x6c] sm:$0xf] %vm959, %v922
      %988 = vst.msk [vmem:[%s199 + $0x70] sm:$0xf] %vm959, %v923
      %989 = vst.msk [vmem:[%s199 + $0x74] sm:$0xf] %vm959, %v924
      %990 = vst.msk [vmem:[%s199 + $0x78] sm:$0xf] %vm959, %v925
      %991 = vst.msk [vmem:[%s199 + $0x7c] sm:$0xf] %vm959, %v926
      %s992 = smul.u32 32, %s15
      %p993 = scmp.lt.s32.totalorder %s992, 63
      %s994 = scalar_select %p993, %s992, 63
      %s995 = smul.addr %s994, 4
      %s996 = scalar_lea.vmem %s4, %s995
      // Predicated region
      $region37: #{iv_block.3} parent=35 // pred_check
        %p997 = pneg %p122
      $region38: #{iv_block.3} parent=35 // pred_check_branch
        %999 = sbr.rel (%p997) target = $region40
      $region39: #{iv_block.3} parent=35 // pred_region
        %s1000 = smul.u32 32, %s15
      $region40: #{iv_block.3} parent=35 // pred_fallthru
        _
    $region36: #{iv_block.3} parent=5 // pred_fallthru
      _
    %p1001 = scmp.le.s32.totalorder 2, %s10
    // Predicated region
    $region41: #{iv_block.3} parent=5 // pred_check
      %p1002 = pneg %p1001
    $region42: #{iv_block.3} parent=5 // pred_check_branch
      %1004 = sbr.rel (%p1002) target = $region44
    $region43: #{iv_block.3} parent=5 // pred_region
      %s1005 = ssub.s32 %s10, 2
      // Predicated region
      $region45: #{iv_block.3} parent=43 // pred_check
        %p1006 = pneg %p128
      $region46: #{iv_block.3} parent=43 // pred_check_branch
        %1008 = sbr.rel (%p1006) target = $region48
      $region47: #{iv_block.3} parent=43 // pred_region
        %s1009 = smul.u32 32, %s16
        %p1010 = scmp.lt.s32.totalorder %s1009, 63
        %s1011 = scalar_select %p1010, %s1009, 63
        %s1012 = smul.addr %s1011, 4
        %s1013 = scalar_lea.vmem %s4, %s1012
      $region48: #{iv_block.3} parent=43 // pred_fallthru
        _
    $region44: #{iv_block.3} parent=5 // pred_fallthru
      _
  $region6: #{iv_block.3} parent=0 // loop_footer
    %s14 = sadd.s32 1, %s10
  $region7: #{iv_block.3} parent=0 // loop_footer_branch
    %9 = sbr.rel target = $region3
  $region8: #{iv_block.3} parent=0 // loop_exit
    _

// kernel: iv_block.5
$region0: #{iv_block.5}
  #allocation0 [shape = 'u32[]', space=smem, size = 0x4, offset = 0x4, fixed_abs, tag = 'smem constant byte address 0x4 - core index']
  #allocation1 [shape = 'u32[144,128]{1,0:T(1,128)}', space=vmem, size = 0x12000, scoped, tag = 'internal scratch']
  %s0 = inlined_call_operand.vmem [shape: bf16[512,32], index: 0, kind: input, shape index: {}]
  %s1 = inlined_call_operand.vmem [shape: bf16[32,8], index: 1, kind: input, shape index: {}]
  %s2 = inlined_call_operand.vmem [shape: f32[1,8], index: 2, kind: input, shape index: {}]
  %s3 = inlined_call_operand.vmem [shape: f32[1,8], index: 3, kind: input, shape index: {}]
  %s4 = inlined_call_operand.vmem [shape: f32[512,8], index: 4, kind: input, shape index: {}]
  %s5 = inlined_call_operand.vmem [shape: f32[512,8], index: 5, kind: output, shape index: {}]
  %s6 = sld [smem:[#allocation0]]
  $region53: #{iv_block.5} parent=0
    _
  %s8 = ssub.s32 1, %s6
  %s9 = scalar_select 0, %s8, %s6
  loop: start=0, step=1, limit=4
  $region2: #{iv_block.5} parent=0 // loop_pre_header
    _
  $region3: #{iv_block.5} parent=0 // loop_header
    %s11 = sphi 0, %s15
    %p12 = scmp.ge.s32.totalorder %s11, 4
    %s21 = sphi 0, %s23
    %s24 = sphi 0, %s21
    %s25 = sphi 0, %s24
    %s41 = sphi 0, %s25
    %s45 = sphi 0, %s45
    %s47 = sphi 0, %s45
    %s48 = sphi 0, %s47
    %s62 = sphi 0, %s48
    %s66 = sphi 0, %s66
    %s68 = sphi 0, %s66
    %s69 = sphi 0, %s68
    %s83 = sphi 0, %s69
    %s87 = sphi 0, %s87
    %s89 = sphi 0, %s87
    %s90 = sphi 0, %s89
    %s104 = sphi 0, %s90
    %s110 = sphi 0, %s112
    %s113 = sphi 0, %s110
    %s114 = sphi 0, %s113
    %s130 = sphi 0, %s114
    %s136 = sphi 0, %s138
    %s139 = sphi 0, %s136
    %s140 = sphi 0, %s139
    %s156 = sphi 0, %s140
  $region4: #{iv_block.5} parent=0 // loop_header_branch
    %14 = sbr.rel (%p12) target = $region8
  $region5: #{iv_block.5} parent=0 // loop_body
    %s16 = ssub.s32 %s11, 1
    %s17 = ssub.s32 %s11, 2
    %s18 = sadd.s32 %s11, 1
    %s19 = ssub.s32 %s11, %s18
    %p20 = scmp.eq.s32.totalorder %s19, 0
    %s22 = sadd.s32 %s21, 1
    %s23 = scalar_select %p20, %s21, %s22
    %p26 = pneg %p20
    %p27 = scmp.eq.s32.totalorder %s11, 1
    %p28 = por %p26, %p27
    %p29 = scmp.ne.s32.totalorder %s21, %s24
    %p30 = scmp.eq.s32.totalorder %s11, 0
    %p31 = por %p29, %p30
    %p32 = scmp.ne.s32.totalorder %s21, %s24
    %p33 = scmp.eq.s32.totalorder %s16, 1
    %p34 = por %p32, %p33
    %p35 = scmp.ne.s32.totalorder %s24, %s25
    %p36 = scmp.eq.s32.totalorder %s16, 0
    %p37 = por %p35, %p36
    %p38 = scmp.ne.s32.totalorder %s24, %s25
    %p39 = scmp.eq.s32.totalorder %s17, 1
    %p40 = por %p38, %p39
    %p42 = scmp.ne.s32.totalorder %s25, %s41
    %p43 = scmp.eq.s32.totalorder %s17, 0
    %p44 = por %p42, %p43
    %s46 = sadd.s32 %s45, 1
    %p49 = scmp.eq.s32.totalorder %s11, 1
    %p50 = scmp.ne.s32.totalorder %s45, %s47
    %p51 = scmp.eq.s32.totalorder %s11, 0
    %p52 = por %p50, %p51
    %p53 = scmp.ne.s32.totalorder %s45, %s47
    %p54 = scmp.eq.s32.totalorder %s16, 1
    %p55 = por %p53, %p54
    %p56 = scmp.ne.s32.totalorder %s47, %s48
    %p57 = scmp.eq.s32.totalorder %s16, 0
    %p58 = por %p56, %p57
    %p59 = scmp.ne.s32.totalorder %s47, %s48
    %p60 = scmp.eq.s32.totalorder %s17, 1
    %p61 = por %p59, %p60
    %p63 = scmp.ne.s32.totalorder %s48, %s62
    %p64 = scmp.eq.s32.totalorder %s17, 0
    %p65 = por %p63, %p64
    %s67 = sadd.s32 %s66, 1
    %p70 = scmp.eq.s32.totalorder %s11, 1
    %p71 = scmp.ne.s32.totalorder %s66, %s68
    %p72 = scmp.eq.s32.totalorder %s11, 0
    %p73 = por %p71, %p72
    %p74 = scmp.ne.s32.totalorder %s66, %s68
    %p75 = scmp.eq.s32.totalorder %s16, 1
    %p76 = por %p74, %p75
    %p77 = scmp.ne.s32.totalorder %s68, %s69
    %p78 = scmp.eq.s32.totalorder %s16, 0
    %p79 = por %p77, %p78
    %p80 = scmp.ne.s32.totalorder %s68, %s69
    %p81 = scmp.eq.s32.totalorder %s17, 1
    %p82 = por %p80, %p81
    %p84 = scmp.ne.s32.totalorder %s69, %s83
    %p85 = scmp.eq.s32.totalorder %s17, 0
    %p86 = por %p84, %p85
    %s88 = sadd.s32 %s87, 1
    %p91 = scmp.eq.s32.totalorder %s11, 1
    %p92 = scmp.ne.s32.totalorder %s87, %s89
    %p93 = scmp.eq.s32.totalorder %s11, 0
    %p94 = por %p92, %p93
    %p95 = scmp.ne.s32.totalorder %s87, %s89
    %p96 = scmp.eq.s32.totalorder %s16, 1
    %p97 = por %p95, %p96
    %p98 = scmp.ne.s32.totalorder %s89, %s90
    %p99 = scmp.eq.s32.totalorder %s16, 0
    %p100 = por %p98, %p99
    %p101 = scmp.ne.s32.totalorder %s89, %s90
    %p102 = scmp.eq.s32.totalorder %s17, 1
    %p103 = por %p101, %p102
    %p105 = scmp.ne.s32.totalorder %s90, %s104
    %p106 = scmp.eq.s32.totalorder %s17, 0
    %p107 = por %p105, %p106
    %s108 = ssub.s32 %s11, %s18
    %p109 = scmp.eq.s32.totalorder %s108, 0
    %s111 = sadd.s32 %s110, 1
    %s112 = scalar_select %p109, %s110, %s111
    %p115 = pneg %p109
    %p116 = scmp.eq.s32.totalorder %s11, 1
    %p117 = por %p115, %p116
    %p118 = scmp.ne.s32.totalorder %s110, %s113
    %p119 = scmp.eq.s32.totalorder %s11, 0
    %p120 = por %p118, %p119
    %p121 = scmp.ne.s32.totalorder %s110, %s113
    %p122 = scmp.eq.s32.totalorder %s16, 1
    %p123 = por %p121, %p122
    %p124 = scmp.ne.s32.totalorder %s113, %s114
    %p125 = scmp.eq.s32.totalorder %s16, 0
    %p126 = por %p124, %p125
    %p127 = scmp.ne.s32.totalorder %s113, %s114
    %p128 = scmp.eq.s32.totalorder %s17, 1
    %p129 = por %p127, %p128
    %p131 = scmp.ne.s32.totalorder %s114, %s130
    %p132 = scmp.eq.s32.totalorder %s17, 0
    %p133 = por %p131, %p132
    %s134 = ssub.s32 %s11, %s18
    %p135 = scmp.eq.s32.totalorder %s134, 0
    %s137 = sadd.s32 %s136, 1
    %s138 = scalar_select %p135, %s136, %s137
    %p141 = pneg %p135
    %p142 = scmp.eq.s32.totalorder %s11, 1
    %p143 = por %p141, %p142
    %p144 = scmp.ne.s32.totalorder %s136, %s139
    %p145 = scmp.eq.s32.totalorder %s11, 0
    %p146 = por %p144, %p145
    %p147 = scmp.ne.s32.totalorder %s136, %s139
    %p148 = scmp.eq.s32.totalorder %s16, 1
    %p149 = por %p147, %p148
    %p150 = scmp.ne.s32.totalorder %s139, %s140
    %p151 = scmp.eq.s32.totalorder %s16, 0
    %p152 = por %p150, %p151
    %p153 = scmp.ne.s32.totalorder %s139, %s140
    %p154 = scmp.eq.s32.totalorder %s17, 1
    %p155 = por %p153, %p154
    %p157 = scmp.ne.s32.totalorder %s140, %s156
    %p158 = scmp.eq.s32.totalorder %s17, 0
    %p159 = por %p157, %p158
    %p160 = scmp.le.s32.totalorder 1, %s11
    %p161 = scmp.lt.s32.totalorder %s11, 3
    %p162 = pnand %p160, %p161
    %p163 = pneg %p162
    // Predicated region
    $region9: #{iv_block.5} parent=5 // pred_check
      _
    $region10: #{iv_block.5} parent=5 // pred_check_branch
      %165 = sbr.rel (%p162) target = $region12
    $region11: #{iv_block.5} parent=5 // pred_region
      %s166 = ssub.s32 %s11, 1
      // Predicated region
      $region13: #{iv_block.5} parent=11 // pred_check
        %p167 = pneg %p58
      $region14: #{iv_block.5} parent=11 // pred_check_branch
        %169 = sbr.rel (%p167) target = $region16
      $region15: #{iv_block.5} parent=11 // pred_region
        _
      $region16: #{iv_block.5} parent=11 // pred_fallthru
        _
      // Predicated region
      $region17: #{iv_block.5} parent=11 // pred_check
        %p170 = pneg %p79
      $region18: #{iv_block.5} parent=11 // pred_check_branch
        %172 = sbr.rel (%p170) target = $region20
      $region19: #{iv_block.5} parent=11 // pred_region
        _
      $region20: #{iv_block.5} parent=11 // pred_fallthru
        _
      // Predicated region
      $region21: #{iv_block.5} parent=11 // pred_check
        %p173 = pneg %p100
      $region22: #{iv_block.5} parent=11 // pred_check_branch
        %175 = sbr.rel (%p173) target = $region24
      $region23: #{iv_block.5} parent=11 // pred_region
        _
      $region24: #{iv_block.5} parent=11 // pred_fallthru
        _
    $region12: #{iv_block.5} parent=5 // pred_fallthru
      _
    %p176 = scmp.lt.s32.totalorder %s11, 2
    // Predicated region
    $region25: #{iv_block.5} parent=5 // pred_check
      %p177 = pneg %p176
    $region26: #{iv_block.5} parent=5 // pred_check_branch
      %179 = sbr.rel (%p177) target = $region28
    $region27: #{iv_block.5} parent=5 // pred_region
      // Predicated region
      $region29: #{iv_block.5} parent=27 // pred_check
        %p180 = pneg %p31
      $region30: #{iv_block.5} parent=27 // pred_check_branch
        %182 = sbr.rel (%p180) target = $region32
      $region31: #{iv_block.5} parent=27 // pred_region
        %s183 = smul.u32 32, %s11
        %p184 = scmp.lt.s32.totalorder %s183, 63
        %s185 = scalar_select %p184, %s183, 63
        %s186 = smul.addr %s185, 4
        %s187 = scalar_lea.vmem %s0, %s186
        %s188 = smul.u32 32, %s11
      $region32: #{iv_block.5} parent=27 // pred_fallthru
        _
      // Predicated region
      $region33: #{iv_block.5} parent=27 // pred_check
        %p189 = pneg %p120
      $region34: #{iv_block.5} parent=27 // pred_check_branch
        %191 = sbr.rel (%p189) target = $region36
      $region35: #{iv_block.5} parent=27 // pred_region
        %s192 = smul.u32 32, %s11
        %p193 = scmp.lt.s32.totalorder %s192, 63
        %s194 = scalar_select %p193, %s192, 63
        %s195 = smul.addr %s194, 8
        %s196 = scalar_lea.vmem %s4, %s195
        %s197 = smul.u32 32, %s11
      $region36: #{iv_block.5} parent=27 // pred_fallthru
        _
    $region28: #{iv_block.5} parent=5 // pred_fallthru
      _
    %p198 = scmp.le.s32.totalorder 1, %s11
    %p199 = scmp.lt.s32.totalorder %s11, 3
    %p200 = pnand %p198, %p199
    %p201 = pneg %p200
    // Predicated region
    $region37: #{iv_block.5} parent=5 // pred_check
      _
    $region38: #{iv_block.5} parent=5 // pred_check_branch
      %203 = sbr.rel (%p200) target = $region40
    $region39: #{iv_block.5} parent=5 // pred_region
      %s204 = ssub.s32 %s11, 1
      %s205 = smul.u32 32, %s16
      %p206 = scmp.lt.s32.totalorder %s205, 63
      %s207 = scalar_select %p206, %s205, 63
      %s208 = smul.addr %s207, 4
      %s209 = scalar_lea.vmem %s0, %s208
      %p210 = pneg %p37
      %p211 = pneg %p34
      %p212 = pneg %p58
      %p213 = pneg %p55
      %p214 = pneg %p79
      %p215 = pneg %p76
      %p216 = pneg %p100
      %p217 = pneg %p97
      %s218 = smul.u32 32, %s16
      %p219 = scmp.lt.s32.totalorder %s218, 63
      %s220 = scalar_select %p219, %s218, 63
      %s221 = smul.addr %s220, 8
      %s222 = scalar_lea.vmem %s4, %s221
      %p223 = pneg %p126
      %p224 = pneg %p123
      %p225 = pneg %p152
      %p226 = pneg %p149
      %s227 = smul.u32 32, %s16
      %p228 = scmp.lt.s32.totalorder %s227, 63
      %s229 = scalar_select %p228, %s227, 63
      %s230 = smul.addr %s229, 8
      %s231 = scalar_lea.vmem %s5, %s230
      %s232 = smul.u32 32, %s16
      %p233 = scmp.lt.s32.totalorder %s232, 63
      %s234 = scalar_select %p233, %s232, 63
      %s235 = smul.addr %s234, 4
      %s236 = scalar_lea.vmem %s0, %s235
      %s237 = smul.u32 32, %s16
      %s238 = smul.u32 32, %s16
      %p239 = scmp.lt.s32.totalorder %s238, 63
      %s240 = scalar_select %p239, %s238, 63
      %s241 = smul.addr %s240, 8
      %s242 = scalar_lea.vmem %s4, %s241
      %s243 = smul.u32 32, %s16
      %s244 = smul.u32 32, %s16
      %p245 = scmp.lt.s32.totalorder %s244, 63
      %s246 = scalar_select %p245, %s244, 63
      %s247 = smul.addr %s246, 8
      %s248 = scalar_lea.vmem %s5, %s247
      %s249 = smul.u32 32, %s16
      %v251 = vld [vmem:[%s236] sm:$0xf]
      %v252 = vld [vmem:[%s236 + $0x4] sm:$0xf]
      %v253 = vld [vmem:[%s236 + $0x8] sm:$0xf]
      %v254 = vld [vmem:[%s236 + $0xc] sm:$0xf]
      %v255 = vld [vmem:[%s236 + $0x10] sm:$0xf]
      %v256 = vld [vmem:[%s236 + $0x14] sm:$0xf]
      %v257 = vld [vmem:[%s236 + $0x18] sm:$0xf]
      %v258 = vld [vmem:[%s236 + $0x1c] sm:$0xf]
      %v259 = vld [vmem:[%s236 + $0x20] sm:$0xf]
      %v260 = vld [vmem:[%s236 + $0x24] sm:$0xf]
      %v261 = vld [vmem:[%s236 + $0x28] sm:$0xf]
      %v262 = vld [vmem:[%s236 + $0x2c] sm:$0xf]
      %v263 = vld [vmem:[%s236 + $0x30] sm:$0xf]
      %v264 = vld [vmem:[%s236 + $0x34] sm:$0xf]
      %v265 = vld [vmem:[%s236 + $0x38] sm:$0xf]
      %v266 = vld [vmem:[%s236 + $0x3c] sm:$0xf]
      %v267 = vld [vmem:[%s236 + $0x40] sm:$0xf]
      %v268 = vld [vmem:[%s236 + $0x44] sm:$0xf]
      %v269 = vld [vmem:[%s236 + $0x48] sm:$0xf]
      %v270 = vld [vmem:[%s236 + $0x4c] sm:$0xf]
      %v271 = vld [vmem:[%s236 + $0x50] sm:$0xf]
      %v272 = vld [vmem:[%s236 + $0x54] sm:$0xf]
      %v273 = vld [vmem:[%s236 + $0x58] sm:$0xf]
      %v274 = vld [vmem:[%s236 + $0x5c] sm:$0xf]
      %v275 = vld [vmem:[%s236 + $0x60] sm:$0xf]
      %v276 = vld [vmem:[%s236 + $0x64] sm:$0xf]
      %v277 = vld [vmem:[%s236 + $0x68] sm:$0xf]
      %v278 = vld [vmem:[%s236 + $0x6c] sm:$0xf]
      %v279 = vld [vmem:[%s236 + $0x70] sm:$0xf]
      %v280 = vld [vmem:[%s236 + $0x74] sm:$0xf]
      %v281 = vld [vmem:[%s236 + $0x78] sm:$0xf]
      %v282 = vld [vmem:[%s236 + $0x7c] sm:$0xf]
      %v283 = vld [vmem:[%s1] sm:$0xf]
      %v284 = vld [vmem:[%s1 + $0x4] sm:$0xf]
      %v285 = vld [vmem:[%s1 + $0x8] sm:$0xf]
      %v286 = vld [vmem:[%s1 + $0xc] sm:$0xf]
      %v319 = vunpack.c.l.b16 %v251
      %v320 = vunpack.c.l.b16 %v252
      %v321 = vunpack.c.l.b16 %v253
      %v322 = vunpack.c.l.b16 %v254
      %v323 = vunpack.c.l.b16 %v255
      %v324 = vunpack.c.l.b16 %v256
      %v325 = vunpack.c.l.b16 %v257
      %v326 = vunpack.c.l.b16 %v258
      %v327 = vunpack.c.l.b16 %v259
      %v328 = vunpack.c.l.b16 %v260
      %v329 = vunpack.c.l.b16 %v261
      %v330 = vunpack.c.l.b16 %v262
      %v331 = vunpack.c.l.b16 %v263
      %v332 = vunpack.c.l.b16 %v264
      %v333 = vunpack.c.l.b16 %v265
      %v334 = vunpack.c.l.b16 %v266
      %v335 = vunpack.c.l.b16 %v267
      %v336 = vunpack.c.l.b16 %v268
      %v337 = vunpack.c.l.b16 %v269
      %v338 = vunpack.c.l.b16 %v270
      %v339 = vunpack.c.l.b16 %v271
      %v340 = vunpack.c.l.b16 %v272
      %v341 = vunpack.c.l.b16 %v273
      %v342 = vunpack.c.l.b16 %v274
      %v343 = vunpack.c.l.b16 %v275
      %v344 = vunpack.c.l.b16 %v276
      %v345 = vunpack.c.l.b16 %v277
      %v346 = vunpack.c.l.b16 %v278
      %v347 = vunpack.c.l.b16 %v279
      %v348 = vunpack.c.l.b16 %v280
      %v349 = vunpack.c.l.b16 %v281
      %v350 = vunpack.c.l.b16 %v282
      %v351 = vpack.c.b16 %v320, %v319
      %v352 = vpack.c.b16 %v322, %v321
      %v353 = vpack.c.b16 %v324, %v323
      %v354 = vpack.c.b16 %v326, %v325
      %v355 = vpack.c.b16 %v328, %v327
      %v356 = vpack.c.b16 %v330, %v329
      %v357 = vpack.c.b16 %v332, %v331
      %v358 = vpack.c.b16 %v334, %v333
      %v359 = vpack.c.b16 %v336, %v335
      %v360 = vpack.c.b16 %v338, %v337
      %v361 = vpack.c.b16 %v340, %v339
      %v362 = vpack.c.b16 %v342, %v341
      %v363 = vpack.c.b16 %v344, %v343
      %v364 = vpack.c.b16 %v346, %v345
      %v365 = vpack.c.b16 %v348, %v347
      %v366 = vpack.c.b16 %v350, %v349
      %v371 = vunpack.c.l.b16 %v283
      %v372 = vunpack.c.l.b16 %v284
      %v373 = vunpack.c.l.b16 %v285
      %v374 = vunpack.c.l.b16 %v286
      %v375 = vpack.c.b16 %v372, %v371
      %v376 = vpack.c.b16 %v374, %v373
      %vm379 = vcmask 261120
      %v381 = vsel %vm379, %v351, 0
      %v384 = vsel %vm379, %v352, 0
      %v387 = vsel %vm379, %v353, 0
      %v390 = vsel %vm379, %v354, 0
      %v393 = vsel %vm379, %v355, 0
      %v396 = vsel %vm379, %v356, 0
      %v399 = vsel %vm379, %v357, 0
      %v402 = vsel %vm379, %v358, 0
      %v405 = vsel %vm379, %v359, 0
      %v408 = vsel %vm379, %v360, 0
      %v411 = vsel %vm379, %v361, 0
      %v414 = vsel %vm379, %v362, 0
      %v417 = vsel %vm379, %v363, 0
      %v420 = vsel %vm379, %v364, 0
      %v423 = vsel %vm379, %v365, 0
      %v426 = vsel %vm379, %v366, 0
      %428 = vmatprep.subr.bf16.mxu0 0
      %429 = vmatpush1.bf16.msra.mxu0 0
      %430 = vmatprep.subr.bf16.mxu0 0
      %431 = vmatpush1.bf16.msra.mxu0 0
      %432 = vmatprep.subr.bf16.mxu0 0
      %433 = vmatpush1.bf16.msra.mxu0 0
      %434 = vmatprep.subr.bf16.mxu0 0
      %435 = vmatpush1.bf16.msra.mxu0 0
      %436 = vmatprep.subr.bf16.mxu0 0
      %437 = vmatpush1.bf16.msra.mxu0 0
      %438 = vmatprep.subr.bf16.mxu0 0
      %439 = vmatpush1.bf16.msra.mxu0 0
      %440 = vmatprep.subr.bf16.mxu0 0
      %441 = vmatpush1.bf16.msra.mxu0 %v376
      %442 = vmatprep.subr.bf16.mxu0 0
      %443 = vmatpush1.bf16.msra.mxu0 %v375
      %444 = vmatprep.subr.bf16.mxu0 0
      %445 = vmatpush2.bf16.msra.mxu0 0
      %446 = vmatprep.subr.bf16.mxu0 0
      %447 = vmatpush2.bf16.msra.mxu0 0
      %448 = vmatprep.subr.bf16.mxu0 0
      %449 = vmatpush2.bf16.msra.mxu0 0
      %450 = vmatprep.subr.bf16.mxu0 0
      %451 = vmatpush2.bf16.msra.mxu0 0
      %452 = vmatprep.subr.bf16.mxu0 0
      %453 = vmatpush2.bf16.msra.mxu0 0
      %454 = vmatprep.subr.bf16.mxu0 0
      %455 = vmatpush2.bf16.msra.mxu0 0
      %456 = vmatprep.subr.bf16.mxu0 0
      %457 = vmatpush2.bf16.msra.mxu0 0
      %458 = vmatprep.subr.bf16.mxu0 0
      %459 = vmatpush2.bf16.msra.mxu0 0
      %460 = vmatprep.mubr.bf16.mxu0 0
      %461 = vmatmul.mubr.bf16.gmra.mxu0 %v381
      %v462 = vpop.f32.mrf.mxu0
      %v463 = vadd.f32 0.0, %v462
      %v464 = vpop.f32.mrf.mxu0
      %v465 = vpop.f32.mrf.mxu0
      %v466 = vadd.f32 0.0, %v465
      %v467 = vpop.f32.mrf.mxu0
      %468 = vmatprep.mubr.bf16.mxu0 0
      %469 = vmatmul.mubr.bf16.gmra.mxu0 %v384
      %v470 = vpop.f32.mrf.mxu0
      %v471 = vadd.f32 0.0, %v470
      %v472 = vpop.f32.mrf.mxu0
      %v473 = vpop.f32.mrf.mxu0
      %v474 = vadd.f32 0.0, %v473
      %v475 = vpop.f32.mrf.mxu0
      %476 = vmatprep.mubr.bf16.mxu0 0
      %477 = vmatmul.mubr.bf16.gmra.mxu0 %v387
      %v478 = vpop.f32.mrf.mxu0
      %v479 = vadd.f32 0.0, %v478
      %v480 = vpop.f32.mrf.mxu0
      %v481 = vpop.f32.mrf.mxu0
      %v482 = vadd.f32 0.0, %v481
      %v483 = vpop.f32.mrf.mxu0
      %484 = vmatprep.mubr.bf16.mxu0 0
      %485 = vmatmul.mubr.bf16.gmra.mxu0 %v390
      %v486 = vpop.f32.mrf.mxu0
      %v487 = vadd.f32 0.0, %v486
      %v488 = vpop.f32.mrf.mxu0
      %v489 = vpop.f32.mrf.mxu0
      %v490 = vadd.f32 0.0, %v489
      %v491 = vpop.f32.mrf.mxu0
      %492 = vmatprep.mubr.bf16.mxu0 0
      %493 = vmatmul.mubr.bf16.gmra.mxu0 %v393
      %v494 = vpop.f32.mrf.mxu0
      %v495 = vadd.f32 0.0, %v494
      %v496 = vpop.f32.mrf.mxu0
      %v497 = vpop.f32.mrf.mxu0
      %v498 = vadd.f32 0.0, %v497
      %v499 = vpop.f32.mrf.mxu0
      %500 = vmatprep.mubr.bf16.mxu0 0
      %501 = vmatmul.mubr.bf16.gmra.mxu0 %v396
      %v502 = vpop.f32.mrf.mxu0
      %v503 = vadd.f32 0.0, %v502
      %v504 = vpop.f32.mrf.mxu0
      %v505 = vpop.f32.mrf.mxu0
      %v506 = vadd.f32 0.0, %v505
      %v507 = vpop.f32.mrf.mxu0
      %508 = vmatprep.mubr.bf16.mxu0 0
      %509 = vmatmul.mubr.bf16.gmra.mxu0 %v399
      %v510 = vpop.f32.mrf.mxu0
      %v511 = vadd.f32 0.0, %v510
      %v512 = vpop.f32.mrf.mxu0
      %v513 = vpop.f32.mrf.mxu0
      %v514 = vadd.f32 0.0, %v513
      %v515 = vpop.f32.mrf.mxu0
      %516 = vmatprep.mubr.bf16.mxu0 0
      %517 = vmatmul.mubr.bf16.gmra.mxu0 %v402
      %v518 = vpop.f32.mrf.mxu0
      %v519 = vadd.f32 0.0, %v518
      %v520 = vpop.f32.mrf.mxu0
      %v521 = vpop.f32.mrf.mxu0
      %v522 = vadd.f32 0.0, %v521
      %v523 = vpop.f32.mrf.mxu0
      %524 = vmatprep.mubr.bf16.mxu0 0
      %525 = vmatmul.mubr.bf16.gmra.mxu0 %v405
      %v526 = vpop.f32.mrf.mxu0
      %v527 = vadd.f32 0.0, %v526
      %v528 = vpop.f32.mrf.mxu0
      %v529 = vpop.f32.mrf.mxu0
      %v530 = vadd.f32 0.0, %v529
      %v531 = vpop.f32.mrf.mxu0
      %532 = vmatprep.mubr.bf16.mxu0 0
      %533 = vmatmul.mubr.bf16.gmra.mxu0 %v408
      %v534 = vpop.f32.mrf.mxu0
      %v535 = vadd.f32 0.0, %v534
      %v536 = vpop.f32.mrf.mxu0
      %v537 = vpop.f32.mrf.mxu0
      %v538 = vadd.f32 0.0, %v537
      %v539 = vpop.f32.mrf.mxu0
      %540 = vmatprep.mubr.bf16.mxu0 0
      %541 = vmatmul.mubr.bf16.gmra.mxu0 %v411
      %v542 = vpop.f32.mrf.mxu0
      %v543 = vadd.f32 0.0, %v542
      %v544 = vpop.f32.mrf.mxu0
      %v545 = vpop.f32.mrf.mxu0
      %v546 = vadd.f32 0.0, %v545
      %v547 = vpop.f32.mrf.mxu0
      %548 = vmatprep.mubr.bf16.mxu0 0
      %549 = vmatmul.mubr.bf16.gmra.mxu0 %v414
      %v550 = vpop.f32.mrf.mxu0
      %v551 = vadd.f32 0.0, %v550
      %v552 = vpop.f32.mrf.mxu0
      %v553 = vpop.f32.mrf.mxu0
      %v554 = vadd.f32 0.0, %v553
      %v555 = vpop.f32.mrf.mxu0
      %556 = vmatprep.mubr.bf16.mxu0 0
      %557 = vmatmul.mubr.bf16.gmra.mxu0 %v417
      %v558 = vpop.f32.mrf.mxu0
      %v559 = vadd.f32 0.0, %v558
      %v560 = vpop.f32.mrf.mxu0
      %v561 = vpop.f32.mrf.mxu0
      %v562 = vadd.f32 0.0, %v561
      %v563 = vpop.f32.mrf.mxu0
      %564 = vmatprep.mubr.bf16.mxu0 0
      %565 = vmatmul.mubr.bf16.gmra.mxu0 %v420
      %v566 = vpop.f32.mrf.mxu0
      %v567 = vadd.f32 0.0, %v566
      %v568 = vpop.f32.mrf.mxu0
      %v569 = vpop.f32.mrf.mxu0
      %v570 = vadd.f32 0.0, %v569
      %v571 = vpop.f32.mrf.mxu0
      %572 = vmatprep.mubr.bf16.mxu0 0
      %573 = vmatmul.mubr.bf16.gmra.mxu0 %v423
      %v574 = vpop.f32.mrf.mxu0
      %v575 = vadd.f32 0.0, %v574
      %v576 = vpop.f32.mrf.mxu0
      %v577 = vpop.f32.mrf.mxu0
      %v578 = vadd.f32 0.0, %v577
      %v579 = vpop.f32.mrf.mxu0
      %580 = vmatprep.mubr.bf16.mxu0 0
      %581 = vmatmul.mubr.bf16.gmra.mxu0 %v426
      %v582 = vpop.f32.mrf.mxu0
      %v583 = vadd.f32 0.0, %v582
      %v584 = vpop.f32.mrf.mxu0
      %v585 = vpop.f32.mrf.mxu0
      %v586 = vadd.f32 0.0, %v585
      %v587 = vpop.f32.mrf.mxu0
      %588 = vdwg.mxu0
      %v589 = vld [vmem:[%s2] sm:$0x1]
      %v591 = vlaneseq
      %v592 = vshrl.u32 %v591, 7
      %v593 = vsub.s32 0, %v592
      %v594 = vrot.slane %v589, %v593
      %v596 = vmul.f32 %v463, %v594
      %v597 = vmul.f32 %v466, %v594
      %v598 = vmul.f32 %v471, %v594
      %v599 = vmul.f32 %v474, %v594
      %v600 = vmul.f32 %v479, %v594
      %v601 = vmul.f32 %v482, %v594
      %v602 = vmul.f32 %v487, %v594
      %v603 = vmul.f32 %v490, %v594
      %v604 = vmul.f32 %v495, %v594
      %v605 = vmul.f32 %v498, %v594
      %v606 = vmul.f32 %v503, %v594
      %v607 = vmul.f32 %v506, %v594
      %v608 = vmul.f32 %v511, %v594
      %v609 = vmul.f32 %v514, %v594
      %v610 = vmul.f32 %v519, %v594
      %v611 = vmul.f32 %v522, %v594
      %v612 = vmul.f32 %v527, %v594
      %v613 = vmul.f32 %v530, %v594
      %v614 = vmul.f32 %v535, %v594
      %v615 = vmul.f32 %v538, %v594
      %v616 = vmul.f32 %v543, %v594
      %v617 = vmul.f32 %v546, %v594
      %v618 = vmul.f32 %v551, %v594
      %v619 = vmul.f32 %v554, %v594
      %v620 = vmul.f32 %v559, %v594
      %v621 = vmul.f32 %v562, %v594
      %v622 = vmul.f32 %v567, %v594
      %v623 = vmul.f32 %v570, %v594
      %v624 = vmul.f32 %v575, %v594
      %v625 = vmul.f32 %v578, %v594
      %v626 = vmul.f32 %v583, %v594
      %v627 = vmul.f32 %v586, %v594
      %v628 = vld [vmem:[%s3] sm:$0x1]
      %v630 = vlaneseq
      %v631 = vshrl.u32 %v630, 7
      %v632 = vsub.s32 0, %v631
      %v633 = vrot.slane %v628, %v632
      %v635 = vadd.f32 %v596, %v633
      %v636 = vadd.f32 %v597, %v633
      %v637 = vadd.f32 %v598, %v633
      %v638 = vadd.f32 %v599, %v633
      %v639 = vadd.f32 %v600, %v633
      %v640 = vadd.f32 %v601, %v633
      %v641 = vadd.f32 %v602, %v633
      %v642 = vadd.f32 %v603, %v633
      %v643 = vadd.f32 %v604, %v633
      %v644 = vadd.f32 %v605, %v633
      %v645 = vadd.f32 %v606, %v633
      %v646 = vadd.f32 %v607, %v633
      %v647 = vadd.f32 %v608, %v633
      %v648 = vadd.f32 %v609, %v633
      %v649 = vadd.f32 %v610, %v633
      %v650 = vadd.f32 %v611, %v633
      %v651 = vadd.f32 %v612, %v633
      %v652 = vadd.f32 %v613, %v633
      %v653 = vadd.f32 %v614, %v633
      %v654 = vadd.f32 %v615, %v633
      %v655 = vadd.f32 %v616, %v633
      %v656 = vadd.f32 %v617, %v633
      %v657 = vadd.f32 %v618, %v633
      %v658 = vadd.f32 %v619, %v633
      %v659 = vadd.f32 %v620, %v633
      %v660 = vadd.f32 %v621, %v633
      %v661 = vadd.f32 %v622, %v633
      %v662 = vadd.f32 %v623, %v633
      %v663 = vadd.f32 %v624, %v633
      %v664 = vadd.f32 %v625, %v633
      %v665 = vadd.f32 %v626, %v633
      %v666 = vadd.f32 %v627, %v633
      %v667 = vld [vmem:[%s242] sm:$0xff]
      %v668 = vld [vmem:[%s242 + $0x8] sm:$0xff]
      %v669 = vld [vmem:[%s242 + $0x10] sm:$0xff]
      %v670 = vld [vmem:[%s242 + $0x18] sm:$0xff]
      %v671 = vld [vmem:[%s242 + $0x20] sm:$0xff]
      %v672 = vld [vmem:[%s242 + $0x28] sm:$0xff]
      %v673 = vld [vmem:[%s242 + $0x30] sm:$0xff]
      %v674 = vld [vmem:[%s242 + $0x38] sm:$0xff]
      %v675 = vld [vmem:[%s242 + $0x40] sm:$0xff]
      %v676 = vld [vmem:[%s242 + $0x48] sm:$0xff]
      %v677 = vld [vmem:[%s242 + $0x50] sm:$0xff]
      %v678 = vld [vmem:[%s242 + $0x58] sm:$0xff]
      %v679 = vld [vmem:[%s242 + $0x60] sm:$0xff]
      %v680 = vld [vmem:[%s242 + $0x68] sm:$0xff]
      %v681 = vld [vmem:[%s242 + $0x70] sm:$0xff]
      %v682 = vld [vmem:[%s242 + $0x78] sm:$0xff]
      %v683 = vld [vmem:[%s242 + $0x80] sm:$0xff]
      %v684 = vld [vmem:[%s242 + $0x88] sm:$0xff]
      %v685 = vld [vmem:[%s242 + $0x90] sm:$0xff]
      %v686 = vld [vmem:[%s242 + $0x98] sm:$0xff]
      %v687 = vld [vmem:[%s242 + $0xa0] sm:$0xff]
      %v688 = vld [vmem:[%s242 + $0xa8] sm:$0xff]
      %v689 = vld [vmem:[%s242 + $0xb0] sm:$0xff]
      %v690 = vld [vmem:[%s242 + $0xb8] sm:$0xff]
      %v691 = vld [vmem:[%s242 + $0xc0] sm:$0xff]
      %v692 = vld [vmem:[%s242 + $0xc8] sm:$0xff]
      %v693 = vld [vmem:[%s242 + $0xd0] sm:$0xff]
      %v694 = vld [vmem:[%s242 + $0xd8] sm:$0xff]
      %v695 = vld [vmem:[%s242 + $0xe0] sm:$0xff]
      %v696 = vld [vmem:[%s242 + $0xe8] sm:$0xff]
      %v697 = vld [vmem:[%s242 + $0xf0] sm:$0xff]
      %v698 = vld [vmem:[%s242 + $0xf8] sm:$0xff]
      %v699 = vadd.f32 %v635, %v667
      %v700 = vadd.f32 %v636, %v668
      %v701 = vadd.f32 %v637, %v669
      %v702 = vadd.f32 %v638, %v670
      %v703 = vadd.f32 %v639, %v671
      %v704 = vadd.f32 %v640, %v672
      %v705 = vadd.f32 %v641, %v673
      %v706 = vadd.f32 %v642, %v674
      %v707 = vadd.f32 %v643, %v675
      %v708 = vadd.f32 %v644, %v676
      %v709 = vadd.f32 %v645, %v677
      %v710 = vadd.f32 %v646, %v678
      %v711 = vadd.f32 %v647, %v679
      %v712 = vadd.f32 %v648, %v680
      %v713 = vadd.f32 %v649, %v681
      %v714 = vadd.f32 %v650, %v682
      %v715 = vadd.f32 %v651, %v683
      %v716 = vadd.f32 %v652, %v684
      %v717 = vadd.f32 %v653, %v685
      %v718 = vadd.f32 %v654, %v686
      %v719 = vadd.f32 %v655, %v687
      %v720 = vadd.f32 %v656, %v688
      %v721 = vadd.f32 %v657, %v689
      %v722 = vadd.f32 %v658, %v690
      %v723 = vadd.f32 %v659, %v691
      %v724 = vadd.f32 %v660, %v692
      %v725 = vadd.f32 %v661, %v693
      %v726 = vadd.f32 %v662, %v694
      %v727 = vadd.f32 %v663, %v695
      %v728 = vadd.f32 %v664, %v696
      %v729 = vadd.f32 %v665, %v697
      %v730 = vadd.f32 %v666, %v698
      %vm731 = vcmask 64512
      %732 = vst.msk [vmem:[%s248] sm:$0xff] %vm731, %v699
      %733 = vst.msk [vmem:[%s248 + $0x8] sm:$0xff] %vm731, %v700
      %734 = vst.msk [vmem:[%s248 + $0x10] sm:$0xff] %vm731, %v701
      %735 = vst.msk [vmem:[%s248 + $0x18] sm:$0xff] %vm731, %v702
      %736 = vst.msk [vmem:[%s248 + $0x20] sm:$0xff] %vm731, %v703
      %737 = vst.msk [vmem:[%s248 + $0x28] sm:$0xff] %vm731, %v704
      %738 = vst.msk [vmem:[%s248 + $0x30] sm:$0xff] %vm731, %v705
      %739 = vst.msk [vmem:[%s248 + $0x38] sm:$0xff] %vm731, %v706
      %740 = vst.msk [vmem:[%s248 + $0x40] sm:$0xff] %vm731, %v707
      %741 = vst.msk [vmem:[%s248 + $0x48] sm:$0xff] %vm731, %v708
      %742 = vst.msk [vmem:[%s248 + $0x50] sm:$0xff] %vm731, %v709
      %743 = vst.msk [vmem:[%s248 + $0x58] sm:$0xff] %vm731, %v710
      %744 = vst.msk [vmem:[%s248 + $0x60] sm:$0xff] %vm731, %v711
      %745 = vst.msk [vmem:[%s248 + $0x68] sm:$0xff] %vm731, %v712
      %746 = vst.msk [vmem:[%s248 + $0x70] sm:$0xff] %vm731, %v713
      %747 = vst.msk [vmem:[%s248 + $0x78] sm:$0xff] %vm731, %v714
      %748 = vst.msk [vmem:[%s248 + $0x80] sm:$0xff] %vm731, %v715
      %749 = vst.msk [vmem:[%s248 + $0x88] sm:$0xff] %vm731, %v716
      %750 = vst.msk [vmem:[%s248 + $0x90] sm:$0xff] %vm731, %v717
      %751 = vst.msk [vmem:[%s248 + $0x98] sm:$0xff] %vm731, %v718
      %752 = vst.msk [vmem:[%s248 + $0xa0] sm:$0xff] %vm731, %v719
      %753 = vst.msk [vmem:[%s248 + $0xa8] sm:$0xff] %vm731, %v720
      %754 = vst.msk [vmem:[%s248 + $0xb0] sm:$0xff] %vm731, %v721
      %755 = vst.msk [vmem:[%s248 + $0xb8] sm:$0xff] %vm731, %v722
      %756 = vst.msk [vmem:[%s248 + $0xc0] sm:$0xff] %vm731, %v723
      %757 = vst.msk [vmem:[%s248 + $0xc8] sm:$0xff] %vm731, %v724
      %758 = vst.msk [vmem:[%s248 + $0xd0] sm:$0xff] %vm731, %v725
      %759 = vst.msk [vmem:[%s248 + $0xd8] sm:$0xff] %vm731, %v726
      %760 = vst.msk [vmem:[%s248 + $0xe0] sm:$0xff] %vm731, %v727
      %761 = vst.msk [vmem:[%s248 + $0xe8] sm:$0xff] %vm731, %v728
      %762 = vst.msk [vmem:[%s248 + $0xf0] sm:$0xff] %vm731, %v729
      %763 = vst.msk [vmem:[%s248 + $0xf8] sm:$0xff] %vm731, %v730
      %s764 = smul.u32 32, %s16
      %p765 = scmp.lt.s32.totalorder %s764, 63
      %s766 = scalar_select %p765, %s764, 63
      %s767 = smul.addr %s766, 8
      %s768 = scalar_lea.vmem %s5, %s767
      // Predicated region
      $region41: #{iv_block.5} parent=39 // pred_check
        %p769 = pneg %p149
      $region42: #{iv_block.5} parent=39 // pred_check_branch
        %771 = sbr.rel (%p769) target = $region44
      $region43: #{iv_block.5} parent=39 // pred_region
        %s772 = smul.u32 32, %s16
      $region44: #{iv_block.5} parent=39 // pred_fallthru
        _
    $region40: #{iv_block.5} parent=5 // pred_fallthru
      _
    %p773 = scmp.le.s32.totalorder 2, %s11
    // Predicated region
    $region45: #{iv_block.5} parent=5 // pred_check
      %p774 = pneg %p773
    $region46: #{iv_block.5} parent=5 // pred_check_branch
      %776 = sbr.rel (%p774) target = $region48
    $region47: #{iv_block.5} parent=5 // pred_region
      %s777 = ssub.s32 %s11, 2
      // Predicated region
      $region49: #{iv_block.5} parent=47 // pred_check
        %p778 = pneg %p155
      $region50: #{iv_block.5} parent=47 // pred_check_branch
        %780 = sbr.rel (%p778) target = $region52
      $region51: #{iv_block.5} parent=47 // pred_region
        %s781 = smul.u32 32, %s17
        %p782 = scmp.lt.s32.totalorder %s781, 63
        %s783 = scalar_select %p782, %s781, 63
        %s784 = smul.addr %s783, 8
        %s785 = scalar_lea.vmem %s5, %s784
      $region52: #{iv_block.5} parent=47 // pred_fallthru
        _
    $region48: #{iv_block.5} parent=5 // pred_fallthru
      _
  $region6: #{iv_block.5} parent=0 // loop_footer
    %s15 = sadd.s32 1, %s11
  $region7: #{iv_block.5} parent=0 // loop_footer_branch
    %10 = sbr.rel target = $region3
  $region8: #{iv_block.5} parent=0 // loop_exit
    _

// kernel: iv_block.4
$region0: #{iv_block.4}
  #allocation0 [shape = 'u32[]', space=smem, size = 0x4, offset = 0x4, fixed_abs, tag = 'smem constant byte address 0x4 - core index']
  #allocation1 [shape = 'u32[144,128]{1,0:T(1,128)}', space=vmem, size = 0x12000, scoped, tag = 'internal scratch']
  %s0 = inlined_call_operand.vmem [shape: bf16[2,18,18,32], index: 0, kind: input, shape index: {}]
  %s1 = inlined_call_operand.vmem [shape: f32[9,32], index: 1, kind: input, shape index: {}]
  %s2 = inlined_call_operand.vmem [shape: f32[1,32], index: 2, kind: input, shape index: {}]
  %s3 = inlined_call_operand.vmem [shape: f32[1,32], index: 3, kind: input, shape index: {}]
  %s4 = inlined_call_operand.vmem [shape: bf16[2,16,16,32], index: 4, kind: output, shape index: {}]
  %s5 = sld [smem:[#allocation0]]
  $region49: #{iv_block.4} parent=0
    _
  %s7 = ssub.s32 1, %s5
  %s8 = scalar_select 0, %s7, %s5
  loop: start=0, step=1, limit=4
  $region2: #{iv_block.4} parent=0 // loop_pre_header
    _
  $region3: #{iv_block.4} parent=0 // loop_header
    %s10 = sphi 0, %s14
    %p11 = scmp.ge.s32.totalorder %s10, 4
    %s20 = sphi 0, %s22
    %s23 = sphi 0, %s20
    %s24 = sphi 0, %s23
    %s40 = sphi 0, %s24
    %s44 = sphi 0, %s44
    %s46 = sphi 0, %s44
    %s47 = sphi 0, %s46
    %s61 = sphi 0, %s47
    %s65 = sphi 0, %s65
    %s67 = sphi 0, %s65
    %s68 = sphi 0, %s67
    %s82 = sphi 0, %s68
    %s86 = sphi 0, %s86
    %s88 = sphi 0, %s86
    %s89 = sphi 0, %s88
    %s103 = sphi 0, %s89
    %s109 = sphi 0, %s111
    %s112 = sphi 0, %s109
    %s113 = sphi 0, %s112
    %s129 = sphi 0, %s113
  $region4: #{iv_block.4} parent=0 // loop_header_branch
    %13 = sbr.rel (%p11) target = $region8
  $region5: #{iv_block.4} parent=0 // loop_body
    %s15 = ssub.s32 %s10, 1
    %s16 = ssub.s32 %s10, 2
    %s17 = sadd.s32 %s10, 1
    %s18 = ssub.s32 %s10, %s17
    %p19 = scmp.eq.s32.totalorder %s18, 0
    %s21 = sadd.s32 %s20, 1
    %s22 = scalar_select %p19, %s20, %s21
    %p25 = pneg %p19
    %p26 = scmp.eq.s32.totalorder %s10, 1
    %p27 = por %p25, %p26
    %p28 = scmp.ne.s32.totalorder %s20, %s23
    %p29 = scmp.eq.s32.totalorder %s10, 0
    %p30 = por %p28, %p29
    %p31 = scmp.ne.s32.totalorder %s20, %s23
    %p32 = scmp.eq.s32.totalorder %s15, 1
    %p33 = por %p31, %p32
    %p34 = scmp.ne.s32.totalorder %s23, %s24
    %p35 = scmp.eq.s32.totalorder %s15, 0
    %p36 = por %p34, %p35
    %p37 = scmp.ne.s32.totalorder %s23, %s24
    %p38 = scmp.eq.s32.totalorder %s16, 1
    %p39 = por %p37, %p38
    %p41 = scmp.ne.s32.totalorder %s24, %s40
    %p42 = scmp.eq.s32.totalorder %s16, 0
    %p43 = por %p41, %p42
    %s45 = sadd.s32 %s44, 1
    %p48 = scmp.eq.s32.totalorder %s10, 1
    %p49 = scmp.ne.s32.totalorder %s44, %s46
    %p50 = scmp.eq.s32.totalorder %s10, 0
    %p51 = por %p49, %p50
    %p52 = scmp.ne.s32.totalorder %s44, %s46
    %p53 = scmp.eq.s32.totalorder %s15, 1
    %p54 = por %p52, %p53
    %p55 = scmp.ne.s32.totalorder %s46, %s47
    %p56 = scmp.eq.s32.totalorder %s15, 0
    %p57 = por %p55, %p56
    %p58 = scmp.ne.s32.totalorder %s46, %s47
    %p59 = scmp.eq.s32.totalorder %s16, 1
    %p60 = por %p58, %p59
    %p62 = scmp.ne.s32.totalorder %s47, %s61
    %p63 = scmp.eq.s32.totalorder %s16, 0
    %p64 = por %p62, %p63
    %s66 = sadd.s32 %s65, 1
    %p69 = scmp.eq.s32.totalorder %s10, 1
    %p70 = scmp.ne.s32.totalorder %s65, %s67
    %p71 = scmp.eq.s32.totalorder %s10, 0
    %p72 = por %p70, %p71
    %p73 = scmp.ne.s32.totalorder %s65, %s67
    %p74 = scmp.eq.s32.totalorder %s15, 1
    %p75 = por %p73, %p74
    %p76 = scmp.ne.s32.totalorder %s67, %s68
    %p77 = scmp.eq.s32.totalorder %s15, 0
    %p78 = por %p76, %p77
    %p79 = scmp.ne.s32.totalorder %s67, %s68
    %p80 = scmp.eq.s32.totalorder %s16, 1
    %p81 = por %p79, %p80
    %p83 = scmp.ne.s32.totalorder %s68, %s82
    %p84 = scmp.eq.s32.totalorder %s16, 0
    %p85 = por %p83, %p84
    %s87 = sadd.s32 %s86, 1
    %p90 = scmp.eq.s32.totalorder %s10, 1
    %p91 = scmp.ne.s32.totalorder %s86, %s88
    %p92 = scmp.eq.s32.totalorder %s10, 0
    %p93 = por %p91, %p92
    %p94 = scmp.ne.s32.totalorder %s86, %s88
    %p95 = scmp.eq.s32.totalorder %s15, 1
    %p96 = por %p94, %p95
    %p97 = scmp.ne.s32.totalorder %s88, %s89
    %p98 = scmp.eq.s32.totalorder %s15, 0
    %p99 = por %p97, %p98
    %p100 = scmp.ne.s32.totalorder %s88, %s89
    %p101 = scmp.eq.s32.totalorder %s16, 1
    %p102 = por %p100, %p101
    %p104 = scmp.ne.s32.totalorder %s89, %s103
    %p105 = scmp.eq.s32.totalorder %s16, 0
    %p106 = por %p104, %p105
    %s107 = ssub.s32 %s10, %s17
    %p108 = scmp.eq.s32.totalorder %s107, 0
    %s110 = sadd.s32 %s109, 1
    %s111 = scalar_select %p108, %s109, %s110
    %p114 = pneg %p108
    %p115 = scmp.eq.s32.totalorder %s10, 1
    %p116 = por %p114, %p115
    %p117 = scmp.ne.s32.totalorder %s109, %s112
    %p118 = scmp.eq.s32.totalorder %s10, 0
    %p119 = por %p117, %p118
    %p120 = scmp.ne.s32.totalorder %s109, %s112
    %p121 = scmp.eq.s32.totalorder %s15, 1
    %p122 = por %p120, %p121
    %p123 = scmp.ne.s32.totalorder %s112, %s113
    %p124 = scmp.eq.s32.totalorder %s15, 0
    %p125 = por %p123, %p124
    %p126 = scmp.ne.s32.totalorder %s112, %s113
    %p127 = scmp.eq.s32.totalorder %s16, 1
    %p128 = por %p126, %p127
    %p130 = scmp.ne.s32.totalorder %s113, %s129
    %p131 = scmp.eq.s32.totalorder %s16, 0
    %p132 = por %p130, %p131
    %p133 = scmp.le.s32.totalorder 1, %s10
    %p134 = scmp.lt.s32.totalorder %s10, 3
    %p135 = pnand %p133, %p134
    %p136 = pneg %p135
    // Predicated region
    $region9: #{iv_block.4} parent=5 // pred_check
      _
    $region10: #{iv_block.4} parent=5 // pred_check_branch
      %138 = sbr.rel (%p135) target = $region12
    $region11: #{iv_block.4} parent=5 // pred_region
      %s139 = ssub.s32 %s10, 1
      // Predicated region
      $region13: #{iv_block.4} parent=11 // pred_check
        %p140 = pneg %p57
      $region14: #{iv_block.4} parent=11 // pred_check_branch
        %142 = sbr.rel (%p140) target = $region16
      $region15: #{iv_block.4} parent=11 // pred_region
        _
      $region16: #{iv_block.4} parent=11 // pred_fallthru
        _
      // Predicated region
      $region17: #{iv_block.4} parent=11 // pred_check
        %p143 = pneg %p78
      $region18: #{iv_block.4} parent=11 // pred_check_branch
        %145 = sbr.rel (%p143) target = $region20
      $region19: #{iv_block.4} parent=11 // pred_region
        _
      $region20: #{iv_block.4} parent=11 // pred_fallthru
        _
      // Predicated region
      $region21: #{iv_block.4} parent=11 // pred_check
        %p146 = pneg %p99
      $region22: #{iv_block.4} parent=11 // pred_check_branch
        %148 = sbr.rel (%p146) target = $region24
      $region23: #{iv_block.4} parent=11 // pred_region
        _
      $region24: #{iv_block.4} parent=11 // pred_fallthru
        _
    $region12: #{iv_block.4} parent=5 // pred_fallthru
      _
    %p149 = scmp.lt.s32.totalorder %s10, 2
    // Predicated region
    $region25: #{iv_block.4} parent=5 // pred_check
      %p150 = pneg %p149
    $region26: #{iv_block.4} parent=5 // pred_check_branch
      %152 = sbr.rel (%p150) target = $region28
    $region27: #{iv_block.4} parent=5 // pred_region
      // Predicated region
      $region29: #{iv_block.4} parent=27 // pred_check
        %p153 = pneg %p30
      $region30: #{iv_block.4} parent=27 // pred_check_branch
        %155 = sbr.rel (%p153) target = $region32
      $region31: #{iv_block.4} parent=27 // pred_region
        %p156 = scmp.lt.s32.totalorder %s10, 1
        %s157 = scalar_select %p156, %s10, 1
        %s158 = smul.addr %s157, 54
        %s159 = smul.addr %s158, 4
        %s160 = scalar_lea.vmem %s0, %s159
      $region32: #{iv_block.4} parent=27 // pred_fallthru
        _
    $region28: #{iv_block.4} parent=5 // pred_fallthru
      _
    %p161 = scmp.le.s32.totalorder 1, %s10
    %p162 = scmp.lt.s32.totalorder %s10, 3
    %p163 = pnand %p161, %p162
    %p164 = pneg %p163
    // Predicated region
    $region33: #{iv_block.4} parent=5 // pred_check
      _
    $region34: #{iv_block.4} parent=5 // pred_check_branch
      %166 = sbr.rel (%p163) target = $region36
    $region35: #{iv_block.4} parent=5 // pred_region
      %s167 = ssub.s32 %s10, 1
      %p168 = scmp.lt.s32.totalorder %s15, 1
      %s169 = scalar_select %p168, %s15, 1
      %s170 = smul.addr %s169, 54
      %s171 = smul.addr %s170, 4
      %s172 = scalar_lea.vmem %s0, %s171
      %p173 = pneg %p36
      %p174 = pneg %p33
      %p175 = pneg %p57
      %p176 = pneg %p54
      %p177 = pneg %p78
      %p178 = pneg %p75
      %p179 = pneg %p99
      %p180 = pneg %p96
      %p181 = pneg %p125
      %p182 = pneg %p122
      %p183 = scmp.lt.s32.totalorder %s15, 1
      %s184 = scalar_select %p183, %s15, 1
      %s185 = smul.addr %s184, 32
      %s186 = smul.addr %s185, 4
      %s187 = scalar_lea.vmem %s4, %s186
      %p188 = scmp.lt.s32.totalorder %s15, 1
      %s189 = scalar_select %p188, %s15, 1
      %s190 = smul.addr %s189, 54
      %s191 = smul.addr %s190, 4
      %s192 = scalar_lea.vmem %s0, %s191
      %p193 = scmp.lt.s32.totalorder %s15, 1
      %s194 = scalar_select %p193, %s15, 1
      %s195 = smul.addr %s194, 32
      %s196 = smul.addr %s195, 4
      %s197 = scalar_lea.vmem %s4, %s196
      %v198 = vld [vmem:[%s192] sm:$0xf]
      %v199 = vld [vmem:[%s192 + $0x4] sm:$0xf]
      %v200 = vld [vmem:[%s192 + $0x8] sm:$0x1]
      %v201 = vld [vmem:[%s192 + $0xc] sm:$0xf]
      %v202 = vld [vmem:[%s192 + $0x10] sm:$0xf]
      %v203 = vld [vmem:[%s192 + $0x14] sm:$0x1]
      %v204 = vld [vmem:[%s192 + $0x18] sm:$0xf]
      %v205 = vld [vmem:[%s192 + $0x1c] sm:$0xf]
      %v206 = vld [vmem:[%s192 + $0x20] sm:$0x1]
      %v207 = vld [vmem:[%s192 + $0x24] sm:$0xf]
      %v208 = vld [vmem:[%s192 + $0x28] sm:$0xf]
      %v209 = vld [vmem:[%s192 + $0x2c] sm:$0x1]
      %v210 = vld [vmem:[%s192 + $0x30] sm:$0xf]
      %v211 = vld [vmem:[%s192 + $0x34] sm:$0xf]
      %v212 = vld [vmem:[%s192 + $0x38] sm:$0x1]
      %v213 = vld [vmem:[%s192 + $0x3c] sm:$0xf]
      %v214 = vld [vmem:[%s192 + $0x40] sm:$0xf]
      %v215 = vld [vmem:[%s192 + $0x44] sm:$0x1]
      %v216 = vld [vmem:[%s192 + $0x48] sm:$0xf]
      %v217 = vld [vmem:[%s192 + $0x4c] sm:$0xf]
      %v218 = vld [vmem:[%s192 + $0x50] sm:$0x1]
      %v219 = vld [vmem:[%s192 + $0x54] sm:$0xf]
      %v220 = vld [vmem:[%s192 + $0x58] sm:$0xf]
      %v221 = vld [vmem:[%s192 + $0x5c] sm:$0x1]
      %v222 = vld [vmem:[%s192 + $0x60] sm:$0xf]
      %v223 = vld [vmem:[%s192 + $0x64] sm:$0xf]
      %v224 = vld [vmem:[%s192 + $0x68] sm:$0x1]
      %v225 = vld [vmem:[%s192 + $0x6c] sm:$0xf]
      %v226 = vld [vmem:[%s192 + $0x70] sm:$0xf]
      %v227 = vld [vmem:[%s192 + $0x74] sm:$0x1]
      %v228 = vld [vmem:[%s192 + $0x78] sm:$0xf]
      %v229 = vld [vmem:[%s192 + $0x7c] sm:$0xf]
      %v230 = vld [vmem:[%s192 + $0x80] sm:$0x1]
      %v231 = vld [vmem:[%s192 + $0x84] sm:$0xf]
      %v232 = vld [vmem:[%s192 + $0x88] sm:$0xf]
      %v233 = vld [vmem:[%s192 + $0x8c] sm:$0x1]
      %v234 = vld [vmem:[%s192 + $0x90] sm:$0xf]
      %v235 = vld [vmem:[%s192 + $0x94] sm:$0xf]
      %v236 = vld [vmem:[%s192 + $0x98] sm:$0x1]
      %v237 = vld [vmem:[%s192 + $0x9c] sm:$0xf]
      %v238 = vld [vmem:[%s192 + $0xa0] sm:$0xf]
      %v239 = vld [vmem:[%s192 + $0xa4] sm:$0x1]
      %v240 = vld [vmem:[%s192 + $0xa8] sm:$0xf]
      %v241 = vld [vmem:[%s192 + $0xac] sm:$0xf]
      %v242 = vld [vmem:[%s192 + $0xb0] sm:$0x1]
      %v243 = vld [vmem:[%s192 + $0xb4] sm:$0xf]
      %v244 = vld [vmem:[%s192 + $0xb8] sm:$0xf]
      %v245 = vld [vmem:[%s192 + $0xbc] sm:$0x1]
      %v246 = vld [vmem:[%s192 + $0xc0] sm:$0xf]
      %v247 = vld [vmem:[%s192 + $0xc4] sm:$0xf]
      %v248 = vld [vmem:[%s192 + $0xc8] sm:$0x1]
      %v249 = vld [vmem:[%s192 + $0xcc] sm:$0xf]
      %v250 = vld [vmem:[%s192 + $0xd0] sm:$0xf]
      %v251 = vld [vmem:[%s192 + $0xd4] sm:$0x1]
      %v252 = vunpack.c.l.bf16 %v198
      %v253 = vunpack.c.l.bf16 %v199
      %v254 = vunpack.c.l.bf16 %v200
      %v255 = vunpack.c.l.bf16 %v201
      %v256 = vunpack.c.l.bf16 %v202
      %v257 = vunpack.c.l.bf16 %v203
      %v258 = vunpack.c.l.bf16 %v204
      %v259 = vunpack.c.l.bf16 %v205
      %v260 = vunpack.c.l.bf16 %v206
      %v261 = vunpack.c.l.bf16 %v207
      %v262 = vunpack.c.l.bf16 %v208
      %v263 = vunpack.c.l.bf16 %v209
      %v264 = vunpack.c.l.bf16 %v210
      %v265 = vunpack.c.l.bf16 %v211
      %v266 = vunpack.c.l.bf16 %v212
      %v267 = vunpack.c.l.bf16 %v213
      %v268 = vunpack.c.l.bf16 %v214
      %v269 = vunpack.c.l.bf16 %v215
      %v270 = vunpack.c.l.bf16 %v216
      %v271 = vunpack.c.l.bf16 %v217
      %v272 = vunpack.c.l.bf16 %v218
      %v273 = vunpack.c.l.bf16 %v219
      %v274 = vunpack.c.l.bf16 %v220
      %v275 = vunpack.c.l.bf16 %v221
      %v276 = vunpack.c.l.bf16 %v222
      %v277 = vunpack.c.l.bf16 %v223
      %v278 = vunpack.c.l.bf16 %v224
      %v279 = vunpack.c.l.bf16 %v225
      %v280 = vunpack.c.l.bf16 %v226
      %v281 = vunpack.c.l.bf16 %v227
      %v282 = vunpack.c.l.bf16 %v228
      %v283 = vunpack.c.l.bf16 %v229
      %v284 = vunpack.c.l.bf16 %v230
      %v285 = vunpack.c.l.bf16 %v231
      %v286 = vunpack.c.l.bf16 %v232
      %v287 = vunpack.c.l.bf16 %v233
      %v288 = vunpack.c.l.bf16 %v234
      %v289 = vunpack.c.l.bf16 %v235
      %v290 = vunpack.c.l.bf16 %v236
      %v291 = vunpack.c.l.bf16 %v237
      %v292 = vunpack.c.l.bf16 %v238
      %v293 = vunpack.c.l.bf16 %v239
      %v294 = vunpack.c.l.bf16 %v240
      %v295 = vunpack.c.l.bf16 %v241
      %v296 = vunpack.c.l.bf16 %v242
      %v297 = vunpack.c.l.bf16 %v243
      %v298 = vunpack.c.l.bf16 %v244
      %v299 = vunpack.c.l.bf16 %v245
      %v300 = vunpack.c.l.bf16 %v246
      %v301 = vunpack.c.l.bf16 %v247
      %v302 = vunpack.c.l.bf16 %v248
      %v303 = vunpack.c.l.bf16 %v249
      %v304 = vunpack.c.l.bf16 %v250
      %v305 = vunpack.c.l.bf16 %v251
      %v306 = vld [vmem:[%s1] sm:$0x1]
      %v307 = vlaneseq
      %v308 = vshrl.u32 %v307, 7
      %v309 = vsub.s32 0, %v308
      %v310 = vrot.slane %v306, %v309
      %v311 = vmul.f32 %v252, %v310
      %v312 = vmul.f32 %v253, %v310
      %v313 = vmul.f32 %v255, %v310
      %v314 = vmul.f32 %v256, %v310
      %v315 = vmul.f32 %v258, %v310
      %v316 = vmul.f32 %v259, %v310
      %v317 = vmul.f32 %v261, %v310
      %v318 = vmul.f32 %v262, %v310
      %v319 = vmul.f32 %v264, %v310
      %v320 = vmul.f32 %v265, %v310
      %v321 = vmul.f32 %v267, %v310
      %v322 = vmul.f32 %v268, %v310
      %v323 = vmul.f32 %v270, %v310
      %v324 = vmul.f32 %v271, %v310
      %v325 = vmul.f32 %v273, %v310
      %v326 = vmul.f32 %v274, %v310
      %v327 = vmul.f32 %v276, %v310
      %v328 = vmul.f32 %v277, %v310
      %v329 = vmul.f32 %v279, %v310
      %v330 = vmul.f32 %v280, %v310
      %v331 = vmul.f32 %v282, %v310
      %v332 = vmul.f32 %v283, %v310
      %v333 = vmul.f32 %v285, %v310
      %v334 = vmul.f32 %v286, %v310
      %v335 = vmul.f32 %v288, %v310
      %v336 = vmul.f32 %v289, %v310
      %v337 = vmul.f32 %v291, %v310
      %v338 = vmul.f32 %v292, %v310
      %v339 = vmul.f32 %v294, %v310
      %v340 = vmul.f32 %v295, %v310
      %v341 = vmul.f32 %v297, %v310
      %v342 = vmul.f32 %v298, %v310
      %v343 = vadd.f32 %v311, 0.0
      %v344 = vadd.f32 %v312, 0.0
      %v345 = vadd.f32 %v313, 0.0
      %v346 = vadd.f32 %v314, 0.0
      %v347 = vadd.f32 %v315, 0.0
      %v348 = vadd.f32 %v316, 0.0
      %v349 = vadd.f32 %v317, 0.0
      %v350 = vadd.f32 %v318, 0.0
      %v351 = vadd.f32 %v319, 0.0
      %v352 = vadd.f32 %v320, 0.0
      %v353 = vadd.f32 %v321, 0.0
      %v354 = vadd.f32 %v322, 0.0
      %v355 = vadd.f32 %v323, 0.0
      %v356 = vadd.f32 %v324, 0.0
      %v357 = vadd.f32 %v325, 0.0
      %v358 = vadd.f32 %v326, 0.0
      %v359 = vadd.f32 %v327, 0.0
      %v360 = vadd.f32 %v328, 0.0
      %v361 = vadd.f32 %v329, 0.0
      %v362 = vadd.f32 %v330, 0.0
      %v363 = vadd.f32 %v331, 0.0
      %v364 = vadd.f32 %v332, 0.0
      %v365 = vadd.f32 %v333, 0.0
      %v366 = vadd.f32 %v334, 0.0
      %v367 = vadd.f32 %v335, 0.0
      %v368 = vadd.f32 %v336, 0.0
      %v369 = vadd.f32 %v337, 0.0
      %v370 = vadd.f32 %v338, 0.0
      %v371 = vadd.f32 %v339, 0.0
      %v372 = vadd.f32 %v340, 0.0
      %v373 = vadd.f32 %v341, 0.0
      %v374 = vadd.f32 %v342, 0.0
      %v375 = vld [vmem:[%s1 + $0x1] sm:$0x1]
      %v376 = vlaneseq
      %v377 = vshrl.u32 %v376, 7
      %v378 = vsub.s32 0, %v377
      %v379 = vrot.slane %v375, %v378
      %v380 = vmul.f32 %v252, %v379
      %v381 = vmul.f32 %v253, %v379
      %v382 = vmul.f32 %v254, %v379
      %v383 = vmul.f32 %v255, %v379
      %v384 = vmul.f32 %v256, %v379
      %v385 = vmul.f32 %v257, %v379
      %v386 = vmul.f32 %v258, %v379
      %v387 = vmul.f32 %v259, %v379
      %v388 = vmul.f32 %v260, %v379
      %v389 = vmul.f32 %v261, %v379
      %v390 = vmul.f32 %v262, %v379
      %v391 = vmul.f32 %v263, %v379
      %v392 = vmul.f32 %v264, %v379
      %v393 = vmul.f32 %v265, %v379
      %v394 = vmul.f32 %v266, %v379
      %v395 = vmul.f32 %v267, %v379
      %v396 = vmul.f32 %v268, %v379
      %v397 = vmul.f32 %v269, %v379
      %v398 = vmul.f32 %v270, %v379
      %v399 = vmul.f32 %v271, %v379
      %v400 = vmul.f32 %v272, %v379
      %v401 = vmul.f32 %v273, %v379
      %v402 = vmul.f32 %v274, %v379
      %v403 = vmul.f32 %v275, %v379
      %v404 = vmul.f32 %v276, %v379
      %v405 = vmul.f32 %v277, %v379
      %v406 = vmul.f32 %v278, %v379
      %v407 = vmul.f32 %v279, %v379
      %v408 = vmul.f32 %v280, %v379
      %v409 = vmul.f32 %v281, %v379
      %v410 = vmul.f32 %v282, %v379
      %v411 = vmul.f32 %v283, %v379
      %v412 = vmul.f32 %v284, %v379
      %v413 = vmul.f32 %v285, %v379
      %v414 = vmul.f32 %v286, %v379
      %v415 = vmul.f32 %v287, %v379
      %v416 = vmul.f32 %v288, %v379
      %v417 = vmul.f32 %v289, %v379
      %v418 = vmul.f32 %v290, %v379
      %v419 = vmul.f32 %v291, %v379
      %v420 = vmul.f32 %v292, %v379
      %v421 = vmul.f32 %v293, %v379
      %v422 = vmul.f32 %v294, %v379
      %v423 = vmul.f32 %v295, %v379
      %v424 = vmul.f32 %v296, %v379
      %v425 = vmul.f32 %v297, %v379
      %v426 = vmul.f32 %v298, %v379
      %v427 = vmul.f32 %v299, %v379
      %vm476 = vcmask 1046528
      %v477 = vrot.slane %v380, 1
      %v478 = vrot.slane %v381, 1
      %v479 = vsel %vm476, %v477, %v478
      %v480 = vrot.slane %v382, 1
      %v481 = vsel %vm476, %v478, %v480
      %v482 = vrot.slane %v383, 1
      %v483 = vrot.slane %v384, 1
      %v484 = vsel %vm476, %v482, %v483
      %v485 = vrot.slane %v385, 1
      %v486 = vsel %vm476, %v483, %v485
      %v487 = vrot.slane %v386, 1
      %v488 = vrot.slane %v387, 1
      %v489 = vsel %vm476, %v487, %v488
      %v490 = vrot.slane %v388, 1
      %v491 = vsel %vm476, %v488, %v490
      %v492 = vrot.slane %v389, 1
      %v493 = vrot.slane %v390, 1
      %v494 = vsel %vm476, %v492, %v493
      %v495 = vrot.slane %v391, 1
      %v496 = vsel %vm476, %v493, %v495
      %v497 = vrot.slane %v392, 1
      %v498 = vrot.slane %v393, 1
      %v499 = vsel %vm476, %v497, %v498
      %v500 = vrot.slane %v394, 1
      %v501 = vsel %vm476, %v498, %v500
      %v502 = vrot.slane %v395, 1
      %v503 = vrot.slane %v396, 1
      %v504 = vsel %vm476, %v502, %v503
      %v505 = vrot.slane %v397, 1
      %v506 = vsel %vm476, %v503, %v505
      %v507 = vrot.slane %v398, 1
      %v508 = vrot.slane %v399, 1
      %v509 = vsel %vm476, %v507, %v508
      %v510 = vrot.slane %v400, 1
      %v511 = vsel %vm476, %v508, %v510
      %v512 = vrot.slane %v401, 1
      %v513 = vrot.slane %v402, 1
      %v514 = vsel %vm476, %v512, %v513
      %v515 = vrot.slane %v403, 1
      %v516 = vsel %vm476, %v513, %v515
      %v517 = vrot.slane %v404, 1
      %v518 = vrot.slane %v405, 1
      %v519 = vsel %vm476, %v517, %v518
      %v520 = vrot.slane %v406, 1
      %v521 = vsel %vm476, %v518, %v520
      %v522 = vrot.slane %v407, 1
      %v523 = vrot.slane %v408, 1
      %v524 = vsel %vm476, %v522, %v523
      %v525 = vrot.slane %v409, 1
      %v526 = vsel %vm476, %v523, %v525
      %v527 = vrot.slane %v410, 1
      %v528 = vrot.slane %v411, 1
      %v529 = vsel %vm476, %v527, %v528
      %v530 = vrot.slane %v412, 1
      %v531 = vsel %vm476, %v528, %v530
      %v532 = vrot.slane %v413, 1
      %v533 = vrot.slane %v414, 1
      %v534 = vsel %vm476, %v532, %v533
      %v535 = vrot.slane %v415, 1
      %v536 = vsel %vm476, %v533, %v535
      %v537 = vrot.slane %v416, 1
      %v538 = vrot.slane %v417, 1
      %v539 = vsel %vm476, %v537, %v538
      %v540 = vrot.slane %v418, 1
      %v541 = vsel %vm476, %v538, %v540
      %v542 = vrot.slane %v419, 1
      %v543 = vrot.slane %v420, 1
      %v544 = vsel %vm476, %v542, %v543
      %v545 = vrot.slane %v421, 1
      %v546 = vsel %vm476, %v543, %v545
      %v547 = vrot.slane %v422, 1
      %v548 = vrot.slane %v423, 1
      %v549 = vsel %vm476, %v547, %v548
      %v550 = vrot.slane %v424, 1
      %v551 = vsel %vm476, %v548, %v550
      %v552 = vrot.slane %v425, 1
      %v553 = vrot.slane %v426, 1
      %v554 = vsel %vm476, %v552, %v553
      %v555 = vrot.slane %v427, 1
      %v556 = vsel %vm476, %v553, %v555
      %v589 = vadd.f32 %v343, %v479
      %v590 = vadd.f32 %v344, %v481
      %v591 = vadd.f32 %v345, %v484
      %v592 = vadd.f32 %v346, %v486
      %v593 = vadd.f32 %v347, %v489
      %v594 = vadd.f32 %v348, %v491
      %v595 = vadd.f32 %v349, %v494
      %v596 = vadd.f32 %v350, %v496
      %v597 = vadd.f32 %v351, %v499
      %v598 = vadd.f32 %v352, %v501
      %v599 = vadd.f32 %v353, %v504
      %v600 = vadd.f32 %v354, %v506
      %v601 = vadd.f32 %v355, %v509
      %v602 = vadd.f32 %v356, %v511
      %v603 = vadd.f32 %v357, %v514
      %v604 = vadd.f32 %v358, %v516
      %v605 = vadd.f32 %v359, %v519
      %v606 = vadd.f32 %v360, %v521
      %v607 = vadd.f32 %v361, %v524
      %v608 = vadd.f32 %v362, %v526
      %v609 = vadd.f32 %v363, %v529
      %v610 = vadd.f32 %v364, %v531
      %v611 = vadd.f32 %v365, %v534
      %v612 = vadd.f32 %v366, %v536
      %v613 = vadd.f32 %v367, %v539
      %v614 = vadd.f32 %v368, %v541
      %v615 = vadd.f32 %v369, %v544
      %v616 = vadd.f32 %v370, %v546
      %v617 = vadd.f32 %v371, %v549
      %v618 = vadd.f32 %v372, %v551
      %v619 = vadd.f32 %v373, %v554
      %v620 = vadd.f32 %v374, %v556
      %v621 = vld [vmem:[%s1 + $0x2] sm:$0x1]
      %v622 = vlaneseq
      %v623 = vshrl.u32 %v622, 7
      %v624 = vsub.s32 0, %v623
      %v625 = vrot.slane %v621, %v624
      %v626 = vmul.f32 %v252, %v625
      %v627 = vmul.f32 %v253, %v625
      %v628 = vmul.f32 %v254, %v625
      %v629 = vmul.f32 %v255, %v625
      %v630 = vmul.f32 %v256, %v625
      %v631 = vmul.f32 %v257, %v625
      %v632 = vmul.f32 %v258, %v625
      %v633 = vmul.f32 %v259, %v625
      %v634 = vmul.f32 %v260, %v625
      %v635 = vmul.f32 %v261, %v625
      %v636 = vmul.f32 %v262, %v625
      %v637 = vmul.f32 %v263, %v625
      %v638 = vmul.f32 %v264, %v625
      %v639 = vmul.f32 %v265, %v625
      %v640 = vmul.f32 %v266, %v625
      %v641 = vmul.f32 %v267, %v625
      %v642 = vmul.f32 %v268, %v625
      %v643 = vmul.f32 %v269, %v625
      %v644 = vmul.f32 %v270, %v625
      %v645 = vmul.f32 %v271, %v625
      %v646 = vmul.f32 %v272, %v625
      %v647 = vmul.f32 %v273, %v625
      %v648 = vmul.f32 %v274, %v625
      %v649 = vmul.f32 %v275, %v625
      %v650 = vmul.f32 %v276, %v625
      %v651 = vmul.f32 %v277, %v625
      %v652 = vmul.f32 %v278, %v625
      %v653 = vmul.f32 %v279, %v625
      %v654 = vmul.f32 %v280, %v625
      %v655 = vmul.f32 %v281, %v625
      %v656 = vmul.f32 %v282, %v625
      %v657 = vmul.f32 %v283, %v625
      %v658 = vmul.f32 %v284, %v625
      %v659 = vmul.f32 %v285, %v625
      %v660 = vmul.f32 %v286, %v625
      %v661 = vmul.f32 %v287, %v625
      %v662 = vmul.f32 %v288, %v625
      %v663 = vmul.f32 %v289, %v625
      %v664 = vmul.f32 %v290, %v625
      %v665 = vmul.f32 %v291, %v625
      %v666 = vmul.f32 %v292, %v625
      %v667 = vmul.f32 %v293, %v625
      %v668 = vmul.f32 %v294, %v625
      %v669 = vmul.f32 %v295, %v625
      %v670 = vmul.f32 %v296, %v625
      %v671 = vmul.f32 %v297, %v625
      %v672 = vmul.f32 %v298, %v625
      %v673 = vmul.f32 %v299, %v625
      %vm722 = vcmask 1045504
      %v723 = vrot.slane %v626, 2
      %v724 = vrot.slane %v627, 2
      %v725 = vsel %vm722, %v723, %v724
      %v726 = vrot.slane %v628, 2
      %v727 = vsel %vm722, %v724, %v726
      %v728 = vrot.slane %v629, 2
      %v729 = vrot.slane %v630, 2
      %v730 = vsel %vm722, %v728, %v729
      %v731 = vrot.slane %v631, 2
      %v732 = vsel %vm722, %v729, %v731
      %v733 = vrot.slane %v632, 2
      %v734 = vrot.slane %v633, 2
      %v735 = vsel %vm722, %v733, %v734
      %v736 = vrot.slane %v634, 2
      %v737 = vsel %vm722, %v734, %v736
      %v738 = vrot.slane %v635, 2
      %v739 = vrot.slane %v636, 2
      %v740 = vsel %vm722, %v738, %v739
      %v741 = vrot.slane %v637, 2
      %v742 = vsel %vm722, %v739, %v741
      %v743 = vrot.slane %v638, 2
      %v744 = vrot.slane %v639, 2
      %v745 = vsel %vm722, %v743, %v744
      %v746 = vrot.slane %v640, 2
      %v747 = vsel %vm722, %v744, %v746
      %v748 = vrot.slane %v641, 2
      %v749 = vrot.slane %v642, 2
      %v750 = vsel %vm722, %v748, %v749
      %v751 = vrot.slane %v643, 2
      %v752 = vsel %vm722, %v749, %v751
      %v753 = vrot.slane %v644, 2
      %v754 = vrot.slane %v645, 2
      %v755 = vsel %vm722, %v753, %v754
      %v756 = vrot.slane %v646, 2
      %v757 = vsel %vm722, %v754, %v756
      %v758 = vrot.slane %v647, 2
      %v759 = vrot.slane %v648, 2
      %v760 = vsel %vm722, %v758, %v759
      %v761 = vrot.slane %v649, 2
      %v762 = vsel %vm722, %v759, %v761
      %v763 = vrot.slane %v650, 2
      %v764 = vrot.slane %v651, 2
      %v765 = vsel %vm722, %v763, %v764
      %v766 = vrot.slane %v652, 2
      %v767 = vsel %vm722, %v764, %v766
      %v768 = vrot.slane %v653, 2
      %v769 = vrot.slane %v654, 2
      %v770 = vsel %vm722, %v768, %v769
      %v771 = vrot.slane %v655, 2
      %v772 = vsel %vm722, %v769, %v771
      %v773 = vrot.slane %v656, 2
      %v774 = vrot.slane %v657, 2
      %v775 = vsel %vm722, %v773, %v774
      %v776 = vrot.slane %v658, 2
      %v777 = vsel %vm722, %v774, %v776
      %v778 = vrot.slane %v659, 2
      %v779 = vrot.slane %v660, 2
      %v780 = vsel %vm722, %v778, %v779
      %v781 = vrot.slane %v661, 2
      %v782 = vsel %vm722, %v779, %v781
      %v783 = vrot.slane %v662, 2
      %v784 = vrot.slane %v663, 2
      %v785 = vsel %vm722, %v783, %v784
      %v786 = vrot.slane %v664, 2
      %v787 = vsel %vm722, %v784, %v786
      %v788 = vrot.slane %v665, 2
      %v789 = vrot.slane %v666, 2
      %v790 = vsel %vm722, %v788, %v789
      %v791 = vrot.slane %v667, 2
      %v792 = vsel %vm722, %v789, %v791
      %v793 = vrot.slane %v668, 2
      %v794 = vrot.slane %v669, 2
      %v795 = vsel %vm722, %v793, %v794
      %v796 = vrot.slane %v670, 2
      %v797 = vsel %vm722, %v794, %v796
      %v798 = vrot.slane %v671, 2
      %v799 = vrot.slane %v672, 2
      %v800 = vsel %vm722, %v798, %v799
      %v801 = vrot.slane %v673, 2
      %v802 = vsel %vm722, %v799, %v801
      %v835 = vadd.f32 %v589, %v725
      %v836 = vadd.f32 %v590, %v727
      %v837 = vadd.f32 %v591, %v730
      %v838 = vadd.f32 %v592, %v732
      %v839 = vadd.f32 %v593, %v735
      %v840 = vadd.f32 %v594, %v737
      %v841 = vadd.f32 %v595, %v740
      %v842 = vadd.f32 %v596, %v742
      %v843 = vadd.f32 %v597, %v745
      %v844 = vadd.f32 %v598, %v747
      %v845 = vadd.f32 %v599, %v750
      %v846 = vadd.f32 %v600, %v752
      %v847 = vadd.f32 %v601, %v755
      %v848 = vadd.f32 %v602, %v757
      %v849 = vadd.f32 %v603, %v760
      %v850 = vadd.f32 %v604, %v762
      %v851 = vadd.f32 %v605, %v765
      %v852 = vadd.f32 %v606, %v767
      %v853 = vadd.f32 %v607, %v770
      %v854 = vadd.f32 %v608, %v772
      %v855 = vadd.f32 %v609, %v775
      %v856 = vadd.f32 %v610, %v777
      %v857 = vadd.f32 %v611, %v780
      %v858 = vadd.f32 %v612, %v782
      %v859 = vadd.f32 %v613, %v785
      %v860 = vadd.f32 %v614, %v787
      %v861 = vadd.f32 %v615, %v790
      %v862 = vadd.f32 %v616, %v792
      %v863 = vadd.f32 %v617, %v795
      %v864 = vadd.f32 %v618, %v797
      %v865 = vadd.f32 %v619, %v800
      %v866 = vadd.f32 %v620, %v802
      %v867 = vld [vmem:[%s1 + $0x3] sm:$0x1]
      %v868 = vlaneseq
      %v869 = vshrl.u32 %v868, 7
      %v870 = vsub.s32 0, %v869
      %v871 = vrot.slane %v867, %v870
      %v872 = vmul.f32 %v255, %v871
      %v873 = vmul.f32 %v256, %v871
      %v874 = vmul.f32 %v258, %v871
      %v875 = vmul.f32 %v259, %v871
      %v876 = vmul.f32 %v261, %v871
      %v877 = vmul.f32 %v262, %v871
      %v878 = vmul.f32 %v264, %v871
      %v879 = vmul.f32 %v265, %v871
      %v880 = vmul.f32 %v267, %v871
      %v881 = vmul.f32 %v268, %v871
      %v882 = vmul.f32 %v270, %v871
      %v883 = vmul.f32 %v271, %v871
      %v884 = vmul.f32 %v273, %v871
      %v885 = vmul.f32 %v274, %v871
      %v886 = vmul.f32 %v276, %v871
      %v887 = vmul.f32 %v277, %v871
      %v888 = vmul.f32 %v279, %v871
      %v889 = vmul.f32 %v280, %v871
      %v890 = vmul.f32 %v282, %v871
      %v891 = vmul.f32 %v283, %v871
      %v892 = vmul.f32 %v285, %v871
      %v893 = vmul.f32 %v286, %v871
      %v894 = vmul.f32 %v288, %v871
      %v895 = vmul.f32 %v289, %v871
      %v896 = vmul.f32 %v291, %v871
      %v897 = vmul.f32 %v292, %v871
      %v898 = vmul.f32 %v294, %v871
      %v899 = vmul.f32 %v295, %v871
      %v900 = vmul.f32 %v297, %v871
      %v901 = vmul.f32 %v298, %v871
      %v902 = vmul.f32 %v300, %v871
      %v903 = vmul.f32 %v301, %v871
      %v904 = vadd.f32 %v835, %v872
      %v905 = vadd.f32 %v836, %v873
      %v906 = vadd.f32 %v837, %v874
      %v907 = vadd.f32 %v838, %v875
      %v908 = vadd.f32 %v839, %v876
      %v909 = vadd.f32 %v840, %v877
      %v910 = vadd.f32 %v841, %v878
      %v911 = vadd.f32 %v842, %v879
      %v912 = vadd.f32 %v843, %v880
      %v913 = vadd.f32 %v844, %v881
      %v914 = vadd.f32 %v845, %v882
      %v915 = vadd.f32 %v846, %v883
      %v916 = vadd.f32 %v847, %v884
      %v917 = vadd.f32 %v848, %v885
      %v918 = vadd.f32 %v849, %v886
      %v919 = vadd.f32 %v850, %v887
      %v920 = vadd.f32 %v851, %v888
      %v921 = vadd.f32 %v852, %v889
      %v922 = vadd.f32 %v853, %v890
      %v923 = vadd.f32 %v854, %v891
      %v924 = vadd.f32 %v855, %v892
      %v925 = vadd.f32 %v856, %v893
      %v926 = vadd.f32 %v857, %v894
      %v927 = vadd.f32 %v858, %v895
      %v928 = vadd.f32 %v859, %v896
      %v929 = vadd.f32 %v860, %v897
      %v930 = vadd.f32 %v861, %v898
      %v931 = vadd.f32 %v862, %v899
      %v932 = vadd.f32 %v863, %v900
      %v933 = vadd.f32 %v864, %v901
      %v934 = vadd.f32 %v865, %v902
      %v935 = vadd.f32 %v866, %v903
      %v936 = vld [vmem:[%s1 + $0x4] sm:$0x1]
      %v937 = vlaneseq
      %v938 = vshrl.u32 %v937, 7
      %v939 = vsub.s32 0, %v938
      %v940 = vrot.slane %v936, %v939
      %v941 = vmul.f32 %v255, %v940
      %v942 = vmul.f32 %v256, %v940
      %v943 = vmul.f32 %v257, %v940
      %v944 = vmul.f32 %v258, %v940
      %v945 = vmul.f32 %v259, %v940
      %v946 = vmul.f32 %v260, %v940
      %v947 = vmul.f32 %v261, %v940
      %v948 = vmul.f32 %v262, %v940
      %v949 = vmul.f32 %v263, %v940
      %v950 = vmul.f32 %v264, %v940
      %v951 = vmul.f32 %v265, %v940
      %v952 = vmul.f32 %v266, %v940
      %v953 = vmul.f32 %v267, %v940
      %v954 = vmul.f32 %v268, %v940
      %v955 = vmul.f32 %v269, %v940
      %v956 = vmul.f32 %v270, %v940
      %v957 = vmul.f32 %v271, %v940
      %v958 = vmul.f32 %v272, %v940
      %v959 = vmul.f32 %v273, %v940
      %v960 = vmul.f32 %v274, %v940
      %v961 = vmul.f32 %v275, %v940
      %v962 = vmul.f32 %v276, %v940
      %v963 = vmul.f32 %v277, %v940
      %v964 = vmul.f32 %v278, %v940
      %v965 = vmul.f32 %v279, %v940
      %v966 = vmul.f32 %v280, %v940
      %v967 = vmul.f32 %v281, %v940
      %v968 = vmul.f32 %v282, %v940
      %v969 = vmul.f32 %v283, %v940
      %v970 = vmul.f32 %v284, %v940
      %v971 = vmul.f32 %v285, %v940
      %v972 = vmul.f32 %v286, %v940
      %v973 = vmul.f32 %v287, %v940
      %v974 = vmul.f32 %v288, %v940
      %v975 = vmul.f32 %v289, %v940
      %v976 = vmul.f32 %v290, %v940
      %v977 = vmul.f32 %v291, %v940
      %v978 = vmul.f32 %v292, %v940
      %v979 = vmul.f32 %v293, %v940
      %v980 = vmul.f32 %v294, %v940
      %v981 = vmul.f32 %v295, %v940
      %v982 = vmul.f32 %v296, %v940
      %v983 = vmul.f32 %v297, %v940
      %v984 = vmul.f32 %v298, %v940
      %v985 = vmul.f32 %v299, %v940
      %v986 = vmul.f32 %v300, %v940
      %v987 = vmul.f32 %v301, %v940
      %v988 = vmul.f32 %v302, %v940
      %v1037 = vrot.slane %v941, 1
      %v1038 = vrot.slane %v942, 1
      %v1039 = vsel %vm476, %v1037, %v1038
      %v1040 = vrot.slane %v943, 1
      %v1041 = vsel %vm476, %v1038, %v1040
      %v1042 = vrot.slane %v944, 1
      %v1043 = vrot.slane %v945, 1
      %v1044 = vsel %vm476, %v1042, %v1043
      %v1045 = vrot.slane %v946, 1
      %v1046 = vsel %vm476, %v1043, %v1045
      %v1047 = vrot.slane %v947, 1
      %v1048 = vrot.slane %v948, 1
      %v1049 = vsel %vm476, %v1047, %v1048
      %v1050 = vrot.slane %v949, 1
      %v1051 = vsel %vm476, %v1048, %v1050
      %v1052 = vrot.slane %v950, 1
      %v1053 = vrot.slane %v951, 1
      %v1054 = vsel %vm476, %v1052, %v1053
      %v1055 = vrot.slane %v952, 1
      %v1056 = vsel %vm476, %v1053, %v1055
      %v1057 = vrot.slane %v953, 1
      %v1058 = vrot.slane %v954, 1
      %v1059 = vsel %vm476, %v1057, %v1058
      %v1060 = vrot.slane %v955, 1
      %v1061 = vsel %vm476, %v1058, %v1060
      %v1062 = vrot.slane %v956, 1
      %v1063 = vrot.slane %v957, 1
      %v1064 = vsel %vm476, %v1062, %v1063
      %v1065 = vrot.slane %v958, 1
      %v1066 = vsel %vm476, %v1063, %v1065
      %v1067 = vrot.slane %v959, 1
      %v1068 = vrot.slane %v960, 1
      %v1069 = vsel %vm476, %v1067, %v1068
      %v1070 = vrot.slane %v961, 1
      %v1071 = vsel %vm476, %v1068, %v1070
      %v1072 = vrot.slane %v962, 1
      %v1073 = vrot.slane %v963, 1
      %v1074 = vsel %vm476, %v1072, %v1073
      %v1075 = vrot.slane %v964, 1
      %v1076 = vsel %vm476, %v1073, %v1075
      %v1077 = vrot.slane %v965, 1
      %v1078 = vrot.slane %v966, 1
      %v1079 = vsel %vm476, %v1077, %v1078
      %v1080 = vrot.slane %v967, 1
      %v1081 = vsel %vm476, %v1078, %v1080
      %v1082 = vrot.slane %v968, 1
      %v1083 = vrot.slane %v969, 1
      %v1084 = vsel %vm476, %v1082, %v1083
      %v1085 = vrot.slane %v970, 1
      %v1086 = vsel %vm476, %v1083, %v1085
      %v1087 = vrot.slane %v971, 1
      %v1088 = vrot.slane %v972, 1
      %v1089 = vsel %vm476, %v1087, %v1088
      %v1090 = vrot.slane %v973, 1
      %v1091 = vsel %vm476, %v1088, %v1090
      %v1092 = vrot.slane %v974, 1
      %v1093 = vrot.slane %v975, 1
      %v1094 = vsel %vm476, %v1092, %v1093
      %v1095 = vrot.slane %v976, 1
      %v1096 = vsel %vm476, %v1093, %v1095
      %v1097 = vrot.slane %v977, 1
      %v1098 = vrot.slane %v978, 1
      %v1099 = vsel %vm476, %v1097, %v1098
      %v1100 = vrot.slane %v979, 1
      %v1101 = vsel %vm476, %v1098, %v1100
      %v1102 = vrot.slane %v980, 1
      %v1103 = vrot.slane %v981, 1
      %v1104 = vsel %vm476, %v1102, %v1103
      %v1105 = vrot.slane %v982, 1
      %v1106 = vsel %vm476, %v1103, %v1105
      %v1107 = vrot.slane %v983, 1
      %v1108 = vrot.slane %v984, 1
      %v1109 = vsel %vm476, %v1107, %v1108
      %v1110 = vrot.slane %v985, 1
      %v1111 = vsel %vm476, %v1108, %v1110
      %v1112 = vrot.slane %v986, 1
      %v1113 = vrot.slane %v987, 1
      %v1114 = vsel %vm476, %v1112, %v1113
      %v1115 = vrot.slane %v988, 1
      %v1116 = vsel %vm476, %v1113, %v1115
      %v1149 = vadd.f32 %v904, %v1039
      %v1150 = vadd.f32 %v905, %v1041
      %v1151 = vadd.f32 %v906, %v1044
      %v1152 = vadd.f32 %v907, %v1046
      %v1153 = vadd.f32 %v908, %v1049
      %v1154 = vadd.f32 %v909, %v1051
      %v1155 = vadd.f32 %v910, %v1054
      %v1156 = vadd.f32 %v911, %v1056
      %v1157 = vadd.f32 %v912, %v1059
      %v1158 = vadd.f32 %v913, %v1061
      %v1159 = vadd.f32 %v914, %v1064
      %v1160 = vadd.f32 %v915, %v1066
      %v1161 = vadd.f32 %v916, %v1069
      %v1162 = vadd.f32 %v917, %v1071
      %v1163 = vadd.f32 %v918, %v1074
      %v1164 = vadd.f32 %v919, %v1076
      %v1165 = vadd.f32 %v920, %v1079
      %v1166 = vadd.f32 %v921, %v1081
      %v1167 = vadd.f32 %v922, %v1084
      %v1168 = vadd.f32 %v923, %v1086
      %v1169 = vadd.f32 %v924, %v1089
      %v1170 = vadd.f32 %v925, %v1091
      %v1171 = vadd.f32 %v926, %v1094
      %v1172 = vadd.f32 %v927, %v1096
      %v1173 = vadd.f32 %v928, %v1099
      %v1174 = vadd.f32 %v929, %v1101
      %v1175 = vadd.f32 %v930, %v1104
      %v1176 = vadd.f32 %v931, %v1106
      %v1177 = vadd.f32 %v932, %v1109
      %v1178 = vadd.f32 %v933, %v1111
      %v1179 = vadd.f32 %v934, %v1114
      %v1180 = vadd.f32 %v935, %v1116
      %v1181 = vld [vmem:[%s1 + $0x5] sm:$0x1]
      %v1182 = vlaneseq
      %v1183 = vshrl.u32 %v1182, 7
      %v1184 = vsub.s32 0, %v1183
      %v1185 = vrot.slane %v1181, %v1184
      %v1186 = vmul.f32 %v255, %v1185
      %v1187 = vmul.f32 %v256, %v1185
      %v1188 = vmul.f32 %v257, %v1185
      %v1189 = vmul.f32 %v258, %v1185
      %v1190 = vmul.f32 %v259, %v1185
      %v1191 = vmul.f32 %v260, %v1185
      %v1192 = vmul.f32 %v261, %v1185
      %v1193 = vmul.f32 %v262, %v1185
      %v1194 = vmul.f32 %v263, %v1185
      %v1195 = vmul.f32 %v264, %v1185
      %v1196 = vmul.f32 %v265, %v1185
      %v1197 = vmul.f32 %v266, %v1185
      %v1198 = vmul.f32 %v267, %v1185
      %v1199 = vmul.f32 %v268, %v1185
      %v1200 = vmul.f32 %v269, %v1185
      %v1201 = vmul.f32 %v270, %v1185
      %v1202 = vmul.f32 %v271, %v1185
      %v1203 = vmul.f32 %v272, %v1185
      %v1204 = vmul.f32 %v273, %v1185
      %v1205 = vmul.f32 %v274, %v1185
      %v1206 = vmul.f32 %v275, %v1185
      %v1207 = vmul.f32 %v276, %v1185
      %v1208 = vmul.f32 %v277, %v1185
      %v1209 = vmul.f32 %v278, %v1185
      %v1210 = vmul.f32 %v279, %v1185
      %v1211 = vmul.f32 %v280, %v1185
      %v1212 = vmul.f32 %v281, %v1185
      %v1213 = vmul.f32 %v282, %v1185
      %v1214 = vmul.f32 %v283, %v1185
      %v1215 = vmul.f32 %v284, %v1185
      %v1216 = vmul.f32 %v285, %v1185
      %v1217 = vmul.f32 %v286, %v1185
      %v1218 = vmul.f32 %v287, %v1185
      %v1219 = vmul.f32 %v288, %v1185
      %v1220 = vmul.f32 %v289, %v1185
      %v1221 = vmul.f32 %v290, %v1185
      %v1222 = vmul.f32 %v291, %v1185
      %v1223 = vmul.f32 %v292, %v1185
      %v1224 = vmul.f32 %v293, %v1185
      %v1225 = vmul.f32 %v294, %v1185
      %v1226 = vmul.f32 %v295, %v1185
      %v1227 = vmul.f32 %v296, %v1185
      %v1228 = vmul.f32 %v297, %v1185
      %v1229 = vmul.f32 %v298, %v1185
      %v1230 = vmul.f32 %v299, %v1185
      %v1231 = vmul.f32 %v300, %v1185
      %v1232 = vmul.f32 %v301, %v1185
      %v1233 = vmul.f32 %v302, %v1185
      %v1282 = vrot.slane %v1186, 2
      %v1283 = vrot.slane %v1187, 2
      %v1284 = vsel %vm722, %v1282, %v1283
      %v1285 = vrot.slane %v1188, 2
      %v1286 = vsel %vm722, %v1283, %v1285
      %v1287 = vrot.slane %v1189, 2
      %v1288 = vrot.slane %v1190, 2
      %v1289 = vsel %vm722, %v1287, %v1288
      %v1290 = vrot.slane %v1191, 2
      %v1291 = vsel %vm722, %v1288, %v1290
      %v1292 = vrot.slane %v1192, 2
      %v1293 = vrot.slane %v1193, 2
      %v1294 = vsel %vm722, %v1292, %v1293
      %v1295 = vrot.slane %v1194, 2
      %v1296 = vsel %vm722, %v1293, %v1295
      %v1297 = vrot.slane %v1195, 2
      %v1298 = vrot.slane %v1196, 2
      %v1299 = vsel %vm722, %v1297, %v1298
      %v1300 = vrot.slane %v1197, 2
      %v1301 = vsel %vm722, %v1298, %v1300
      %v1302 = vrot.slane %v1198, 2
      %v1303 = vrot.slane %v1199, 2
      %v1304 = vsel %vm722, %v1302, %v1303
      %v1305 = vrot.slane %v1200, 2
      %v1306 = vsel %vm722, %v1303, %v1305
      %v1307 = vrot.slane %v1201, 2
      %v1308 = vrot.slane %v1202, 2
      %v1309 = vsel %vm722, %v1307, %v1308
      %v1310 = vrot.slane %v1203, 2
      %v1311 = vsel %vm722, %v1308, %v1310
      %v1312 = vrot.slane %v1204, 2
      %v1313 = vrot.slane %v1205, 2
      %v1314 = vsel %vm722, %v1312, %v1313
      %v1315 = vrot.slane %v1206, 2
      %v1316 = vsel %vm722, %v1313, %v1315
      %v1317 = vrot.slane %v1207, 2
      %v1318 = vrot.slane %v1208, 2
      %v1319 = vsel %vm722, %v1317, %v1318
      %v1320 = vrot.slane %v1209, 2
      %v1321 = vsel %vm722, %v1318, %v1320
      %v1322 = vrot.slane %v1210, 2
      %v1323 = vrot.slane %v1211, 2
      %v1324 = vsel %vm722, %v1322, %v1323
      %v1325 = vrot.slane %v1212, 2
      %v1326 = vsel %vm722, %v1323, %v1325
      %v1327 = vrot.slane %v1213, 2
      %v1328 = vrot.slane %v1214, 2
      %v1329 = vsel %vm722, %v1327, %v1328
      %v1330 = vrot.slane %v1215, 2
      %v1331 = vsel %vm722, %v1328, %v1330
      %v1332 = vrot.slane %v1216, 2
      %v1333 = vrot.slane %v1217, 2
      %v1334 = vsel %vm722, %v1332, %v1333
      %v1335 = vrot.slane %v1218, 2
      %v1336 = vsel %vm722, %v1333, %v1335
      %v1337 = vrot.slane %v1219, 2
      %v1338 = vrot.slane %v1220, 2
      %v1339 = vsel %vm722, %v1337, %v1338
      %v1340 = vrot.slane %v1221, 2
      %v1341 = vsel %vm722, %v1338, %v1340
      %v1342 = vrot.slane %v1222, 2
      %v1343 = vrot.slane %v1223, 2
      %v1344 = vsel %vm722, %v1342, %v1343
      %v1345 = vrot.slane %v1224, 2
      %v1346 = vsel %vm722, %v1343, %v1345
      %v1347 = vrot.slane %v1225, 2
      %v1348 = vrot.slane %v1226, 2
      %v1349 = vsel %vm722, %v1347, %v1348
      %v1350 = vrot.slane %v1227, 2
      %v1351 = vsel %vm722, %v1348, %v1350
      %v1352 = vrot.slane %v1228, 2
      %v1353 = vrot.slane %v1229, 2
      %v1354 = vsel %vm722, %v1352, %v1353
      %v1355 = vrot.slane %v1230, 2
      %v1356 = vsel %vm722, %v1353, %v1355
      %v1357 = vrot.slane %v1231, 2
      %v1358 = vrot.slane %v1232, 2
      %v1359 = vsel %vm722, %v1357, %v1358
      %v1360 = vrot.slane %v1233, 2
      %v1361 = vsel %vm722, %v1358, %v1360
      %v1394 = vadd.f32 %v1149, %v1284
      %v1395 = vadd.f32 %v1150, %v1286
      %v1396 = vadd.f32 %v1151, %v1289
      %v1397 = vadd.f32 %v1152, %v1291
      %v1398 = vadd.f32 %v1153, %v1294
      %v1399 = vadd.f32 %v1154, %v1296
      %v1400 = vadd.f32 %v1155, %v1299
      %v1401 = vadd.f32 %v1156, %v1301
      %v1402 = vadd.f32 %v1157, %v1304
      %v1403 = vadd.f32 %v1158, %v1306
      %v1404 = vadd.f32 %v1159, %v1309
      %v1405 = vadd.f32 %v1160, %v1311
      %v1406 = vadd.f32 %v1161, %v1314
      %v1407 = vadd.f32 %v1162, %v1316
      %v1408 = vadd.f32 %v1163, %v1319
      %v1409 = vadd.f32 %v1164, %v1321
      %v1410 = vadd.f32 %v1165, %v1324
      %v1411 = vadd.f32 %v1166, %v1326
      %v1412 = vadd.f32 %v1167, %v1329
      %v1413 = vadd.f32 %v1168, %v1331
      %v1414 = vadd.f32 %v1169, %v1334
      %v1415 = vadd.f32 %v1170, %v1336
      %v1416 = vadd.f32 %v1171, %v1339
      %v1417 = vadd.f32 %v1172, %v1341
      %v1418 = vadd.f32 %v1173, %v1344
      %v1419 = vadd.f32 %v1174, %v1346
      %v1420 = vadd.f32 %v1175, %v1349
      %v1421 = vadd.f32 %v1176, %v1351
      %v1422 = vadd.f32 %v1177, %v1354
      %v1423 = vadd.f32 %v1178, %v1356
      %v1424 = vadd.f32 %v1179, %v1359
      %v1425 = vadd.f32 %v1180, %v1361
      %v1426 = vld [vmem:[%s1 + $0x6] sm:$0x1]
      %v1427 = vlaneseq
      %v1428 = vshrl.u32 %v1427, 7
      %v1429 = vsub.s32 0, %v1428
      %v1430 = vrot.slane %v1426, %v1429
      %v1431 = vmul.f32 %v258, %v1430
      %v1432 = vmul.f32 %v259, %v1430
      %v1433 = vmul.f32 %v261, %v1430
      %v1434 = vmul.f32 %v262, %v1430
      %v1435 = vmul.f32 %v264, %v1430
      %v1436 = vmul.f32 %v265, %v1430
      %v1437 = vmul.f32 %v267, %v1430
      %v1438 = vmul.f32 %v268, %v1430
      %v1439 = vmul.f32 %v270, %v1430
      %v1440 = vmul.f32 %v271, %v1430
      %v1441 = vmul.f32 %v273, %v1430
      %v1442 = vmul.f32 %v274, %v1430
      %v1443 = vmul.f32 %v276, %v1430
      %v1444 = vmul.f32 %v277, %v1430
      %v1445 = vmul.f32 %v279, %v1430
      %v1446 = vmul.f32 %v280, %v1430
      %v1447 = vmul.f32 %v282, %v1430
      %v1448 = vmul.f32 %v283, %v1430
      %v1449 = vmul.f32 %v285, %v1430
      %v1450 = vmul.f32 %v286, %v1430
      %v1451 = vmul.f32 %v288, %v1430
      %v1452 = vmul.f32 %v289, %v1430
      %v1453 = vmul.f32 %v291, %v1430
      %v1454 = vmul.f32 %v292, %v1430
      %v1455 = vmul.f32 %v294, %v1430
      %v1456 = vmul.f32 %v295, %v1430
      %v1457 = vmul.f32 %v297, %v1430
      %v1458 = vmul.f32 %v298, %v1430
      %v1459 = vmul.f32 %v300, %v1430
      %v1460 = vmul.f32 %v301, %v1430
      %v1461 = vmul.f32 %v303, %v1430
      %v1462 = vmul.f32 %v304, %v1430
      %v1463 = vadd.f32 %v1394, %v1431
      %v1464 = vadd.f32 %v1395, %v1432
      %v1465 = vadd.f32 %v1396, %v1433
      %v1466 = vadd.f32 %v1397, %v1434
      %v1467 = vadd.f32 %v1398, %v1435
      %v1468 = vadd.f32 %v1399, %v1436
      %v1469 = vadd.f32 %v1400, %v1437
      %v1470 = vadd.f32 %v1401, %v1438
      %v1471 = vadd.f32 %v1402, %v1439
      %v1472 = vadd.f32 %v1403, %v1440
      %v1473 = vadd.f32 %v1404, %v1441
      %v1474 = vadd.f32 %v1405, %v1442
      %v1475 = vadd.f32 %v1406, %v1443
      %v1476 = vadd.f32 %v1407, %v1444
      %v1477 = vadd.f32 %v1408, %v1445
      %v1478 = vadd.f32 %v1409, %v1446
      %v1479 = vadd.f32 %v1410, %v1447
      %v1480 = vadd.f32 %v1411, %v1448
      %v1481 = vadd.f32 %v1412, %v1449
      %v1482 = vadd.f32 %v1413, %v1450
      %v1483 = vadd.f32 %v1414, %v1451
      %v1484 = vadd.f32 %v1415, %v1452
      %v1485 = vadd.f32 %v1416, %v1453
      %v1486 = vadd.f32 %v1417, %v1454
      %v1487 = vadd.f32 %v1418, %v1455
      %v1488 = vadd.f32 %v1419, %v1456
      %v1489 = vadd.f32 %v1420, %v1457
      %v1490 = vadd.f32 %v1421, %v1458
      %v1491 = vadd.f32 %v1422, %v1459
      %v1492 = vadd.f32 %v1423, %v1460
      %v1493 = vadd.f32 %v1424, %v1461
      %v1494 = vadd.f32 %v1425, %v1462
      %v1495 = vld [vmem:[%s1 + $0x7] sm:$0x1]
      %v1496 = vlaneseq
      %v1497 = vshrl.u32 %v1496, 7
      %v1498 = vsub.s32 0, %v1497
      %v1499 = vrot.slane %v1495, %v1498
      %v1500 = vmul.f32 %v258, %v1499
      %v1501 = vmul.f32 %v259, %v1499
      %v1502 = vmul.f32 %v260, %v1499
      %v1503 = vmul.f32 %v261, %v1499
      %v1504 = vmul.f32 %v262, %v1499
      %v1505 = vmul.f32 %v263, %v1499
      %v1506 = vmul.f32 %v264, %v1499
      %v1507 = vmul.f32 %v265, %v1499
      %v1508 = vmul.f32 %v266, %v1499
      %v1509 = vmul.f32 %v267, %v1499
      %v1510 = vmul.f32 %v268, %v1499
      %v1511 = vmul.f32 %v269, %v1499
      %v1512 = vmul.f32 %v270, %v1499
      %v1513 = vmul.f32 %v271, %v1499
      %v1514 = vmul.f32 %v272, %v1499
      %v1515 = vmul.f32 %v273, %v1499
      %v1516 = vmul.f32 %v274, %v1499
      %v1517 = vmul.f32 %v275, %v1499
      %v1518 = vmul.f32 %v276, %v1499
      %v1519 = vmul.f32 %v277, %v1499
      %v1520 = vmul.f32 %v278, %v1499
      %v1521 = vmul.f32 %v279, %v1499
      %v1522 = vmul.f32 %v280, %v1499
      %v1523 = vmul.f32 %v281, %v1499
      %v1524 = vmul.f32 %v282, %v1499
      %v1525 = vmul.f32 %v283, %v1499
      %v1526 = vmul.f32 %v284, %v1499
      %v1527 = vmul.f32 %v285, %v1499
      %v1528 = vmul.f32 %v286, %v1499
      %v1529 = vmul.f32 %v287, %v1499
      %v1530 = vmul.f32 %v288, %v1499
      %v1531 = vmul.f32 %v289, %v1499
      %v1532 = vmul.f32 %v290, %v1499
      %v1533 = vmul.f32 %v291, %v1499
      %v1534 = vmul.f32 %v292, %v1499
      %v1535 = vmul.f32 %v293, %v1499
      %v1536 = vmul.f32 %v294, %v1499
      %v1537 = vmul.f32 %v295, %v1499
      %v1538 = vmul.f32 %v296, %v1499
      %v1539 = vmul.f32 %v297, %v1499
      %v1540 = vmul.f32 %v298, %v1499
      %v1541 = vmul.f32 %v299, %v1499
      %v1542 = vmul.f32 %v300, %v1499
      %v1543 = vmul.f32 %v301, %v1499
      %v1544 = vmul.f32 %v302, %v1499
      %v1545 = vmul.f32 %v303, %v1499
      %v1546 = vmul.f32 %v304, %v1499
      %v1547 = vmul.f32 %v305, %v1499
      %v1596 = vrot.slane %v1500, 1
      %v1597 = vrot.slane %v1501, 1
      %v1598 = vsel %vm476, %v1596, %v1597
      %v1599 = vrot.slane %v1502, 1
      %v1600 = vsel %vm476, %v1597, %v1599
      %v1601 = vrot.slane %v1503, 1
      %v1602 = vrot.slane %v1504, 1
      %v1603 = vsel %vm476, %v1601, %v1602
      %v1604 = vrot.slane %v1505, 1
      %v1605 = vsel %vm476, %v1602, %v1604
      %v1606 = vrot.slane %v1506, 1
      %v1607 = vrot.slane %v1507, 1
      %v1608 = vsel %vm476, %v1606, %v1607
      %v1609 = vrot.slane %v1508, 1
      %v1610 = vsel %vm476, %v1607, %v1609
      %v1611 = vrot.slane %v1509, 1
      %v1612 = vrot.slane %v1510, 1
      %v1613 = vsel %vm476, %v1611, %v1612
      %v1614 = vrot.slane %v1511, 1
      %v1615 = vsel %vm476, %v1612, %v1614
      %v1616 = vrot.slane %v1512, 1
      %v1617 = vrot.slane %v1513, 1
      %v1618 = vsel %vm476, %v1616, %v1617
      %v1619 = vrot.slane %v1514, 1
      %v1620 = vsel %vm476, %v1617, %v1619
      %v1621 = vrot.slane %v1515, 1
      %v1622 = vrot.slane %v1516, 1
      %v1623 = vsel %vm476, %v1621, %v1622
      %v1624 = vrot.slane %v1517, 1
      %v1625 = vsel %vm476, %v1622, %v1624
      %v1626 = vrot.slane %v1518, 1
      %v1627 = vrot.slane %v1519, 1
      %v1628 = vsel %vm476, %v1626, %v1627
      %v1629 = vrot.slane %v1520, 1
      %v1630 = vsel %vm476, %v1627, %v1629
      %v1631 = vrot.slane %v1521, 1
      %v1632 = vrot.slane %v1522, 1
      %v1633 = vsel %vm476, %v1631, %v1632
      %v1634 = vrot.slane %v1523, 1
      %v1635 = vsel %vm476, %v1632, %v1634
      %v1636 = vrot.slane %v1524, 1
      %v1637 = vrot.slane %v1525, 1
      %v1638 = vsel %vm476, %v1636, %v1637
      %v1639 = vrot.slane %v1526, 1
      %v1640 = vsel %vm476, %v1637, %v1639
      %v1641 = vrot.slane %v1527, 1
      %v1642 = vrot.slane %v1528, 1
      %v1643 = vsel %vm476, %v1641, %v1642
      %v1644 = vrot.slane %v1529, 1
      %v1645 = vsel %vm476, %v1642, %v1644
      %v1646 = vrot.slane %v1530, 1
      %v1647 = vrot.slane %v1531, 1
      %v1648 = vsel %vm476, %v1646, %v1647
      %v1649 = vrot.slane %v1532, 1
      %v1650 = vsel %vm476, %v1647, %v1649
      %v1651 = vrot.slane %v1533, 1
      %v1652 = vrot.slane %v1534, 1
      %v1653 = vsel %vm476, %v1651, %v1652
      %v1654 = vrot.slane %v1535, 1
      %v1655 = vsel %vm476, %v1652, %v1654
      %v1656 = vrot.slane %v1536, 1
      %v1657 = vrot.slane %v1537, 1
      %v1658 = vsel %vm476, %v1656, %v1657
      %v1659 = vrot.slane %v1538, 1
      %v1660 = vsel %vm476, %v1657, %v1659
      %v1661 = vrot.slane %v1539, 1
      %v1662 = vrot.slane %v1540, 1
      %v1663 = vsel %vm476, %v1661, %v1662
      %v1664 = vrot.slane %v1541, 1
      %v1665 = vsel %vm476, %v1662, %v1664
      %v1666 = vrot.slane %v1542, 1
      %v1667 = vrot.slane %v1543, 1
      %v1668 = vsel %vm476, %v1666, %v1667
      %v1669 = vrot.slane %v1544, 1
      %v1670 = vsel %vm476, %v1667, %v1669
      %v1671 = vrot.slane %v1545, 1
      %v1672 = vrot.slane %v1546, 1
      %v1673 = vsel %vm476, %v1671, %v1672
      %v1674 = vrot.slane %v1547, 1
      %v1675 = vsel %vm476, %v1672, %v1674
      %v1708 = vadd.f32 %v1463, %v1598
      %v1709 = vadd.f32 %v1464, %v1600
      %v1710 = vadd.f32 %v1465, %v1603
      %v1711 = vadd.f32 %v1466, %v1605
      %v1712 = vadd.f32 %v1467, %v1608
      %v1713 = vadd.f32 %v1468, %v1610
      %v1714 = vadd.f32 %v1469, %v1613
      %v1715 = vadd.f32 %v1470, %v1615
      %v1716 = vadd.f32 %v1471, %v1618
      %v1717 = vadd.f32 %v1472, %v1620
      %v1718 = vadd.f32 %v1473, %v1623
      %v1719 = vadd.f32 %v1474, %v1625
      %v1720 = vadd.f32 %v1475, %v1628
      %v1721 = vadd.f32 %v1476, %v1630
      %v1722 = vadd.f32 %v1477, %v1633
      %v1723 = vadd.f32 %v1478, %v1635
      %v1724 = vadd.f32 %v1479, %v1638
      %v1725 = vadd.f32 %v1480, %v1640
      %v1726 = vadd.f32 %v1481, %v1643
      %v1727 = vadd.f32 %v1482, %v1645
      %v1728 = vadd.f32 %v1483, %v1648
      %v1729 = vadd.f32 %v1484, %v1650
      %v1730 = vadd.f32 %v1485, %v1653
      %v1731 = vadd.f32 %v1486, %v1655
      %v1732 = vadd.f32 %v1487, %v1658
      %v1733 = vadd.f32 %v1488, %v1660
      %v1734 = vadd.f32 %v1489, %v1663
      %v1735 = vadd.f32 %v1490, %v1665
      %v1736 = vadd.f32 %v1491, %v1668
      %v1737 = vadd.f32 %v1492, %v1670
      %v1738 = vadd.f32 %v1493, %v1673
      %v1739 = vadd.f32 %v1494, %v1675
      %v1740 = vld [vmem:[%s1 + $0x8] sm:$0x1]
      %v1741 = vlaneseq
      %v1742 = vshrl.u32 %v1741, 7
      %v1743 = vsub.s32 0, %v1742
      %v1744 = vrot.slane %v1740, %v1743
      %v1745 = vmul.f32 %v258, %v1744
      %v1746 = vmul.f32 %v259, %v1744
      %v1747 = vmul.f32 %v260, %v1744
      %v1748 = vmul.f32 %v261, %v1744
      %v1749 = vmul.f32 %v262, %v1744
      %v1750 = vmul.f32 %v263, %v1744
      %v1751 = vmul.f32 %v264, %v1744
      %v1752 = vmul.f32 %v265, %v1744
      %v1753 = vmul.f32 %v266, %v1744
      %v1754 = vmul.f32 %v267, %v1744
      %v1755 = vmul.f32 %v268, %v1744
      %v1756 = vmul.f32 %v269, %v1744
      %v1757 = vmul.f32 %v270, %v1744
      %v1758 = vmul.f32 %v271, %v1744
      %v1759 = vmul.f32 %v272, %v1744
      %v1760 = vmul.f32 %v273, %v1744
      %v1761 = vmul.f32 %v274, %v1744
      %v1762 = vmul.f32 %v275, %v1744
      %v1763 = vmul.f32 %v276, %v1744
      %v1764 = vmul.f32 %v277, %v1744
      %v1765 = vmul.f32 %v278, %v1744
      %v1766 = vmul.f32 %v279, %v1744
      %v1767 = vmul.f32 %v280, %v1744
      %v1768 = vmul.f32 %v281, %v1744
      %v1769 = vmul.f32 %v282, %v1744
      %v1770 = vmul.f32 %v283, %v1744
      %v1771 = vmul.f32 %v284, %v1744
      %v1772 = vmul.f32 %v285, %v1744
      %v1773 = vmul.f32 %v286, %v1744
      %v1774 = vmul.f32 %v287, %v1744
      %v1775 = vmul.f32 %v288, %v1744
      %v1776 = vmul.f32 %v289, %v1744
      %v1777 = vmul.f32 %v290, %v1744
      %v1778 = vmul.f32 %v291, %v1744
      %v1779 = vmul.f32 %v292, %v1744
      %v1780 = vmul.f32 %v293, %v1744
      %v1781 = vmul.f32 %v294, %v1744
      %v1782 = vmul.f32 %v295, %v1744
      %v1783 = vmul.f32 %v296, %v1744
      %v1784 = vmul.f32 %v297, %v1744
      %v1785 = vmul.f32 %v298, %v1744
      %v1786 = vmul.f32 %v299, %v1744
      %v1787 = vmul.f32 %v300, %v1744
      %v1788 = vmul.f32 %v301, %v1744
      %v1789 = vmul.f32 %v302, %v1744
      %v1790 = vmul.f32 %v303, %v1744
      %v1791 = vmul.f32 %v304, %v1744
      %v1792 = vmul.f32 %v305, %v1744
      %v1841 = vrot.slane %v1745, 2
      %v1842 = vrot.slane %v1746, 2
      %v1843 = vsel %vm722, %v1841, %v1842
      %v1844 = vrot.slane %v1747, 2
      %v1845 = vsel %vm722, %v1842, %v1844
      %v1846 = vrot.slane %v1748, 2
      %v1847 = vrot.slane %v1749, 2
      %v1848 = vsel %vm722, %v1846, %v1847
      %v1849 = vrot.slane %v1750, 2
      %v1850 = vsel %vm722, %v1847, %v1849
      %v1851 = vrot.slane %v1751, 2
      %v1852 = vrot.slane %v1752, 2
      %v1853 = vsel %vm722, %v1851, %v1852
      %v1854 = vrot.slane %v1753, 2
      %v1855 = vsel %vm722, %v1852, %v1854
      %v1856 = vrot.slane %v1754, 2
      %v1857 = vrot.slane %v1755, 2
      %v1858 = vsel %vm722, %v1856, %v1857
      %v1859 = vrot.slane %v1756, 2
      %v1860 = vsel %vm722, %v1857, %v1859
      %v1861 = vrot.slane %v1757, 2
      %v1862 = vrot.slane %v1758, 2
      %v1863 = vsel %vm722, %v1861, %v1862
      %v1864 = vrot.slane %v1759, 2
      %v1865 = vsel %vm722, %v1862, %v1864
      %v1866 = vrot.slane %v1760, 2
      %v1867 = vrot.slane %v1761, 2
      %v1868 = vsel %vm722, %v1866, %v1867
      %v1869 = vrot.slane %v1762, 2
      %v1870 = vsel %vm722, %v1867, %v1869
      %v1871 = vrot.slane %v1763, 2
      %v1872 = vrot.slane %v1764, 2
      %v1873 = vsel %vm722, %v1871, %v1872
      %v1874 = vrot.slane %v1765, 2
      %v1875 = vsel %vm722, %v1872, %v1874
      %v1876 = vrot.slane %v1766, 2
      %v1877 = vrot.slane %v1767, 2
      %v1878 = vsel %vm722, %v1876, %v1877
      %v1879 = vrot.slane %v1768, 2
      %v1880 = vsel %vm722, %v1877, %v1879
      %v1881 = vrot.slane %v1769, 2
      %v1882 = vrot.slane %v1770, 2
      %v1883 = vsel %vm722, %v1881, %v1882
      %v1884 = vrot.slane %v1771, 2
      %v1885 = vsel %vm722, %v1882, %v1884
      %v1886 = vrot.slane %v1772, 2
      %v1887 = vrot.slane %v1773, 2
      %v1888 = vsel %vm722, %v1886, %v1887
      %v1889 = vrot.slane %v1774, 2
      %v1890 = vsel %vm722, %v1887, %v1889
      %v1891 = vrot.slane %v1775, 2
      %v1892 = vrot.slane %v1776, 2
      %v1893 = vsel %vm722, %v1891, %v1892
      %v1894 = vrot.slane %v1777, 2
      %v1895 = vsel %vm722, %v1892, %v1894
      %v1896 = vrot.slane %v1778, 2
      %v1897 = vrot.slane %v1779, 2
      %v1898 = vsel %vm722, %v1896, %v1897
      %v1899 = vrot.slane %v1780, 2
      %v1900 = vsel %vm722, %v1897, %v1899
      %v1901 = vrot.slane %v1781, 2
      %v1902 = vrot.slane %v1782, 2
      %v1903 = vsel %vm722, %v1901, %v1902
      %v1904 = vrot.slane %v1783, 2
      %v1905 = vsel %vm722, %v1902, %v1904
      %v1906 = vrot.slane %v1784, 2
      %v1907 = vrot.slane %v1785, 2
      %v1908 = vsel %vm722, %v1906, %v1907
      %v1909 = vrot.slane %v1786, 2
      %v1910 = vsel %vm722, %v1907, %v1909
      %v1911 = vrot.slane %v1787, 2
      %v1912 = vrot.slane %v1788, 2
      %v1913 = vsel %vm722, %v1911, %v1912
      %v1914 = vrot.slane %v1789, 2
      %v1915 = vsel %vm722, %v1912, %v1914
      %v1916 = vrot.slane %v1790, 2
      %v1917 = vrot.slane %v1791, 2
      %v1918 = vsel %vm722, %v1916, %v1917
      %v1919 = vrot.slane %v1792, 2
      %v1920 = vsel %vm722, %v1917, %v1919
      %v1953 = vadd.f32 %v1708, %v1843
      %v1954 = vadd.f32 %v1709, %v1845
      %v1955 = vadd.f32 %v1710, %v1848
      %v1956 = vadd.f32 %v1711, %v1850
      %v1957 = vadd.f32 %v1712, %v1853
      %v1958 = vadd.f32 %v1713, %v1855
      %v1959 = vadd.f32 %v1714, %v1858
      %v1960 = vadd.f32 %v1715, %v1860
      %v1961 = vadd.f32 %v1716, %v1863
      %v1962 = vadd.f32 %v1717, %v1865
      %v1963 = vadd.f32 %v1718, %v1868
      %v1964 = vadd.f32 %v1719, %v1870
      %v1965 = vadd.f32 %v1720, %v1873
      %v1966 = vadd.f32 %v1721, %v1875
      %v1967 = vadd.f32 %v1722, %v1878
      %v1968 = vadd.f32 %v1723, %v1880
      %v1969 = vadd.f32 %v1724, %v1883
      %v1970 = vadd.f32 %v1725, %v1885
      %v1971 = vadd.f32 %v1726, %v1888
      %v1972 = vadd.f32 %v1727, %v1890
      %v1973 = vadd.f32 %v1728, %v1893
      %v1974 = vadd.f32 %v1729, %v1895
      %v1975 = vadd.f32 %v1730, %v1898
      %v1976 = vadd.f32 %v1731, %v1900
      %v1977 = vadd.f32 %v1732, %v1903
      %v1978 = vadd.f32 %v1733, %v1905
      %v1979 = vadd.f32 %v1734, %v1908
      %v1980 = vadd.f32 %v1735, %v1910
      %v1981 = vadd.f32 %v1736, %v1913
      %v1982 = vadd.f32 %v1737, %v1915
      %v1983 = vadd.f32 %v1738, %v1918
      %v1984 = vadd.f32 %v1739, %v1920
      %v1985 = vld [vmem:[%s2] sm:$0x1]
      %v1987 = vlaneseq
      %v1988 = vshrl.u32 %v1987, 7
      %v1989 = vsub.s32 0, %v1988
      %v1990 = vrot.slane %v1985, %v1989
      %v1992 = vmul.f32 %v1953, %v1990
      %v1993 = vmul.f32 %v1954, %v1990
      %v1994 = vmul.f32 %v1955, %v1990
      %v1995 = vmul.f32 %v1956, %v1990
      %v1996 = vmul.f32 %v1957, %v1990
      %v1997 = vmul.f32 %v1958, %v1990
      %v1998 = vmul.f32 %v1959, %v1990
      %v1999 = vmul.f32 %v1960, %v1990
      %v2000 = vmul.f32 %v1961, %v1990
      %v2001 = vmul.f32 %v1962, %v1990
      %v2002 = vmul.f32 %v1963, %v1990
      %v2003 = vmul.f32 %v1964, %v1990
      %v2004 = vmul.f32 %v1965, %v1990
      %v2005 = vmul.f32 %v1966, %v1990
      %v2006 = vmul.f32 %v1967, %v1990
      %v2007 = vmul.f32 %v1968, %v1990
      %v2008 = vmul.f32 %v1969, %v1990
      %v2009 = vmul.f32 %v1970, %v1990
      %v2010 = vmul.f32 %v1971, %v1990
      %v2011 = vmul.f32 %v1972, %v1990
      %v2012 = vmul.f32 %v1973, %v1990
      %v2013 = vmul.f32 %v1974, %v1990
      %v2014 = vmul.f32 %v1975, %v1990
      %v2015 = vmul.f32 %v1976, %v1990
      %v2016 = vmul.f32 %v1977, %v1990
      %v2017 = vmul.f32 %v1978, %v1990
      %v2018 = vmul.f32 %v1979, %v1990
      %v2019 = vmul.f32 %v1980, %v1990
      %v2020 = vmul.f32 %v1981, %v1990
      %v2021 = vmul.f32 %v1982, %v1990
      %v2022 = vmul.f32 %v1983, %v1990
      %v2023 = vmul.f32 %v1984, %v1990
      %v2024 = vld [vmem:[%s3] sm:$0x1]
      %v2026 = vlaneseq
      %v2027 = vshrl.u32 %v2026, 7
      %v2028 = vsub.s32 0, %v2027
      %v2029 = vrot.slane %v2024, %v2028
      %v2031 = vadd.f32 %v1992, %v2029
      %v2032 = vadd.f32 %v1993, %v2029
      %v2033 = vadd.f32 %v1994, %v2029
      %v2034 = vadd.f32 %v1995, %v2029
      %v2035 = vadd.f32 %v1996, %v2029
      %v2036 = vadd.f32 %v1997, %v2029
      %v2037 = vadd.f32 %v1998, %v2029
      %v2038 = vadd.f32 %v1999, %v2029
      %v2039 = vadd.f32 %v2000, %v2029
      %v2040 = vadd.f32 %v2001, %v2029
      %v2041 = vadd.f32 %v2002, %v2029
      %v2042 = vadd.f32 %v2003, %v2029
      %v2043 = vadd.f32 %v2004, %v2029
      %v2044 = vadd.f32 %v2005, %v2029
      %v2045 = vadd.f32 %v2006, %v2029
      %v2046 = vadd.f32 %v2007, %v2029
      %v2047 = vadd.f32 %v2008, %v2029
      %v2048 = vadd.f32 %v2009, %v2029
      %v2049 = vadd.f32 %v2010, %v2029
      %v2050 = vadd.f32 %v2011, %v2029
      %v2051 = vadd.f32 %v2012, %v2029
      %v2052 = vadd.f32 %v2013, %v2029
      %v2053 = vadd.f32 %v2014, %v2029
      %v2054 = vadd.f32 %v2015, %v2029
      %v2055 = vadd.f32 %v2016, %v2029
      %v2056 = vadd.f32 %v2017, %v2029
      %v2057 = vadd.f32 %v2018, %v2029
      %v2058 = vadd.f32 %v2019, %v2029
      %v2059 = vadd.f32 %v2020, %v2029
      %v2060 = vadd.f32 %v2021, %v2029
      %v2061 = vadd.f32 %v2022, %v2029
      %v2062 = vadd.f32 %v2023, %v2029
      %v2063 = vxor.u32 %v2031, 2147483648
      %v2064 = vxor.u32 %v2032, 2147483648
      %v2065 = vxor.u32 %v2033, 2147483648
      %v2066 = vxor.u32 %v2034, 2147483648
      %v2067 = vxor.u32 %v2035, 2147483648
      %v2068 = vxor.u32 %v2036, 2147483648
      %v2069 = vxor.u32 %v2037, 2147483648
      %v2070 = vxor.u32 %v2038, 2147483648
      %v2071 = vxor.u32 %v2039, 2147483648
      %v2072 = vxor.u32 %v2040, 2147483648
      %v2073 = vxor.u32 %v2041, 2147483648
      %v2074 = vxor.u32 %v2042, 2147483648
      %v2075 = vxor.u32 %v2043, 2147483648
      %v2076 = vxor.u32 %v2044, 2147483648
      %v2077 = vxor.u32 %v2045, 2147483648
      %v2078 = vxor.u32 %v2046, 2147483648
      %v2079 = vxor.u32 %v2047, 2147483648
      %v2080 = vxor.u32 %v2048, 2147483648
      %v2081 = vxor.u32 %v2049, 2147483648
      %v2082 = vxor.u32 %v2050, 2147483648
      %v2083 = vxor.u32 %v2051, 2147483648
      %v2084 = vxor.u32 %v2052, 2147483648
      %v2085 = vxor.u32 %v2053, 2147483648
      %v2086 = vxor.u32 %v2054, 2147483648
      %v2087 = vxor.u32 %v2055, 2147483648
      %v2088 = vxor.u32 %v2056, 2147483648
      %v2089 = vxor.u32 %v2057, 2147483648
      %v2090 = vxor.u32 %v2058, 2147483648
      %v2091 = vxor.u32 %v2059, 2147483648
      %v2092 = vxor.u32 %v2060, 2147483648
      %v2093 = vxor.u32 %v2061, 2147483648
      %v2094 = vxor.u32 %v2062, 2147483648
      %v2095 = vmul.f32 %v2063, 1.442695
      %v2096 = vpow.pop %v2095
      %v2097 = vmul.f32 %v2064, 1.442695
      %v2098 = vpow.pop %v2097
      %v2099 = vmul.f32 %v2065, 1.442695
      %v2100 = vpow.pop %v2099
      %v2101 = vmul.f32 %v2066, 1.442695
      %v2102 = vpow.pop %v2101
      %v2103 = vmul.f32 %v2067, 1.442695
      %v2104 = vpow.pop %v2103
      %v2105 = vmul.f32 %v2068, 1.442695
      %v2106 = vpow.pop %v2105
      %v2107 = vmul.f32 %v2069, 1.442695
      %v2108 = vpow.pop %v2107
      %v2109 = vmul.f32 %v2070, 1.442695
      %v2110 = vpow.pop %v2109
      %v2111 = vmul.f32 %v2071, 1.442695
      %v2112 = vpow.pop %v2111
      %v2113 = vmul.f32 %v2072, 1.442695
      %v2114 = vpow.pop %v2113
      %v2115 = vmul.f32 %v2073, 1.442695
      %v2116 = vpow.pop %v2115
      %v2117 = vmul.f32 %v2074, 1.442695
      %v2118 = vpow.pop %v2117
      %v2119 = vmul.f32 %v2075, 1.442695
      %v2120 = vpow.pop %v2119
      %v2121 = vmul.f32 %v2076, 1.442695
      %v2122 = vpow.pop %v2121
      %v2123 = vmul.f32 %v2077, 1.442695
      %v2124 = vpow.pop %v2123
      %v2125 = vmul.f32 %v2078, 1.442695
      %v2126 = vpow.pop %v2125
      %v2127 = vmul.f32 %v2079, 1.442695
      %v2128 = vpow.pop %v2127
      %v2129 = vmul.f32 %v2080, 1.442695
      %v2130 = vpow.pop %v2129
      %v2131 = vmul.f32 %v2081, 1.442695
      %v2132 = vpow.pop %v2131
      %v2133 = vmul.f32 %v2082, 1.442695
      %v2134 = vpow.pop %v2133
      %v2135 = vmul.f32 %v2083, 1.442695
      %v2136 = vpow.pop %v2135
      %v2137 = vmul.f32 %v2084, 1.442695
      %v2138 = vpow.pop %v2137
      %v2139 = vmul.f32 %v2085, 1.442695
      %v2140 = vpow.pop %v2139
      %v2141 = vmul.f32 %v2086, 1.442695
      %v2142 = vpow.pop %v2141
      %v2143 = vmul.f32 %v2087, 1.442695
      %v2144 = vpow.pop %v2143
      %v2145 = vmul.f32 %v2088, 1.442695
      %v2146 = vpow.pop %v2145
      %v2147 = vmul.f32 %v2089, 1.442695
      %v2148 = vpow.pop %v2147
      %v2149 = vmul.f32 %v2090, 1.442695
      %v2150 = vpow.pop %v2149
      %v2151 = vmul.f32 %v2091, 1.442695
      %v2152 = vpow.pop %v2151
      %v2153 = vmul.f32 %v2092, 1.442695
      %v2154 = vpow.pop %v2153
      %v2155 = vmul.f32 %v2093, 1.442695
      %v2156 = vpow.pop %v2155
      %v2157 = vmul.f32 %v2094, 1.442695
      %v2158 = vpow.pop %v2157
      %v2159 = vadd.f32 %v2096, 1.0
      %v2160 = vadd.f32 %v2098, 1.0
      %v2161 = vadd.f32 %v2100, 1.0
      %v2162 = vadd.f32 %v2102, 1.0
      %v2163 = vadd.f32 %v2104, 1.0
      %v2164 = vadd.f32 %v2106, 1.0
      %v2165 = vadd.f32 %v2108, 1.0
      %v2166 = vadd.f32 %v2110, 1.0
      %v2167 = vadd.f32 %v2112, 1.0
      %v2168 = vadd.f32 %v2114, 1.0
      %v2169 = vadd.f32 %v2116, 1.0
      %v2170 = vadd.f32 %v2118, 1.0
      %v2171 = vadd.f32 %v2120, 1.0
      %v2172 = vadd.f32 %v2122, 1.0
      %v2173 = vadd.f32 %v2124, 1.0
      %v2174 = vadd.f32 %v2126, 1.0
      %v2175 = vadd.f32 %v2128, 1.0
      %v2176 = vadd.f32 %v2130, 1.0
      %v2177 = vadd.f32 %v2132, 1.0
      %v2178 = vadd.f32 %v2134, 1.0
      %v2179 = vadd.f32 %v2136, 1.0
      %v2180 = vadd.f32 %v2138, 1.0
      %v2181 = vadd.f32 %v2140, 1.0
      %v2182 = vadd.f32 %v2142, 1.0
      %v2183 = vadd.f32 %v2144, 1.0
      %v2184 = vadd.f32 %v2146, 1.0
      %v2185 = vadd.f32 %v2148, 1.0
      %v2186 = vadd.f32 %v2150, 1.0
      %v2187 = vadd.f32 %v2152, 1.0
      %v2188 = vadd.f32 %v2154, 1.0
      %v2189 = vadd.f32 %v2156, 1.0
      %v2190 = vadd.f32 %v2158, 1.0
      %v2191 = vrcp.pop %v2159
      %v2192 = vmul.f32 1.0, %v2191
      %v2193 = vrcp.pop %v2160
      %v2194 = vmul.f32 1.0, %v2193
      %v2195 = vrcp.pop %v2161
      %v2196 = vmul.f32 1.0, %v2195
      %v2197 = vrcp.pop %v2162
      %v2198 = vmul.f32 1.0, %v2197
      %v2199 = vrcp.pop %v2163
      %v2200 = vmul.f32 1.0, %v2199
      %v2201 = vrcp.pop %v2164
      %v2202 = vmul.f32 1.0, %v2201
      %v2203 = vrcp.pop %v2165
      %v2204 = vmul.f32 1.0, %v2203
      %v2205 = vrcp.pop %v2166
      %v2206 = vmul.f32 1.0, %v2205
      %v2207 = vrcp.pop %v2167
      %v2208 = vmul.f32 1.0, %v2207
      %v2209 = vrcp.pop %v2168
      %v2210 = vmul.f32 1.0, %v2209
      %v2211 = vrcp.pop %v2169
      %v2212 = vmul.f32 1.0, %v2211
      %v2213 = vrcp.pop %v2170
      %v2214 = vmul.f32 1.0, %v2213
      %v2215 = vrcp.pop %v2171
      %v2216 = vmul.f32 1.0, %v2215
      %v2217 = vrcp.pop %v2172
      %v2218 = vmul.f32 1.0, %v2217
      %v2219 = vrcp.pop %v2173
      %v2220 = vmul.f32 1.0, %v2219
      %v2221 = vrcp.pop %v2174
      %v2222 = vmul.f32 1.0, %v2221
      %v2223 = vrcp.pop %v2175
      %v2224 = vmul.f32 1.0, %v2223
      %v2225 = vrcp.pop %v2176
      %v2226 = vmul.f32 1.0, %v2225
      %v2227 = vrcp.pop %v2177
      %v2228 = vmul.f32 1.0, %v2227
      %v2229 = vrcp.pop %v2178
      %v2230 = vmul.f32 1.0, %v2229
      %v2231 = vrcp.pop %v2179
      %v2232 = vmul.f32 1.0, %v2231
      %v2233 = vrcp.pop %v2180
      %v2234 = vmul.f32 1.0, %v2233
      %v2235 = vrcp.pop %v2181
      %v2236 = vmul.f32 1.0, %v2235
      %v2237 = vrcp.pop %v2182
      %v2238 = vmul.f32 1.0, %v2237
      %v2239 = vrcp.pop %v2183
      %v2240 = vmul.f32 1.0, %v2239
      %v2241 = vrcp.pop %v2184
      %v2242 = vmul.f32 1.0, %v2241
      %v2243 = vrcp.pop %v2185
      %v2244 = vmul.f32 1.0, %v2243
      %v2245 = vrcp.pop %v2186
      %v2246 = vmul.f32 1.0, %v2245
      %v2247 = vrcp.pop %v2187
      %v2248 = vmul.f32 1.0, %v2247
      %v2249 = vrcp.pop %v2188
      %v2250 = vmul.f32 1.0, %v2249
      %v2251 = vrcp.pop %v2189
      %v2252 = vmul.f32 1.0, %v2251
      %v2253 = vrcp.pop %v2190
      %v2254 = vmul.f32 1.0, %v2253
      %v2255 = vmul.f32 %v2031, %v2192
      %v2256 = vmul.f32 %v2032, %v2194
      %v2257 = vmul.f32 %v2033, %v2196
      %v2258 = vmul.f32 %v2034, %v2198
      %v2259 = vmul.f32 %v2035, %v2200
      %v2260 = vmul.f32 %v2036, %v2202
      %v2261 = vmul.f32 %v2037, %v2204
      %v2262 = vmul.f32 %v2038, %v2206
      %v2263 = vmul.f32 %v2039, %v2208
      %v2264 = vmul.f32 %v2040, %v2210
      %v2265 = vmul.f32 %v2041, %v2212
      %v2266 = vmul.f32 %v2042, %v2214
      %v2267 = vmul.f32 %v2043, %v2216
      %v2268 = vmul.f32 %v2044, %v2218
      %v2269 = vmul.f32 %v2045, %v2220
      %v2270 = vmul.f32 %v2046, %v2222
      %v2271 = vmul.f32 %v2047, %v2224
      %v2272 = vmul.f32 %v2048, %v2226
      %v2273 = vmul.f32 %v2049, %v2228
      %v2274 = vmul.f32 %v2050, %v2230
      %v2275 = vmul.f32 %v2051, %v2232
      %v2276 = vmul.f32 %v2052, %v2234
      %v2277 = vmul.f32 %v2053, %v2236
      %v2278 = vmul.f32 %v2054, %v2238
      %v2279 = vmul.f32 %v2055, %v2240
      %v2280 = vmul.f32 %v2056, %v2242
      %v2281 = vmul.f32 %v2057, %v2244
      %v2282 = vmul.f32 %v2058, %v2246
      %v2283 = vmul.f32 %v2059, %v2248
      %v2284 = vmul.f32 %v2060, %v2250
      %v2285 = vmul.f32 %v2061, %v2252
      %v2286 = vmul.f32 %v2062, %v2254
      %v2287 = vpack.c.bf16 %v2256, %v2255
      %v2288 = vpack.c.bf16 %v2258, %v2257
      %v2289 = vpack.c.bf16 %v2260, %v2259
      %v2290 = vpack.c.bf16 %v2262, %v2261
      %v2291 = vpack.c.bf16 %v2264, %v2263
      %v2292 = vpack.c.bf16 %v2266, %v2265
      %v2293 = vpack.c.bf16 %v2268, %v2267
      %v2294 = vpack.c.bf16 %v2270, %v2269
      %v2295 = vpack.c.bf16 %v2272, %v2271
      %v2296 = vpack.c.bf16 %v2274, %v2273
      %v2297 = vpack.c.bf16 %v2276, %v2275
      %v2298 = vpack.c.bf16 %v2278, %v2277
      %v2299 = vpack.c.bf16 %v2280, %v2279
      %v2300 = vpack.c.bf16 %v2282, %v2281
      %v2301 = vpack.c.bf16 %v2284, %v2283
      %v2302 = vpack.c.bf16 %v2286, %v2285
      %v2319 = vunpack.c.l.b16 %v2287
      %v2320 = vunpack.c.h.b16 %v2287
      %v2321 = vunpack.c.l.b16 %v2288
      %v2322 = vunpack.c.h.b16 %v2288
      %v2323 = vunpack.c.l.b16 %v2289
      %v2324 = vunpack.c.h.b16 %v2289
      %v2325 = vunpack.c.l.b16 %v2290
      %v2326 = vunpack.c.h.b16 %v2290
      %v2327 = vunpack.c.l.b16 %v2291
      %v2328 = vunpack.c.h.b16 %v2291
      %v2329 = vunpack.c.l.b16 %v2292
      %v2330 = vunpack.c.h.b16 %v2292
      %v2331 = vunpack.c.l.b16 %v2293
      %v2332 = vunpack.c.h.b16 %v2293
      %v2333 = vunpack.c.l.b16 %v2294
      %v2334 = vunpack.c.h.b16 %v2294
      %v2335 = vunpack.c.l.b16 %v2295
      %v2336 = vunpack.c.h.b16 %v2295
      %v2337 = vunpack.c.l.b16 %v2296
      %v2338 = vunpack.c.h.b16 %v2296
      %v2339 = vunpack.c.l.b16 %v2297
      %v2340 = vunpack.c.h.b16 %v2297
      %v2341 = vunpack.c.l.b16 %v2298
      %v2342 = vunpack.c.h.b16 %v2298
      %v2343 = vunpack.c.l.b16 %v2299
      %v2344 = vunpack.c.h.b16 %v2299
      %v2345 = vunpack.c.l.b16 %v2300
      %v2346 = vunpack.c.h.b16 %v2300
      %v2347 = vunpack.c.l.b16 %v2301
      %v2348 = vunpack.c.h.b16 %v2301
      %v2349 = vunpack.c.l.b16 %v2302
      %v2350 = vunpack.c.h.b16 %v2302
      %v2351 = vpack.c.b16 %v2319, %v2319
      %v2352 = vpack.c.b16 %v2320, %v2320
      %v2353 = vpack.c.b16 %v2321, %v2321
      %v2354 = vpack.c.b16 %v2322, %v2322
      %v2355 = vpack.c.b16 %v2323, %v2323
      %v2356 = vpack.c.b16 %v2324, %v2324
      %v2357 = vpack.c.b16 %v2325, %v2325
      %v2358 = vpack.c.b16 %v2326, %v2326
      %v2359 = vpack.c.b16 %v2327, %v2327
      %v2360 = vpack.c.b16 %v2328, %v2328
      %v2361 = vpack.c.b16 %v2329, %v2329
      %v2362 = vpack.c.b16 %v2330, %v2330
      %v2363 = vpack.c.b16 %v2331, %v2331
      %v2364 = vpack.c.b16 %v2332, %v2332
      %v2365 = vpack.c.b16 %v2333, %v2333
      %v2366 = vpack.c.b16 %v2334, %v2334
      %v2367 = vpack.c.b16 %v2335, %v2335
      %v2368 = vpack.c.b16 %v2336, %v2336
      %v2369 = vpack.c.b16 %v2337, %v2337
      %v2370 = vpack.c.b16 %v2338, %v2338
      %v2371 = vpack.c.b16 %v2339, %v2339
      %v2372 = vpack.c.b16 %v2340, %v2340
      %v2373 = vpack.c.b16 %v2341, %v2341
      %v2374 = vpack.c.b16 %v2342, %v2342
      %v2375 = vpack.c.b16 %v2343, %v2343
      %v2376 = vpack.c.b16 %v2344, %v2344
      %v2377 = vpack.c.b16 %v2345, %v2345
      %v2378 = vpack.c.b16 %v2346, %v2346
      %v2379 = vpack.c.b16 %v2347, %v2347
      %v2380 = vpack.c.b16 %v2348, %v2348
      %v2381 = vpack.c.b16 %v2349, %v2349
      %v2382 = vpack.c.b16 %v2350, %v2350
      %vm2415 = vcmask 257024
      %2416 = vst.msk [vmem:[%s197] sm:$0xf] %vm2415, %v2351
      %2417 = vst.msk [vmem:[%s197 + $0x4] sm:$0xf] %vm2415, %v2352
      %2418 = vst.msk [vmem:[%s197 + $0x8] sm:$0xf] %vm2415, %v2353
      %2419 = vst.msk [vmem:[%s197 + $0xc] sm:$0xf] %vm2415, %v2354
      %2420 = vst.msk [vmem:[%s197 + $0x10] sm:$0xf] %vm2415, %v2355
      %2421 = vst.msk [vmem:[%s197 + $0x14] sm:$0xf] %vm2415, %v2356
      %2422 = vst.msk [vmem:[%s197 + $0x18] sm:$0xf] %vm2415, %v2357
      %2423 = vst.msk [vmem:[%s197 + $0x1c] sm:$0xf] %vm2415, %v2358
      %2424 = vst.msk [vmem:[%s197 + $0x20] sm:$0xf] %vm2415, %v2359
      %2425 = vst.msk [vmem:[%s197 + $0x24] sm:$0xf] %vm2415, %v2360
      %2426 = vst.msk [vmem:[%s197 + $0x28] sm:$0xf] %vm2415, %v2361
      %2427 = vst.msk [vmem:[%s197 + $0x2c] sm:$0xf] %vm2415, %v2362
      %2428 = vst.msk [vmem:[%s197 + $0x30] sm:$0xf] %vm2415, %v2363
      %2429 = vst.msk [vmem:[%s197 + $0x34] sm:$0xf] %vm2415, %v2364
      %2430 = vst.msk [vmem:[%s197 + $0x38] sm:$0xf] %vm2415, %v2365
      %2431 = vst.msk [vmem:[%s197 + $0x3c] sm:$0xf] %vm2415, %v2366
      %2432 = vst.msk [vmem:[%s197 + $0x40] sm:$0xf] %vm2415, %v2367
      %2433 = vst.msk [vmem:[%s197 + $0x44] sm:$0xf] %vm2415, %v2368
      %2434 = vst.msk [vmem:[%s197 + $0x48] sm:$0xf] %vm2415, %v2369
      %2435 = vst.msk [vmem:[%s197 + $0x4c] sm:$0xf] %vm2415, %v2370
      %2436 = vst.msk [vmem:[%s197 + $0x50] sm:$0xf] %vm2415, %v2371
      %2437 = vst.msk [vmem:[%s197 + $0x54] sm:$0xf] %vm2415, %v2372
      %2438 = vst.msk [vmem:[%s197 + $0x58] sm:$0xf] %vm2415, %v2373
      %2439 = vst.msk [vmem:[%s197 + $0x5c] sm:$0xf] %vm2415, %v2374
      %2440 = vst.msk [vmem:[%s197 + $0x60] sm:$0xf] %vm2415, %v2375
      %2441 = vst.msk [vmem:[%s197 + $0x64] sm:$0xf] %vm2415, %v2376
      %2442 = vst.msk [vmem:[%s197 + $0x68] sm:$0xf] %vm2415, %v2377
      %2443 = vst.msk [vmem:[%s197 + $0x6c] sm:$0xf] %vm2415, %v2378
      %2444 = vst.msk [vmem:[%s197 + $0x70] sm:$0xf] %vm2415, %v2379
      %2445 = vst.msk [vmem:[%s197 + $0x74] sm:$0xf] %vm2415, %v2380
      %2446 = vst.msk [vmem:[%s197 + $0x78] sm:$0xf] %vm2415, %v2381
      %2447 = vst.msk [vmem:[%s197 + $0x7c] sm:$0xf] %vm2415, %v2382
      %p2448 = scmp.lt.s32.totalorder %s15, 1
      %s2449 = scalar_select %p2448, %s15, 1
      %s2450 = smul.addr %s2449, 32
      %s2451 = smul.addr %s2450, 4
      %s2452 = scalar_lea.vmem %s4, %s2451
      // Predicated region
      $region37: #{iv_block.4} parent=35 // pred_check
        %p2453 = pneg %p122
      $region38: #{iv_block.4} parent=35 // pred_check_branch
        %2455 = sbr.rel (%p2453) target = $region40
      $region39: #{iv_block.4} parent=35 // pred_region
        _
      $region40: #{iv_block.4} parent=35 // pred_fallthru
        _
    $region36: #{iv_block.4} parent=5 // pred_fallthru
      _
    %p2456 = scmp.le.s32.totalorder 2, %s10
    // Predicated region
    $region41: #{iv_block.4} parent=5 // pred_check
      %p2457 = pneg %p2456
    $region42: #{iv_block.4} parent=5 // pred_check_branch
      %2459 = sbr.rel (%p2457) target = $region44
    $region43: #{iv_block.4} parent=5 // pred_region
      %s2460 = ssub.s32 %s10, 2
      // Predicated region
      $region45: #{iv_block.4} parent=43 // pred_check
        %p2461 = pneg %p128
      $region46: #{iv_block.4} parent=43 // pred_check_branch
        %2463 = sbr.rel (%p2461) target = $region48
      $region47: #{iv_block.4} parent=43 // pred_region
        %p2464 = scmp.lt.s32.totalorder %s16, 1
        %s2465 = scalar_select %p2464, %s16, 1
        %s2466 = smul.addr %s2465, 32
        %s2467 = smul.addr %s2466, 4
        %s2468 = scalar_lea.vmem %s4, %s2467
      $region48: #{iv_block.4} parent=43 // pred_fallthru
        _
    $region44: #{iv_block.4} parent=5 // pred_fallthru
      _
  $region6: #{iv_block.4} parent=0 // loop_footer
    %s14 = sadd.s32 1, %s10
  $region7: #{iv_block.4} parent=0 // loop_footer_branch
    %9 = sbr.rel target = $region3
  $region8: #{iv_block.4} parent=0 // loop_exit
    _

</llo_original>
